<compile_context>
chip_gen: v5e
topology: v5e:2x2
jax: 0.10.0
libtpu: 0.0.40
codegen_flags: <defaults>
</compile_context>

<pallas_src>
import functools
import math
from typing import NamedTuple

import jax
import jax.numpy as jnp
from jax.experimental import pallas as pl
from jax.experimental.pallas import tpu as pltpu

_LANE = 128


def _round_up(x, m):
    return ((x + m - 1) // m) * m


def _pick_vmem_limit():
    """~3/4 of physical VMEM, capped at 96 MiB (48 MiB on v7x's 64 MiB)."""
    try:
        cap = int(pltpu.get_tpu_info().vmem_capacity_bytes)
    except Exception:
        cap = 64 * 1024 * 1024
    return min((cap * 3) // 4, 96 * 1024 * 1024)


def _pick_row_tile(n_pad, requested):
    """Largest row tile <= requested that divides n_pad and is a multiple of 32
    (int8 sublane tiling), preferring an EVEN row-block count (v7x: the
    'parallel' row axis is sharded across 2 TensorCores)."""
    requested = max(32, requested)
    target = -(-n_pad // requested)          # ceil -> row_tile <= requested
    fallback = None
    for ni in range(target, n_pad // 32 + 1):
        if n_pad % ni:
            continue
        rt = n_pad // ni
        if rt % 32:
            continue
        if ni % 2 == 0:
            return rt
        if fallback is None:
            fallback = rt
    return fallback if fallback is not None else 32


class _GCNConfig(NamedTuple):
    n: int
    f: int
    nclass: int
    n_pad: int
    fp: int
    row_tile: int
    k_tile: int


# ----------------------------- kernel bodies -----------------------------

def _proj_kernel(x_ref, wcat_ref, bg_ref, s_ref, g_ref):
    """SG = X @ [W | Wm]; S (bf16) feeds adj@S, G = gate logits (bf16)."""
    fp = s_ref.shape[-1]
    sg = jnp.dot(x_ref[...].astype(jnp.bfloat16), wcat_ref[...],
                 preferred_element_type=jnp.float32)
    s_ref[...] = sg[:, :fp].astype(jnp.bfloat16)
    g_ref[...] = (sg[:, fp:] + bg_ref[...]).astype(jnp.bfloat16)


def _adj_bf16(adj_ref):
    # int8 HBM stream (half the bytes of bf16); widen on the VPU for the
    # bf16 MXU.  Go via f32 (universally supported convert chain); the cast
    # is negligible next to the adj DMA.
    return adj_ref[...].astype(jnp.float32).astype(jnp.bfloat16)


def _s_block(s_ref, k_tile, s_full):
    if s_full:                      # S fully VMEM-resident: slice the K block
        k = pl.program_id(1)
        return s_ref[pl.ds(pl.multiple_of(k * k_tile, k_tile), k_tile), :]
    return s_ref[...]


def _agg_hwy_kernel(adj_ref, scale_ref, s_ref, g_ref, x_ref, b_ref,
                    out_ref, acc_ref, *, s_full):
    """out = t*relu(scale*(adj_q@S) + b) + (1-t)*X, t = sigmoid(G)."""
    k = pl.program_id(1)

    @pl.when(k == 0)
    def _():
        acc_ref[...] = jnp.zeros_like(acc_ref)

    acc_ref[...] += jnp.dot(_adj_bf16(adj_ref),
                            _s_block(s_ref, adj_ref.shape[-1], s_full),
                            preferred_element_type=jnp.float32)

    @pl.when(k == pl.num_programs(1) - 1)
    def _():
        gcn = jnp.maximum(acc_ref[...] * scale_ref[...] + b_ref[...], 0.0)
        t = jax.nn.sigmoid(g_ref[...].astype(jnp.float32))
        out_ref[...] = t * gcn + (1.0 - t) * x_ref[...]


def _agg_hwy_proj_kernel(adj_ref, scale_ref, s_ref, g_ref, x_ref, b_ref,
                         wcat_next_ref, bg_ref,
                         x1_ref, s_next_ref, g_next_ref, acc_ref, *, s_full):
    """Layer-1 agg + highway, with the layer-2 projection fused into the
    k==last epilogue (S_next/G_next emitted while the tile is in VMEM)."""
    k = pl.program_id(1)

    @pl.when(k == 0)
    def _():
        acc_ref[...] = jnp.zeros_like(acc_ref)

    acc_ref[...] += jnp.dot(_adj_bf16(adj_ref),
                            _s_block(s_ref, adj_ref.shape[-1], s_full),
                            preferred_element_type=jnp.float32)

    @pl.when(k == pl.num_programs(1) - 1)
    def _():
        fp = s_next_ref.shape[-1]
        gcn = jnp.maximum(acc_ref[...] * scale_ref[...] + b_ref[...], 0.0)
        t = jax.nn.sigmoid(g_ref[...].astype(jnp.float32))
        x1 = t * gcn + (1.0 - t) * x_ref[...]
        x1_ref[...] = x1
        sg = jnp.dot(x1.astype(jnp.bfloat16), wcat_next_ref[...],
                     preferred_element_type=jnp.float32)
        s_next_ref[...] = sg[:, :fp].astype(jnp.bfloat16)
        g_next_ref[...] = (sg[:, fp:] + bg_ref[...]).astype(jnp.bfloat16)


# ------------------------------ pass drivers ------------------------------

def _proj(x, wcat, bg, *, row_tile, vmem_limit):
    n_pad, fp = x.shape
    ni = n_pad // row_tile
    return pl.pallas_call(
        _proj_kernel,
        out_shape=(jax.ShapeDtypeStruct((n_pad, fp), jnp.bfloat16),
                   jax.ShapeDtypeStruct((n_pad, fp), jnp.bfloat16)),
        grid_spec=pltpu.PrefetchScalarGridSpec(
            num_scalar_prefetch=0,
            grid=(ni,),
            in_specs=[pl.BlockSpec((row_tile, fp), lambda i: (i, 0)),
                      pl.BlockSpec((fp, 2 * fp), lambda i: (0, 0)),
                      pl.BlockSpec((1, fp), lambda i: (0, 0))],
            out_specs=(pl.BlockSpec((row_tile, fp), lambda i: (i, 0)),
                       pl.BlockSpec((row_tile, fp), lambda i: (i, 0)))),
        compiler_params=pltpu.CompilerParams(
            dimension_semantics=("parallel",),
            vmem_limit_bytes=vmem_limit),
        cost_estimate=pl.CostEstimate(
            flops=2 * n_pad * fp * 2 * fp,
            transcendentals=0,
            bytes_accessed=n_pad * fp * 4 + fp * 2 * fp * 2 + 2 * n_pad * fp * 2),
    )(x, wcat, bg)


def _agg_highway(adj_q, scale, s, g, x, b, wcat_next, bg, *,
                 row_tile, k_tile, s_resident, vmem_limit):
    """Tiled adj_q @ S + dequant + bias + relu + highway (+ optional fused
    next-layer projection when wcat_next is given)."""
    n_pad, fp = x.shape
    ni, nk = n_pad // row_tile, n_pad // k_tile
    fuse_next = wcat_next is not None

    def row_blk(i, k):
        return (i, 0)

    def const_blk(i, k):
        return (0, 0)

    if s_resident:
        s_spec = pl.BlockSpec((n_pad, fp), const_blk)          # DMA'd once/layer
    else:
        s_spec = pl.BlockSpec((k_tile, fp), lambda i, k: (k, 0))

    in_specs = [
        pl.BlockSpec((row_tile, k_tile), lambda i, k: (i, k)),  # adj (int8)
        pl.BlockSpec((row_tile, 1), row_blk),                   # per-row dequant
        s_spec,                                                 # S   (bf16)
        pl.BlockSpec((row_tile, fp), row_blk),                  # gate logits bf16
        pl.BlockSpec((row_tile, fp), row_blk),                  # X carry (f32)
        pl.BlockSpec((1, fp), const_blk),                       # bias
    ]
    inputs = [adj_q, scale, s, g, x, b]

    if fuse_next:
        kernel = functools.partial(_agg_hwy_proj_kernel, s_full=s_resident)
        in_specs += [pl.BlockSpec((fp, 2 * fp), const_blk),     # [W_next | Wm]
                     pl.BlockSpec((1, fp), const_blk)]          # bias_gate
        inputs += [wcat_next, bg]
        out_shape = (jax.ShapeDtypeStruct((n_pad, fp), jnp.float32),   # X_next
                     jax.ShapeDtypeStruct((n_pad, fp), jnp.bfloat16),  # S_next
                     jax.ShapeDtypeStruct((n_pad, fp), jnp.bfloat16))  # G_next
        out_specs = tuple(pl.BlockSpec((row_tile, fp), row_blk) for _ in range(3))
        out_bytes = n_pad * fp * (4 + 2 + 2)
        proj_flops = 2 * n_pad * fp * 2 * fp
    else:
        kernel = functools.partial(_agg_hwy_kernel, s_full=s_resident)
        out_shape = jax.ShapeDtypeStruct((n_pad, fp), jnp.float32)
        out_specs = pl.BlockSpec((row_tile, fp), row_blk)
        out_bytes = n_pad * fp * 4
        proj_flops = 0

    s_bytes = (n_pad * fp * 2) if s_resident else (ni * n_pad * fp * 2)
    return pl.pallas_call(
        kernel,
        out_shape=out_shape,
        grid_spec=pltpu.PrefetchScalarGridSpec(
            num_scalar_prefetch=0,
            grid=(ni, nk),
            in_specs=in_specs,
            out_specs=out_specs,
            scratch_shapes=[pltpu.VMEM((row_tile, fp), jnp.float32)]),
        compiler_params=pltpu.CompilerParams(
            dimension_semantics=("parallel", "arbitrary"),
            vmem_limit_bytes=vmem_limit),
        cost_estimate=pl.CostEstimate(
            flops=2 * n_pad * n_pad * fp + proj_flops + 8 * n_pad * fp,
            transcendentals=n_pad * fp,
            bytes_accessed=n_pad * n_pad * 1 + s_bytes + n_pad * 4
                           + n_pad * fp * (2 + 4) + out_bytes),
    )(*inputs)
    # TODO(synk): if an xprof trace shows exposed adj DMA gaps, add
    # pipeline_mode=pl.Buffered(3) on the adj BlockSpec.


# ----------------------- prepare (hoisted) + forward -----------------------

def prepare_heter_rel_gcn(heter_adj, params, *, row_tile=1024, k_tile=512):
    """One-time preprocessing hoisted out of the per-step forward: pads and
    int8-quantizes the adjacency (per-row scale) and pads/fuses the weights."""
    n = heter_adj.shape[0]
    f = params["W1"].shape[0]
    nhid = params["W1"].shape[1]
    nclass = params["W2"].shape[1]
    if not (f == nhid == nclass):
        raise ValueError("HeterRelGCN's highway gate requires nfeat == nhid == nclass")

    fp = _round_up(f, _LANE)
    k_tile = min(max(_LANE, _round_up(k_tile, _LANE)), _round_up(n, _LANE))
    n_pad = _round_up(n, k_tile)
    row_tile = _pick_row_tile(n_pad, row_tile)

    # int8 adjacency with per-row scale; zero padding is exact (padded rows /
    # columns never contribute to real rows).
    adj_f = jnp.zeros((n_pad, n_pad), jnp.float32)
    adj_f = adj_f.at[:n, :n].set(heter_adj.astype(jnp.float32))
    row_max = jnp.max(jnp.abs(adj_f), axis=1, keepdims=True)
    scale = jnp.where(row_max > 0, row_max / 127.0, 1.0).astype(jnp.float32)
    adj_q = jnp.clip(jnp.round(adj_f / scale), -127.0, 127.0).astype(jnp.int8)
    # TODO(synk): on v7x a native-fp8 MXU path (no in-kernel widen) could go
    # slightly further; int8+per-row scale already captures the bandwidth win.

    def pad_w(w):
        out = jnp.zeros((fp, fp), jnp.float32)
        return out.at[:w.shape[0], :w.shape[1]].set(w.astype(jnp.float32))

    def pad_b(b):
        return jnp.zeros((1, fp), jnp.float32).at[0, :b.shape[0]].set(
            b.astype(jnp.float32))

    wm = pad_w(params["weight_matrix"])
    arrays = {
        "adj_q": adj_q,
        "adj_scale": scale,
        "wcat1": jnp.concatenate([pad_w(params["W1"]), wm], 1).astype(jnp.bfloat16),
        "wcat2": jnp.concatenate([pad_w(params["W2"]), wm], 1).astype(jnp.bfloat16),
        "b1": pad_b(params["b1"]),
        "b2": pad_b(params["b2"]),
        "bg": pad_b(params["bias_gate"]),
    }
    cfg = _GCNConfig(n=n, f=f, nclass=nclass, n_pad=n_pad, fp=fp,
                     row_tile=row_tile, k_tile=k_tile)
    return arrays, cfg


def heter_rel_gcn_forward(e_x, r_x, prepped, cfg, *, s_resident=None):
    """Per-step forward: 3 pallas_calls (proj1, agg1+hwy+proj2 fused, agg2+hwy)."""
    vmem_limit = _pick_vmem_limit()
    n_pad, fp = cfg.n_pad, cfg.fp
    if s_resident is None:
        # conservative: v7x shards VMEM across its 2 TensorCores on the
        # "parallel" axis, so budget against half the limit.
        budget = vmem_limit // 2 - 10 * 1024 * 1024
        s_resident = (2 * n_pad * fp * 2) <= max(budget, 0)

    ne, nr = e_x.shape[0], r_x.shape[0]
    x0 = jnp.zeros((n_pad, fp), jnp.float32)
    x0 = x0.at[:ne, :cfg.f].set(e_x.astype(jnp.float32))
    x0 = x0.at[ne:ne + nr, :cfg.f].set(r_x.astype(jnp.float32))
    # TODO(synk): eliminating this slab build would need per-row-block
    # index_maps that select e_x vs r_x inside the kernel.

    s1, g1 = _proj(x0, prepped["wcat1"], prepped["bg"],
                   row_tile=cfg.row_tile, vmem_limit=vmem_limit)

    x1, s2, g2 = _agg_highway(
        prepped["adj_q"], prepped["adj_scale"], s1, g1, x0, prepped["b1"],
        prepped["wcat2"], prepped["bg"],
        row_tile=cfg.row_tile, k_tile=cfg.k_tile,
        s_resident=s_resident, vmem_limit=vmem_limit)
    # dropout(p=0) / eval mode is the identity.
    # TODO(synk): stochastic dropout (p>0, training) would need pltpu.prng_* here.

    out = _agg_highway(
        prepped["adj_q"], prepped["adj_scale"], s2, g2, x1, prepped["b2"],
        None, None,
        row_tile=cfg.row_tile, k_tile=cfg.k_tile,
        s_resident=s_resident, vmem_limit=vmem_limit)

    return out[:cfg.n, :cfg.nclass]


def heter_rel_gcn(e_x, r_x, heter_adj, params, *, row_tile=1024, k_tile=512,
                  s_resident=None):
    """Convenience one-shot wrapper (prefer prepare + forward for repeated calls)."""
    prepped, cfg = prepare_heter_rel_gcn(heter_adj, params,
                                         row_tile=row_tile, k_tile=k_tile)
    return heter_rel_gcn_forward(e_x, r_x, prepped, cfg, s_resident=s_resident)


# --------------------------- params / reference ---------------------------

def init_params(key, nfeat, nhid, nclass):
    """Deterministic init matching the PyTorch module's init_parameters()."""
    k1, k2, k3, k4, k5 = jax.random.split(key, 5)
    stdv1 = 1.0 / math.sqrt(nhid)
    stdv2 = 1.0 / math.sqrt(nclass)
    init_range = math.sqrt(6.0 / (nfeat + nfeat))
    return {
        "W1": jax.random.uniform(k1, (nfeat, nhid), jnp.float32, -stdv1, stdv1),
        "b1": jax.random.uniform(k2, (nhid,), jnp.float32, -stdv1, stdv1),
        "W2": jax.random.uniform(k3, (nhid, nclass), jnp.float32, -stdv2, stdv2),
        "b2": jax.random.uniform(k4, (nclass,), jnp.float32, -stdv2, stdv2),
        "weight_matrix": jax.random.uniform(
            k5, (nhid, nhid), jnp.float32, -init_range, init_range),
        "bias_gate": jnp.zeros((nhid,), jnp.float32),
        # linear2 from __init__ is never used in forward() — omitted.
    }


def _reference(e_x, r_x, adj, p):
    x0 = jnp.concatenate([e_x, r_x], 0)
    gcn1 = jax.nn.relu(adj @ (x0 @ p["W1"]) + p["b1"])
    t1 = jax.nn.sigmoid(x0 @ p["weight_matrix"] + p["bias_gate"])
    x1 = t1 * gcn1 + (1 - t1) * x0
    gcn2 = jax.nn.relu(adj @ (x1 @ p["W2"]) + p["b2"])
    t2 = jax.nn.sigmoid(x1 @ p["weight_matrix"] + p["bias_gate"])
    return t2 * gcn2 + (1 - t2) * x1


if __name__ == "__main__":
    # small synthetic config: 96 entity nodes + 96 relation nodes, hidden = 32.
    # row_tile=k_tile=128 -> N padded to 256, a 2x2 (row, K) grid: exercises
    # the K-tiled accumulation, pl.when init/finalize and the parallel axis.
    NE, NR = 96, 96
    NFEAT = NHID = NCLASS = 32          # required equal by the module's highway gates
    N = NE + NR

    root = jax.random.PRNGKey(0)
    k_param, k_e, k_r, k_adj = jax.random.split(root, 4)

    params = init_params(k_param, NFEAT, NHID, NCLASS)
    e_x = jax.random.normal(k_e, (NE, NFEAT), jnp.float32)
    r_x = jax.random.normal(k_r, (NR, NFEAT), jnp.float32)
    # dense (synthetic) heterogeneous adjacency, row-normalized
    adj_raw = jax.random.uniform(k_adj, (N, N), jnp.float32)
    heter_adj = adj_raw / jnp.sum(adj_raw, axis=1, keepdims=True)

    # one-time (hoisted) preprocessing: padded + int8-quantized adjacency etc.
    prepped, cfg = prepare_heter_rel_gcn(heter_adj, params,
                                         row_tile=128, k_tile=128)
    expected = _reference(e_x, r_x, heter_adj, params)

    # resident-S path (small graph -> S kept in VMEM for the whole layer).
    fwd = jax.jit(lambda e, r, p: heter_rel_gcn_forward(e, r, p, cfg))
    out = jax.block_until_ready(fwd(e_x, r_x, prepped))
    assert out.shape == (N, NCLASS)
    max_err = float(jnp.max(jnp.abs(out - expected)))
    # bf16 MXU operands + int8 (per-row scale) adj with f32 accumulation.
    assert jnp.allclose(out, expected, atol=2e-2, rtol=2e-2), max_err

    # streamed-S path (what very large graphs fall back to) — also validated.
    fwd_s = jax.jit(lambda e, r, p: heter_rel_gcn_forward(e, r, p, cfg,
                                                          s_resident=False))
    out_s = jax.block_until_ready(fwd_s(e_x, r_x, prepped))
    max_err_s = float(jnp.max(jnp.abs(out_s - expected)))
    assert jnp.allclose(out_s, expected, atol=2e-2, rtol=2e-2), max_err_s

    print("KERNEL_OK")
</pallas_src>

<mosaic_0001>
module attributes {stable_mosaic.version = 11 : i64} {
  func.func @_agg_hwy_proj_kernel(%arg0: i32, %arg1: i32, %arg2: memref<128x128xi8, #tpu.memory_space<vmem>>, %arg3: memref<128x1xf32, #tpu.memory_space<vmem>>, %arg4: memref<256x128xbf16, #tpu.memory_space<vmem>>, %arg5: memref<128x128xbf16, #tpu.memory_space<vmem>>, %arg6: memref<128x128xf32, #tpu.memory_space<vmem>>, %arg7: memref<1x128xf32, #tpu.memory_space<vmem>>, %arg8: memref<128x256xbf16, #tpu.memory_space<vmem>>, %arg9: memref<1x128xf32, #tpu.memory_space<vmem>>, %arg10: memref<128x128xf32, #tpu.memory_space<vmem>>, %arg11: memref<128x128xbf16, #tpu.memory_space<vmem>>, %arg12: memref<128x128xbf16, #tpu.memory_space<vmem>>, %arg13: memref<128x128xf32, #tpu.memory_space<vmem>>) attributes {dimension_semantics = [#tpu.dimension_semantics<parallel>, #tpu.dimension_semantics<arbitrary>], iteration_bounds = array<i64: 2, 2>, scalar_prefetch = 0 : i64, scratch_operands = 1 : i64, tpu.core_type = #tpu.core_type<tc>, window_params = [{transform_indices = @transform_0, window_bounds = array<i64: 128, 128>}, {transform_indices = @transform_1, window_bounds = array<i64: 128, 1>}, {pipeline_mode = #tpu.pipeline_mode<synchronous>, transform_indices = @transform_2, window_bounds = array<i64: 256, 128>}, {transform_indices = @transform_3, window_bounds = array<i64: 128, 128>}, {transform_indices = @transform_4, window_bounds = array<i64: 128, 128>}, {pipeline_mode = #tpu.pipeline_mode<synchronous>, transform_indices = @transform_5, window_bounds = array<i64: 1, 128>}, {pipeline_mode = #tpu.pipeline_mode<synchronous>, transform_indices = @transform_6, window_bounds = array<i64: 128, 256>}, {pipeline_mode = #tpu.pipeline_mode<synchronous>, transform_indices = @transform_7, window_bounds = array<i64: 1, 128>}, {transform_indices = @transform_8, window_bounds = array<i64: 128, 128>}, {transform_indices = @transform_9, window_bounds = array<i64: 128, 128>}, {transform_indices = @transform_10, window_bounds = array<i64: 128, 128>}]} {
    %c0_i32 = arith.constant 0 : i32
    %0 = arith.cmpi eq, %arg1, %c0_i32 : i32
    %1 = arith.extui %0 : i1 to i32
    %c0_i32_0 = arith.constant 0 : i32
    %2 = arith.cmpi ne, %1, %c0_i32_0 : i32
    scf.if %2 {
      %cst_8 = arith.constant 0.000000e+00 : f32
      %17 = vector.broadcast %cst_8 : f32 to vector<128x128xf32>
      %c0_9 = arith.constant 0 : index
      %c0_10 = arith.constant 0 : index
      %18 = vector.load %arg13[%c0_9, %c0_10] : memref<128x128xf32, #tpu.memory_space<vmem>>, vector<128x128xf32>
      tpu.vector_store %arg13[%c0_9, %c0_10], %17 {strides = array<i32>} : memref<128x128xf32, #tpu.memory_space<vmem>>, vector<128x128xf32>,
    } else {
    }
    %c0 = arith.constant 0 : index
    %c0_1 = arith.constant 0 : index
    %3 = vector.load %arg13[%c0, %c0_1] : memref<128x128xf32, #tpu.memory_space<vmem>>, vector<128x128xf32>
    %c0_2 = arith.constant 0 : index
    %c0_3 = arith.constant 0 : index
    %4 = vector.load %arg2[%c0_2, %c0_3] : memref<128x128xi8, #tpu.memory_space<vmem>>, vector<128x128xi8>
    %5 = arith.sitofp %4 : vector<128x128xi8> to vector<128x128xf32>
    %6 = arith.truncf %5 : vector<128x128xf32> to vector<128x128xbf16>
    %c128_i32 = arith.constant 128 : i32
    %7 = arith.muli %arg1, %c128_i32 : i32
    %8 = tpu.assume_multiple %7, 128 : i32
    %9 = arith.index_cast %8 : i32 to index
    %c0_4 = arith.constant 0 : index
    %10 = vector.load %arg4[%9, %c0_4] : memref<256x128xbf16, #tpu.memory_space<vmem>>, vector<128x128xbf16>
    %cst = arith.constant dense<0.000000e+00> : vector<128x128xf32>
    %11 = tpu.matmul %6, %10, %cst {dimension_numbers = #tpu.dot_dimension_numbers<[1], [0], [0], [1], [0, 0, 1, 1], [], []>} : vector<128x128xbf16>, vector<128x128xbf16>, vector<128x128xf32> -> vector<128x128xf32>
    %12 = arith.addf %3, %11 : vector<128x128xf32>
    %c0_5 = arith.constant 0 : index
    %c0_6 = arith.constant 0 : index
    %13 = vector.load %arg13[%c0_5, %c0_6] : memref<128x128xf32, #tpu.memory_space<vmem>>, vector<128x128xf32>
    tpu.vector_store %arg13[%c0_5, %c0_6], %12 {strides = array<i32>} : memref<128x128xf32, #tpu.memory_space<vmem>>, vector<128x128xf32>,
    %c1_i32 = arith.constant 1 : i32
    %14 = arith.cmpi eq, %arg1, %c1_i32 : i32
    %15 = arith.extui %14 : i1 to i32
    %c0_i32_7 = arith.constant 0 : i32
    %16 = arith.cmpi ne, %15, %c0_i32_7 : i32
    scf.if %16 {
      %c0_8 = arith.constant 0 : index
      %c0_9 = arith.constant 0 : index
      %17 = vector.load %arg13[%c0_8, %c0_9] : memref<128x128xf32, #tpu.memory_space<vmem>>, vector<128x128xf32>
      %c0_10 = arith.constant 0 : index
      %c0_11 = arith.constant 0 : index
      %18 = vector.load %arg3[%c0_10, %c0_11] : memref<128x1xf32, #tpu.memory_space<vmem>>, vector<128x1xf32>
      %19 = vector.broadcast %18 : vector<128x1xf32> to vector<128x128xf32>
      %20 = arith.mulf %17, %19 : vector<128x128xf32>
      %c0_12 = arith.constant 0 : index
      %c0_13 = arith.constant 0 : index
      %21 = vector.load %arg7[%c0_12, %c0_13] : memref<1x128xf32, #tpu.memory_space<vmem>>, vector<1x128xf32>
      %22 = vector.broadcast %21 : vector<1x128xf32> to vector<128x128xf32>
      %23 = arith.addf %20, %22 : vector<128x128xf32>
      %cst_14 = arith.constant 0.000000e+00 : f32
      %24 = vector.broadcast %cst_14 : f32 to vector<128x128xf32>
      %25 = arith.maximumf %23, %24 : vector<128x128xf32>
      %c0_15 = arith.constant 0 : index
      %c0_16 = arith.constant 0 : index
      %26 = vector.load %arg5[%c0_15, %c0_16] : memref<128x128xbf16, #tpu.memory_space<vmem>>, vector<128x128xbf16>
      %27 = arith.extf %26 : vector<128x128xbf16> to vector<128x128xf32>
      %28 = arith.negf %27 : vector<128x128xf32>
      %29 = math.exp %28 : vector<128x128xf32>
      %cst_17 = arith.constant 1.000000e+00 : f32
      %30 = vector.broadcast %cst_17 : f32 to vector<128x128xf32>
      %31 = arith.addf %30, %29 : vector<128x128xf32>
      %32 = arith.divf %30, %31 : vector<128x128xf32>
      %33 = arith.mulf %32, %25 : vector<128x128xf32>
      %cst_18 = arith.constant 1.000000e+00 : f32
      %34 = vector.broadcast %cst_18 : f32 to vector<128x128xf32>
      %35 = arith.subf %34, %32 : vector<128x128xf32>
      %c0_19 = arith.constant 0 : index
      %c0_20 = arith.constant 0 : index
      %36 = vector.load %arg6[%c0_19, %c0_20] : memref<128x128xf32, #tpu.memory_space<vmem>>, vector<128x128xf32>
      %37 = arith.mulf %35, %36 : vector<128x128xf32>
      %38 = arith.addf %33, %37 : vector<128x128xf32>
      %c0_21 = arith.constant 0 : index
      %c0_22 = arith.constant 0 : index
      %39 = vector.load %arg10[%c0_21, %c0_22] : memref<128x128xf32, #tpu.memory_space<vmem>>, vector<128x128xf32>
      tpu.vector_store %arg10[%c0_21, %c0_22], %38 {strides = array<i32>} : memref<128x128xf32, #tpu.memory_space<vmem>>, vector<128x128xf32>,
      %40 = arith.truncf %38 : vector<128x128xf32> to vector<128x128xbf16>
      %c0_23 = arith.constant 0 : index
      %c0_24 = arith.constant 0 : index
      %41 = vector.load %arg8[%c0_23, %c0_24] : memref<128x256xbf16, #tpu.memory_space<vmem>>, vector<128x256xbf16>
      %cst_25 = arith.constant dense<0.000000e+00> : vector<128x256xf32>
      %42 = tpu.matmul %40, %41, %cst_25 {dimension_numbers = #tpu.dot_dimension_numbers<[1], [0], [0], [1], [0, 0, 1, 1], [], []>} : vector<128x128xbf16>, vector<128x256xbf16>, vector<128x256xf32> -> vector<128x256xf32>
      %43 = vector.extract_strided_slice %42 {offsets = [0, 0], sizes = [128, 128], strides = [1, 1]} : vector<128x256xf32> to vector<128x128xf32>
      %44 = arith.truncf %43 : vector<128x128xf32> to vector<128x128xbf16>
      %c0_26 = arith.constant 0 : index
      %c0_27 = arith.constant 0 : index
      %45 = vector.load %arg11[%c0_26, %c0_27] : memref<128x128xbf16, #tpu.memory_space<vmem>>, vector<128x128xbf16>
      tpu.vector_store %arg11[%c0_26, %c0_27], %44 {strides = array<i32>} : memref<128x128xbf16, #tpu.memory_space<vmem>>, vector<128x128xbf16>,
      %46 = vector.extract_strided_slice %42 {offsets = [0, 128], sizes = [128, 128], strides = [1, 1]} : vector<128x256xf32> to vector<128x128xf32>
      %c0_28 = arith.constant 0 : index
      %c0_29 = arith.constant 0 : index
      %47 = vector.load %arg9[%c0_28, %c0_29] : memref<1x128xf32, #tpu.memory_space<vmem>>, vector<1x128xf32>
      %48 = vector.broadcast %47 : vector<1x128xf32> to vector<128x128xf32>
      %49 = arith.addf %46, %48 : vector<128x128xf32>
      %50 = arith.truncf %49 : vector<128x128xf32> to vector<128x128xbf16>
      %c0_30 = arith.constant 0 : index
      %c0_31 = arith.constant 0 : index
      %51 = vector.load %arg12[%c0_30, %c0_31] : memref<128x128xbf16, #tpu.memory_space<vmem>>, vector<128x128xbf16>
      tpu.vector_store %arg12[%c0_30, %c0_31], %50 {strides = array<i32>} : memref<128x128xbf16, #tpu.memory_space<vmem>>, vector<128x128xbf16>,
    } else {
    }
    return
  }
  func.func @transform_0(%arg0: i32, %arg1: i32) -> (i32, i32) {
    %c0_i32 = arith.constant 0 : i32
    return %arg0, %arg1 : i32, i32
  }
  func.func @transform_1(%arg0: i32, %arg1: i32) -> (i32, i32) {
    %c0_i32 = arith.constant 0 : i32
    %c0_i32_0 = arith.constant 0 : i32
    return %arg0, %c0_i32 : i32, i32
  }
  func.func @transform_2(%arg0: i32, %arg1: i32) -> (i32, i32) {
    %c0_i32 = arith.constant 0 : i32
    %c0_i32_0 = arith.constant 0 : i32
    %c0_i32_1 = arith.constant 0 : i32
    return %c0_i32, %c0_i32_0 : i32, i32
  }
  func.func @transform_3(%arg0: i32, %arg1: i32) -> (i32, i32) {
    %c0_i32 = arith.constant 0 : i32
    %c0_i32_0 = arith.constant 0 : i32
    return %arg0, %c0_i32 : i32, i32
  }
  func.func @transform_4(%arg0: i32, %arg1: i32) -> (i32, i32) {
    %c0_i32 = arith.constant 0 : i32
    %c0_i32_0 = arith.constant 0 : i32
    return %arg0, %c0_i32 : i32, i32
  }
  func.func @transform_5(%arg0: i32, %arg1: i32) -> (i32, i32) {
    %c0_i32 = arith.constant 0 : i32
    %c0_i32_0 = arith.constant 0 : i32
    %c0_i32_1 = arith.constant 0 : i32
    return %c0_i32, %c0_i32_0 : i32, i32
  }
  func.func @transform_6(%arg0: i32, %arg1: i32) -> (i32, i32) {
    %c0_i32 = arith.constant 0 : i32
    %c0_i32_0 = arith.constant 0 : i32
    %c0_i32_1 = arith.constant 0 : i32
    return %c0_i32, %c0_i32_0 : i32, i32
  }
  func.func @transform_7(%arg0: i32, %arg1: i32) -> (i32, i32) {
    %c0_i32 = arith.constant 0 : i32
    %c0_i32_0 = arith.constant 0 : i32
    %c0_i32_1 = arith.constant 0 : i32
    return %c0_i32, %c0_i32_0 : i32, i32
  }
  func.func @transform_8(%arg0: i32, %arg1: i32) -> (i32, i32) {
    %c0_i32 = arith.constant 0 : i32
    %c0_i32_0 = arith.constant 0 : i32
    return %arg0, %c0_i32 : i32, i32
  }
  func.func @transform_9(%arg0: i32, %arg1: i32) -> (i32, i32) {
    %c0_i32 = arith.constant 0 : i32
    %c0_i32_0 = arith.constant 0 : i32
    return %arg0, %c0_i32 : i32, i32
  }
  func.func @transform_10(%arg0: i32, %arg1: i32) -> (i32, i32) {
    %c0_i32 = arith.constant 0 : i32
    %c0_i32_0 = arith.constant 0 : i32
    return %arg0, %c0_i32 : i32, i32
  }
}

module attributes {stable_mosaic.version = 11 : i64} {
  func.func @_proj_kernel(%arg0: i32, %arg1: memref<128x128xf32, #tpu.memory_space<vmem>>, %arg2: memref<128x256xbf16, #tpu.memory_space<vmem>>, %arg3: memref<1x128xf32, #tpu.memory_space<vmem>>, %arg4: memref<128x128xbf16, #tpu.memory_space<vmem>>, %arg5: memref<128x128xbf16, #tpu.memory_space<vmem>>) attributes {dimension_semantics = [#tpu.dimension_semantics<parallel>], iteration_bounds = array<i64: 2>, scalar_prefetch = 0 : i64, scratch_operands = 0 : i64, tpu.core_type = #tpu.core_type<tc>, window_params = [{transform_indices = @transform_0, window_bounds = array<i64: 128, 128>}, {pipeline_mode = #tpu.pipeline_mode<synchronous>, transform_indices = @transform_1, window_bounds = array<i64: 128, 256>}, {pipeline_mode = #tpu.pipeline_mode<synchronous>, transform_indices = @transform_2, window_bounds = array<i64: 1, 128>}, {transform_indices = @transform_3, window_bounds = array<i64: 128, 128>}, {transform_indices = @transform_4, window_bounds = array<i64: 128, 128>}]} {
    %c0 = arith.constant 0 : index
    %c0_0 = arith.constant 0 : index
    %0 = vector.load %arg1[%c0, %c0_0] : memref<128x128xf32, #tpu.memory_space<vmem>>, vector<128x128xf32>
    %1 = arith.truncf %0 : vector<128x128xf32> to vector<128x128xbf16>
    %c0_1 = arith.constant 0 : index
    %c0_2 = arith.constant 0 : index
    %2 = vector.load %arg2[%c0_1, %c0_2] : memref<128x256xbf16, #tpu.memory_space<vmem>>, vector<128x256xbf16>
    %cst = arith.constant dense<0.000000e+00> : vector<128x256xf32>
    %3 = tpu.matmul %1, %2, %cst {dimension_numbers = #tpu.dot_dimension_numbers<[1], [0], [0], [1], [0, 0, 1, 1], [], []>} : vector<128x128xbf16>, vector<128x256xbf16>, vector<128x256xf32> -> vector<128x256xf32>
    %4 = vector.extract_strided_slice %3 {offsets = [0, 0], sizes = [128, 128], strides = [1, 1]} : vector<128x256xf32> to vector<128x128xf32>
    %5 = arith.truncf %4 : vector<128x128xf32> to vector<128x128xbf16>
    %c0_3 = arith.constant 0 : index
    %c0_4 = arith.constant 0 : index
    %6 = vector.load %arg4[%c0_3, %c0_4] : memref<128x128xbf16, #tpu.memory_space<vmem>>, vector<128x128xbf16>
    tpu.vector_store %arg4[%c0_3, %c0_4], %5 {strides = array<i32>} : memref<128x128xbf16, #tpu.memory_space<vmem>>, vector<128x128xbf16>,
    %7 = vector.extract_strided_slice %3 {offsets = [0, 128], sizes = [128, 128], strides = [1, 1]} : vector<128x256xf32> to vector<128x128xf32>
    %c0_5 = arith.constant 0 : index
    %c0_6 = arith.constant 0 : index
    %8 = vector.load %arg3[%c0_5, %c0_6] : memref<1x128xf32, #tpu.memory_space<vmem>>, vector<1x128xf32>
    %9 = vector.broadcast %8 : vector<1x128xf32> to vector<128x128xf32>
    %10 = arith.addf %7, %9 : vector<128x128xf32>
    %11 = arith.truncf %10 : vector<128x128xf32> to vector<128x128xbf16>
    %c0_7 = arith.constant 0 : index
    %c0_8 = arith.constant 0 : index
    %12 = vector.load %arg5[%c0_7, %c0_8] : memref<128x128xbf16, #tpu.memory_space<vmem>>, vector<128x128xbf16>
    tpu.vector_store %arg5[%c0_7, %c0_8], %11 {strides = array<i32>} : memref<128x128xbf16, #tpu.memory_space<vmem>>, vector<128x128xbf16>,
    return
  }
  func.func @transform_0(%arg0: i32) -> (i32, i32) {
    %c0_i32 = arith.constant 0 : i32
    %c0_i32_0 = arith.constant 0 : i32
    return %arg0, %c0_i32 : i32, i32
  }
  func.func @transform_1(%arg0: i32) -> (i32, i32) {
    %c0_i32 = arith.constant 0 : i32
    %c0_i32_0 = arith.constant 0 : i32
    %c0_i32_1 = arith.constant 0 : i32
    return %c0_i32, %c0_i32_0 : i32, i32
  }
  func.func @transform_2(%arg0: i32) -> (i32, i32) {
    %c0_i32 = arith.constant 0 : i32
    %c0_i32_0 = arith.constant 0 : i32
    %c0_i32_1 = arith.constant 0 : i32
    return %c0_i32, %c0_i32_0 : i32, i32
  }
  func.func @transform_3(%arg0: i32) -> (i32, i32) {
    %c0_i32 = arith.constant 0 : i32
    %c0_i32_0 = arith.constant 0 : i32
    return %arg0, %c0_i32 : i32, i32
  }
  func.func @transform_4(%arg0: i32) -> (i32, i32) {
    %c0_i32 = arith.constant 0 : i32
    %c0_i32_0 = arith.constant 0 : i32
    return %arg0, %c0_i32 : i32, i32
  }
}

module attributes {stable_mosaic.version = 11 : i64} {
  func.func @_agg_hwy_kernel(%arg0: i32, %arg1: i32, %arg2: memref<128x128xi8, #tpu.memory_space<vmem>>, %arg3: memref<128x1xf32, #tpu.memory_space<vmem>>, %arg4: memref<256x128xbf16, #tpu.memory_space<vmem>>, %arg5: memref<128x128xbf16, #tpu.memory_space<vmem>>, %arg6: memref<128x128xf32, #tpu.memory_space<vmem>>, %arg7: memref<1x128xf32, #tpu.memory_space<vmem>>, %arg8: memref<128x128xf32, #tpu.memory_space<vmem>>, %arg9: memref<128x128xf32, #tpu.memory_space<vmem>>) attributes {dimension_semantics = [#tpu.dimension_semantics<parallel>, #tpu.dimension_semantics<arbitrary>], iteration_bounds = array<i64: 2, 2>, scalar_prefetch = 0 : i64, scratch_operands = 1 : i64, tpu.core_type = #tpu.core_type<tc>, window_params = [{transform_indices = @transform_0, window_bounds = array<i64: 128, 128>}, {transform_indices = @transform_1, window_bounds = array<i64: 128, 1>}, {pipeline_mode = #tpu.pipeline_mode<synchronous>, transform_indices = @transform_2, window_bounds = array<i64: 256, 128>}, {transform_indices = @transform_3, window_bounds = array<i64: 128, 128>}, {transform_indices = @transform_4, window_bounds = array<i64: 128, 128>}, {pipeline_mode = #tpu.pipeline_mode<synchronous>, transform_indices = @transform_5, window_bounds = array<i64: 1, 128>}, {transform_indices = @transform_6, window_bounds = array<i64: 128, 128>}]} {
    %c0_i32 = arith.constant 0 : i32
    %0 = arith.cmpi eq, %arg1, %c0_i32 : i32
    %1 = arith.extui %0 : i1 to i32
    %c0_i32_0 = arith.constant 0 : i32
    %2 = arith.cmpi ne, %1, %c0_i32_0 : i32
    scf.if %2 {
      %cst_8 = arith.constant 0.000000e+00 : f32
      %17 = vector.broadcast %cst_8 : f32 to vector<128x128xf32>
      %c0_9 = arith.constant 0 : index
      %c0_10 = arith.constant 0 : index
      %18 = vector.load %arg9[%c0_9, %c0_10] : memref<128x128xf32, #tpu.memory_space<vmem>>, vector<128x128xf32>
      tpu.vector_store %arg9[%c0_9, %c0_10], %17 {strides = array<i32>} : memref<128x128xf32, #tpu.memory_space<vmem>>, vector<128x128xf32>,
    } else {
    }
    %c0 = arith.constant 0 : index
    %c0_1 = arith.constant 0 : index
    %3 = vector.load %arg9[%c0, %c0_1] : memref<128x128xf32, #tpu.memory_space<vmem>>, vector<128x128xf32>
    %c0_2 = arith.constant 0 : index
    %c0_3 = arith.constant 0 : index
    %4 = vector.load %arg2[%c0_2, %c0_3] : memref<128x128xi8, #tpu.memory_space<vmem>>, vector<128x128xi8>
    %5 = arith.sitofp %4 : vector<128x128xi8> to vector<128x128xf32>
    %6 = arith.truncf %5 : vector<128x128xf32> to vector<128x128xbf16>
    %c128_i32 = arith.constant 128 : i32
    %7 = arith.muli %arg1, %c128_i32 : i32
    %8 = tpu.assume_multiple %7, 128 : i32
    %9 = arith.index_cast %8 : i32 to index
    %c0_4 = arith.constant 0 : index
    %10 = vector.load %arg4[%9, %c0_4] : memref<256x128xbf16, #tpu.memory_space<vmem>>, vector<128x128xbf16>
    %cst = arith.constant dense<0.000000e+00> : vector<128x128xf32>
    %11 = tpu.matmul %6, %10, %cst {dimension_numbers = #tpu.dot_dimension_numbers<[1], [0], [0], [1], [0, 0, 1, 1], [], []>} : vector<128x128xbf16>, vector<128x128xbf16>, vector<128x128xf32> -> vector<128x128xf32>
    %12 = arith.addf %3, %11 : vector<128x128xf32>
    %c0_5 = arith.constant 0 : index
    %c0_6 = arith.constant 0 : index
    %13 = vector.load %arg9[%c0_5, %c0_6] : memref<128x128xf32, #tpu.memory_space<vmem>>, vector<128x128xf32>
    tpu.vector_store %arg9[%c0_5, %c0_6], %12 {strides = array<i32>} : memref<128x128xf32, #tpu.memory_space<vmem>>, vector<128x128xf32>,
    %c1_i32 = arith.constant 1 : i32
    %14 = arith.cmpi eq, %arg1, %c1_i32 : i32
    %15 = arith.extui %14 : i1 to i32
    %c0_i32_7 = arith.constant 0 : i32
    %16 = arith.cmpi ne, %15, %c0_i32_7 : i32
    scf.if %16 {
      %c0_8 = arith.constant 0 : index
      %c0_9 = arith.constant 0 : index
      %17 = vector.load %arg9[%c0_8, %c0_9] : memref<128x128xf32, #tpu.memory_space<vmem>>, vector<128x128xf32>
      %c0_10 = arith.constant 0 : index
      %c0_11 = arith.constant 0 : index
      %18 = vector.load %arg3[%c0_10, %c0_11] : memref<128x1xf32, #tpu.memory_space<vmem>>, vector<128x1xf32>
      %19 = vector.broadcast %18 : vector<128x1xf32> to vector<128x128xf32>
      %20 = arith.mulf %17, %19 : vector<128x128xf32>
      %c0_12 = arith.constant 0 : index
      %c0_13 = arith.constant 0 : index
      %21 = vector.load %arg7[%c0_12, %c0_13] : memref<1x128xf32, #tpu.memory_space<vmem>>, vector<1x128xf32>
      %22 = vector.broadcast %21 : vector<1x128xf32> to vector<128x128xf32>
      %23 = arith.addf %20, %22 : vector<128x128xf32>
      %cst_14 = arith.constant 0.000000e+00 : f32
      %24 = vector.broadcast %cst_14 : f32 to vector<128x128xf32>
      %25 = arith.maximumf %23, %24 : vector<128x128xf32>
      %c0_15 = arith.constant 0 : index
      %c0_16 = arith.constant 0 : index
      %26 = vector.load %arg5[%c0_15, %c0_16] : memref<128x128xbf16, #tpu.memory_space<vmem>>, vector<128x128xbf16>
      %27 = arith.extf %26 : vector<128x128xbf16> to vector<128x128xf32>
      %28 = arith.negf %27 : vector<128x128xf32>
      %29 = math.exp %28 : vector<128x128xf32>
      %cst_17 = arith.constant 1.000000e+00 : f32
      %30 = vector.broadcast %cst_17 : f32 to vector<128x128xf32>
      %31 = arith.addf %30, %29 : vector<128x128xf32>
      %32 = arith.divf %30, %31 : vector<128x128xf32>
      %33 = arith.mulf %32, %25 : vector<128x128xf32>
      %cst_18 = arith.constant 1.000000e+00 : f32
      %34 = vector.broadcast %cst_18 : f32 to vector<128x128xf32>
      %35 = arith.subf %34, %32 : vector<128x128xf32>
      %c0_19 = arith.constant 0 : index
      %c0_20 = arith.constant 0 : index
      %36 = vector.load %arg6[%c0_19, %c0_20] : memref<128x128xf32, #tpu.memory_space<vmem>>, vector<128x128xf32>
      %37 = arith.mulf %35, %36 : vector<128x128xf32>
      %38 = arith.addf %33, %37 : vector<128x128xf32>
      %c0_21 = arith.constant 0 : index
      %c0_22 = arith.constant 0 : index
      %39 = vector.load %arg8[%c0_21, %c0_22] : memref<128x128xf32, #tpu.memory_space<vmem>>, vector<128x128xf32>
      tpu.vector_store %arg8[%c0_21, %c0_22], %38 {strides = array<i32>} : memref<128x128xf32, #tpu.memory_space<vmem>>, vector<128x128xf32>,
    } else {
    }
    return
  }
  func.func @transform_0(%arg0: i32, %arg1: i32) -> (i32, i32) {
    %c0_i32 = arith.constant 0 : i32
    return %arg0, %arg1 : i32, i32
  }
  func.func @transform_1(%arg0: i32, %arg1: i32) -> (i32, i32) {
    %c0_i32 = arith.constant 0 : i32
    %c0_i32_0 = arith.constant 0 : i32
    return %arg0, %c0_i32 : i32, i32
  }
  func.func @transform_2(%arg0: i32, %arg1: i32) -> (i32, i32) {
    %c0_i32 = arith.constant 0 : i32
    %c0_i32_0 = arith.constant 0 : i32
    %c0_i32_1 = arith.constant 0 : i32
    return %c0_i32, %c0_i32_0 : i32, i32
  }
  func.func @transform_3(%arg0: i32, %arg1: i32) -> (i32, i32) {
    %c0_i32 = arith.constant 0 : i32
    %c0_i32_0 = arith.constant 0 : i32
    return %arg0, %c0_i32 : i32, i32
  }
  func.func @transform_4(%arg0: i32, %arg1: i32) -> (i32, i32) {
    %c0_i32 = arith.constant 0 : i32
    %c0_i32_0 = arith.constant 0 : i32
    return %arg0, %c0_i32 : i32, i32
  }
  func.func @transform_5(%arg0: i32, %arg1: i32) -> (i32, i32) {
    %c0_i32 = arith.constant 0 : i32
    %c0_i32_0 = arith.constant 0 : i32
    %c0_i32_1 = arith.constant 0 : i32
    return %c0_i32, %c0_i32_0 : i32, i32
  }
  func.func @transform_6(%arg0: i32, %arg1: i32) -> (i32, i32) {
    %c0_i32 = arith.constant 0 : i32
    %c0_i32_0 = arith.constant 0 : i32
    return %arg0, %c0_i32 : i32, i32
  }
}

</mosaic_0001>

<llo_original>
// kernel: _lambda_.3
$region0: #{_lambda_.3}
  #allocation0 [shape = 'u32[]', space=smem, size = 0x4, offset = 0x4, fixed_abs, tag = 'smem constant byte address 0x4 - core index']
  #allocation1 [shape = 'u32[72,128]{1,0:T(1,128)}', space=vmem, size = 0x9000, scoped, tag = 'internal scratch']
  %s0 = inlined_call_operand.vmem [shape: f32[256,128], index: 0, kind: input, shape index: {}]
  %s1 = inlined_call_operand.vmem [shape: bf16[128,256], index: 1, kind: input, shape index: {}]
  %s2 = inlined_call_operand.vmem [shape: f32[1,128], index: 2, kind: input, shape index: {}]
  %s3 = inlined_call_operand.vmem [shape: bf16[256,128], index: 3, kind: output, shape index: {0}]
  %s4 = inlined_call_operand.vmem [shape: bf16[256,128], index: 4, kind: output, shape index: {1}]
  %5 = xla_tuple %s3, %s4
  %s6 = sld [smem:[#allocation0]]
  $region53: #{_lambda_.3} parent=0
    _
  %s8 = ssub.s32 1, %s6
  %s9 = scalar_select 0, %s8, %s6
  loop: start=0, step=1, limit=4
  $region2: #{_lambda_.3} parent=0 // loop_pre_header
    _
  $region3: #{_lambda_.3} parent=0 // loop_header
    %s11 = sphi 0, %s15
    %p12 = scmp.ge.s32.totalorder %s11, 4
    %s21 = sphi 0, %s23
    %s24 = sphi 0, %s21
    %s25 = sphi 0, %s24
    %s41 = sphi 0, %s25
    %s45 = sphi 0, %s45
    %s47 = sphi 0, %s45
    %s48 = sphi 0, %s47
    %s62 = sphi 0, %s48
    %s66 = sphi 0, %s66
    %s68 = sphi 0, %s66
    %s69 = sphi 0, %s68
    %s83 = sphi 0, %s69
    %s89 = sphi 0, %s91
    %s92 = sphi 0, %s89
    %s93 = sphi 0, %s92
    %s109 = sphi 0, %s93
    %s115 = sphi 0, %s117
    %s118 = sphi 0, %s115
    %s119 = sphi 0, %s118
    %s135 = sphi 0, %s119
  $region4: #{_lambda_.3} parent=0 // loop_header_branch
    %14 = sbr.rel (%p12) target = $region8
  $region5: #{_lambda_.3} parent=0 // loop_body
    %s16 = ssub.s32 %s11, 1
    %s17 = ssub.s32 %s11, 2
    %s18 = sadd.s32 %s11, 1
    %s19 = ssub.s32 %s11, %s18
    %p20 = scmp.eq.s32.totalorder %s19, 0
    %s22 = sadd.s32 %s21, 1
    %s23 = scalar_select %p20, %s21, %s22
    %p26 = pneg %p20
    %p27 = scmp.eq.s32.totalorder %s11, 1
    %p28 = por %p26, %p27
    %p29 = scmp.ne.s32.totalorder %s21, %s24
    %p30 = scmp.eq.s32.totalorder %s11, 0
    %p31 = por %p29, %p30
    %p32 = scmp.ne.s32.totalorder %s21, %s24
    %p33 = scmp.eq.s32.totalorder %s16, 1
    %p34 = por %p32, %p33
    %p35 = scmp.ne.s32.totalorder %s24, %s25
    %p36 = scmp.eq.s32.totalorder %s16, 0
    %p37 = por %p35, %p36
    %p38 = scmp.ne.s32.totalorder %s24, %s25
    %p39 = scmp.eq.s32.totalorder %s17, 1
    %p40 = por %p38, %p39
    %p42 = scmp.ne.s32.totalorder %s25, %s41
    %p43 = scmp.eq.s32.totalorder %s17, 0
    %p44 = por %p42, %p43
    %s46 = sadd.s32 %s45, 1
    %p49 = scmp.eq.s32.totalorder %s11, 1
    %p50 = scmp.ne.s32.totalorder %s45, %s47
    %p51 = scmp.eq.s32.totalorder %s11, 0
    %p52 = por %p50, %p51
    %p53 = scmp.ne.s32.totalorder %s45, %s47
    %p54 = scmp.eq.s32.totalorder %s16, 1
    %p55 = por %p53, %p54
    %p56 = scmp.ne.s32.totalorder %s47, %s48
    %p57 = scmp.eq.s32.totalorder %s16, 0
    %p58 = por %p56, %p57
    %p59 = scmp.ne.s32.totalorder %s47, %s48
    %p60 = scmp.eq.s32.totalorder %s17, 1
    %p61 = por %p59, %p60
    %p63 = scmp.ne.s32.totalorder %s48, %s62
    %p64 = scmp.eq.s32.totalorder %s17, 0
    %p65 = por %p63, %p64
    %s67 = sadd.s32 %s66, 1
    %p70 = scmp.eq.s32.totalorder %s11, 1
    %p71 = scmp.ne.s32.totalorder %s66, %s68
    %p72 = scmp.eq.s32.totalorder %s11, 0
    %p73 = por %p71, %p72
    %p74 = scmp.ne.s32.totalorder %s66, %s68
    %p75 = scmp.eq.s32.totalorder %s16, 1
    %p76 = por %p74, %p75
    %p77 = scmp.ne.s32.totalorder %s68, %s69
    %p78 = scmp.eq.s32.totalorder %s16, 0
    %p79 = por %p77, %p78
    %p80 = scmp.ne.s32.totalorder %s68, %s69
    %p81 = scmp.eq.s32.totalorder %s17, 1
    %p82 = por %p80, %p81
    %p84 = scmp.ne.s32.totalorder %s69, %s83
    %p85 = scmp.eq.s32.totalorder %s17, 0
    %p86 = por %p84, %p85
    %s87 = ssub.s32 %s11, %s18
    %p88 = scmp.eq.s32.totalorder %s87, 0
    %s90 = sadd.s32 %s89, 1
    %s91 = scalar_select %p88, %s89, %s90
    %p94 = pneg %p88
    %p95 = scmp.eq.s32.totalorder %s11, 1
    %p96 = por %p94, %p95
    %p97 = scmp.ne.s32.totalorder %s89, %s92
    %p98 = scmp.eq.s32.totalorder %s11, 0
    %p99 = por %p97, %p98
    %p100 = scmp.ne.s32.totalorder %s89, %s92
    %p101 = scmp.eq.s32.totalorder %s16, 1
    %p102 = por %p100, %p101
    %p103 = scmp.ne.s32.totalorder %s92, %s93
    %p104 = scmp.eq.s32.totalorder %s16, 0
    %p105 = por %p103, %p104
    %p106 = scmp.ne.s32.totalorder %s92, %s93
    %p107 = scmp.eq.s32.totalorder %s17, 1
    %p108 = por %p106, %p107
    %p110 = scmp.ne.s32.totalorder %s93, %s109
    %p111 = scmp.eq.s32.totalorder %s17, 0
    %p112 = por %p110, %p111
    %s113 = ssub.s32 %s11, %s18
    %p114 = scmp.eq.s32.totalorder %s113, 0
    %s116 = sadd.s32 %s115, 1
    %s117 = scalar_select %p114, %s115, %s116
    %p120 = pneg %p114
    %p121 = scmp.eq.s32.totalorder %s11, 1
    %p122 = por %p120, %p121
    %p123 = scmp.ne.s32.totalorder %s115, %s118
    %p124 = scmp.eq.s32.totalorder %s11, 0
    %p125 = por %p123, %p124
    %p126 = scmp.ne.s32.totalorder %s115, %s118
    %p127 = scmp.eq.s32.totalorder %s16, 1
    %p128 = por %p126, %p127
    %p129 = scmp.ne.s32.totalorder %s118, %s119
    %p130 = scmp.eq.s32.totalorder %s16, 0
    %p131 = por %p129, %p130
    %p132 = scmp.ne.s32.totalorder %s118, %s119
    %p133 = scmp.eq.s32.totalorder %s17, 1
    %p134 = por %p132, %p133
    %p136 = scmp.ne.s32.totalorder %s119, %s135
    %p137 = scmp.eq.s32.totalorder %s17, 0
    %p138 = por %p136, %p137
    %p139 = scmp.le.s32.totalorder 1, %s11
    %p140 = scmp.lt.s32.totalorder %s11, 3
    %p141 = pnand %p139, %p140
    %p142 = pneg %p141
    // Predicated region
    $region9: #{_lambda_.3} parent=5 // pred_check
      _
    $region10: #{_lambda_.3} parent=5 // pred_check_branch
      %144 = sbr.rel (%p141) target = $region12
    $region11: #{_lambda_.3} parent=5 // pred_region
      %s145 = ssub.s32 %s11, 1
      // Predicated region
      $region13: #{_lambda_.3} parent=11 // pred_check
        %p146 = pneg %p58
      $region14: #{_lambda_.3} parent=11 // pred_check_branch
        %148 = sbr.rel (%p146) target = $region16
      $region15: #{_lambda_.3} parent=11 // pred_region
        _
      $region16: #{_lambda_.3} parent=11 // pred_fallthru
        _
      // Predicated region
      $region17: #{_lambda_.3} parent=11 // pred_check
        %p149 = pneg %p79
      $region18: #{_lambda_.3} parent=11 // pred_check_branch
        %151 = sbr.rel (%p149) target = $region20
      $region19: #{_lambda_.3} parent=11 // pred_region
        _
      $region20: #{_lambda_.3} parent=11 // pred_fallthru
        _
    $region12: #{_lambda_.3} parent=5 // pred_fallthru
      _
    %p152 = scmp.lt.s32.totalorder %s11, 2
    // Predicated region
    $region21: #{_lambda_.3} parent=5 // pred_check
      %p153 = pneg %p152
    $region22: #{_lambda_.3} parent=5 // pred_check_branch
      %155 = sbr.rel (%p153) target = $region24
    $region23: #{_lambda_.3} parent=5 // pred_region
      // Predicated region
      $region25: #{_lambda_.3} parent=23 // pred_check
        %p156 = pneg %p31
      $region26: #{_lambda_.3} parent=23 // pred_check_branch
        %158 = sbr.rel (%p156) target = $region28
      $region27: #{_lambda_.3} parent=23 // pred_region
        %s159 = smul.u32 16, %s11
        %p160 = scmp.lt.s32.totalorder %s159, 31
        %s161 = scalar_select %p160, %s159, 31
        %s162 = smul.addr %s161, 8
        %s163 = scalar_lea.vmem %s0, %s162
        %s164 = smul.u32 16, %s11
      $region28: #{_lambda_.3} parent=23 // pred_fallthru
        _
    $region24: #{_lambda_.3} parent=5 // pred_fallthru
      _
    %p165 = scmp.le.s32.totalorder 1, %s11
    %p166 = scmp.lt.s32.totalorder %s11, 3
    %p167 = pnand %p165, %p166
    %p168 = pneg %p167
    // Predicated region
    $region29: #{_lambda_.3} parent=5 // pred_check
      _
    $region30: #{_lambda_.3} parent=5 // pred_check_branch
      %170 = sbr.rel (%p167) target = $region32
    $region31: #{_lambda_.3} parent=5 // pred_region
      %s171 = ssub.s32 %s11, 1
      %s172 = smul.u32 16, %s16
      %p173 = scmp.lt.s32.totalorder %s172, 31
      %s174 = scalar_select %p173, %s172, 31
      %s175 = smul.addr %s174, 8
      %s176 = scalar_lea.vmem %s0, %s175
      %p177 = pneg %p37
      %p178 = pneg %p34
      %p179 = pneg %p58
      %p180 = pneg %p55
      %p181 = pneg %p79
      %p182 = pneg %p76
      %p183 = pneg %p105
      %p184 = pneg %p102
      %s185 = smul.u32 16, %s16
      %p186 = scmp.lt.s32.totalorder %s185, 31
      %s187 = scalar_select %p186, %s185, 31
      %s188 = smul.addr %s187, 4
      %s189 = scalar_lea.vmem %s3, %s188
      %p190 = pneg %p131
      %p191 = pneg %p128
      %s192 = smul.u32 16, %s16
      %p193 = scmp.lt.s32.totalorder %s192, 31
      %s194 = scalar_select %p193, %s192, 31
      %s195 = smul.addr %s194, 4
      %s196 = scalar_lea.vmem %s4, %s195
      %s197 = smul.u32 16, %s16
      %p198 = scmp.lt.s32.totalorder %s197, 31
      %s199 = scalar_select %p198, %s197, 31
      %s200 = smul.addr %s199, 8
      %s201 = scalar_lea.vmem %s0, %s200
      %s202 = smul.u32 16, %s16
      %s203 = smul.u32 16, %s16
      %p204 = scmp.lt.s32.totalorder %s203, 31
      %s205 = scalar_select %p204, %s203, 31
      %s206 = smul.addr %s205, 4
      %s207 = scalar_lea.vmem %s3, %s206
      %s208 = smul.u32 16, %s16
      %s209 = smul.u32 16, %s16
      %p210 = scmp.lt.s32.totalorder %s209, 31
      %s211 = scalar_select %p210, %s209, 31
      %s212 = smul.addr %s211, 4
      %s213 = scalar_lea.vmem %s4, %s212
      %s214 = smul.u32 16, %s16
      %v215 = vld [vmem:[%s201] sm:$0xff]
      %v216 = vld [vmem:[%s201 + $0x8] sm:$0xff]
      %v217 = vld [vmem:[%s201 + $0x10] sm:$0xff]
      %v218 = vld [vmem:[%s201 + $0x18] sm:$0xff]
      %v219 = vld [vmem:[%s201 + $0x20] sm:$0xff]
      %v220 = vld [vmem:[%s201 + $0x28] sm:$0xff]
      %v221 = vld [vmem:[%s201 + $0x30] sm:$0xff]
      %v222 = vld [vmem:[%s201 + $0x38] sm:$0xff]
      %v223 = vld [vmem:[%s201 + $0x40] sm:$0xff]
      %v224 = vld [vmem:[%s201 + $0x48] sm:$0xff]
      %v225 = vld [vmem:[%s201 + $0x50] sm:$0xff]
      %v226 = vld [vmem:[%s201 + $0x58] sm:$0xff]
      %v227 = vld [vmem:[%s201 + $0x60] sm:$0xff]
      %v228 = vld [vmem:[%s201 + $0x68] sm:$0xff]
      %v229 = vld [vmem:[%s201 + $0x70] sm:$0xff]
      %v230 = vld [vmem:[%s201 + $0x78] sm:$0xff]
      %v231 = vpack.c.bf16 %v216, %v215
      %v232 = vpack.c.bf16 %v218, %v217
      %v233 = vpack.c.bf16 %v220, %v219
      %v234 = vpack.c.bf16 %v222, %v221
      %v235 = vpack.c.bf16 %v224, %v223
      %v236 = vpack.c.bf16 %v226, %v225
      %v237 = vpack.c.bf16 %v228, %v227
      %v238 = vpack.c.bf16 %v230, %v229
      %v239 = vld [vmem:[%s1] sm:$0xff]
      %v240 = vld [vmem:[%s1 + $0x8] sm:$0xff]
      %v241 = vld [vmem:[%s1 + $0x10] sm:$0xff]
      %v242 = vld [vmem:[%s1 + $0x18] sm:$0xff]
      %v243 = vld [vmem:[%s1 + $0x20] sm:$0xff]
      %v244 = vld [vmem:[%s1 + $0x28] sm:$0xff]
      %v245 = vld [vmem:[%s1 + $0x30] sm:$0xff]
      %v246 = vld [vmem:[%s1 + $0x38] sm:$0xff]
      %v247 = vld [vmem:[%s1 + $0x40] sm:$0xff]
      %v248 = vld [vmem:[%s1 + $0x48] sm:$0xff]
      %v249 = vld [vmem:[%s1 + $0x50] sm:$0xff]
      %v250 = vld [vmem:[%s1 + $0x58] sm:$0xff]
      %v251 = vld [vmem:[%s1 + $0x60] sm:$0xff]
      %v252 = vld [vmem:[%s1 + $0x68] sm:$0xff]
      %v253 = vld [vmem:[%s1 + $0x70] sm:$0xff]
      %v254 = vld [vmem:[%s1 + $0x78] sm:$0xff]
      %v271 = vunpack.c.l.b16 %v239
      %v272 = vunpack.c.h.b16 %v239
      %v273 = vunpack.c.l.b16 %v240
      %v274 = vunpack.c.h.b16 %v240
      %v275 = vunpack.c.l.b16 %v241
      %v276 = vunpack.c.h.b16 %v241
      %v277 = vunpack.c.l.b16 %v242
      %v278 = vunpack.c.h.b16 %v242
      %v279 = vunpack.c.l.b16 %v243
      %v280 = vunpack.c.h.b16 %v243
      %v281 = vunpack.c.l.b16 %v244
      %v282 = vunpack.c.h.b16 %v244
      %v283 = vunpack.c.l.b16 %v245
      %v284 = vunpack.c.h.b16 %v245
      %v285 = vunpack.c.l.b16 %v246
      %v286 = vunpack.c.h.b16 %v246
      %v287 = vunpack.c.l.b16 %v247
      %v288 = vunpack.c.h.b16 %v247
      %v289 = vunpack.c.l.b16 %v248
      %v290 = vunpack.c.h.b16 %v248
      %v291 = vunpack.c.l.b16 %v249
      %v292 = vunpack.c.h.b16 %v249
      %v293 = vunpack.c.l.b16 %v250
      %v294 = vunpack.c.h.b16 %v250
      %v295 = vunpack.c.l.b16 %v251
      %v296 = vunpack.c.h.b16 %v251
      %v297 = vunpack.c.l.b16 %v252
      %v298 = vunpack.c.h.b16 %v252
      %v299 = vunpack.c.l.b16 %v253
      %v300 = vunpack.c.h.b16 %v253
      %v301 = vunpack.c.l.b16 %v254
      %v302 = vunpack.c.h.b16 %v254
      %v303 = vpack.c.b16 %v273, %v271
      %v304 = vpack.c.b16 %v274, %v272
      %v305 = vpack.c.b16 %v277, %v275
      %v306 = vpack.c.b16 %v278, %v276
      %v307 = vpack.c.b16 %v281, %v279
      %v308 = vpack.c.b16 %v282, %v280
      %v309 = vpack.c.b16 %v285, %v283
      %v310 = vpack.c.b16 %v286, %v284
      %v311 = vpack.c.b16 %v289, %v287
      %v312 = vpack.c.b16 %v290, %v288
      %v313 = vpack.c.b16 %v293, %v291
      %v314 = vpack.c.b16 %v294, %v292
      %v315 = vpack.c.b16 %v297, %v295
      %v316 = vpack.c.b16 %v298, %v296
      %v317 = vpack.c.b16 %v301, %v299
      %v318 = vpack.c.b16 %v302, %v300
      %335 = vmatpush.bf16.msra.mxu0 %v317
      %336 = vmatpush.bf16.msra.mxu0 %v315
      %337 = vmatpush.bf16.msra.mxu0 %v313
      %338 = vmatpush.bf16.msra.mxu0 %v311
      %339 = vmatpush.bf16.msra.mxu0 %v309
      %340 = vmatpush.bf16.msra.mxu0 %v307
      %341 = vmatpush.bf16.msra.mxu0 %v305
      %342 = vmatpush.bf16.msra.mxu0 %v303
      %343 = vmatmul.bf16.gmra.mxu0 %v231
      %v344 = vpop.f32.mrf.mxu0
      %v345 = vadd.f32 0.0, %v344
      %v346 = vpop.f32.mrf.mxu0
      %v347 = vadd.f32 0.0, %v346
      %348 = vmatmul.bf16.gmra.mxu0 %v232
      %v349 = vpop.f32.mrf.mxu0
      %v350 = vadd.f32 0.0, %v349
      %v351 = vpop.f32.mrf.mxu0
      %v352 = vadd.f32 0.0, %v351
      %353 = vmatmul.bf16.gmra.mxu0 %v233
      %v354 = vpop.f32.mrf.mxu0
      %v355 = vadd.f32 0.0, %v354
      %v356 = vpop.f32.mrf.mxu0
      %v357 = vadd.f32 0.0, %v356
      %358 = vmatmul.bf16.gmra.mxu0 %v234
      %v359 = vpop.f32.mrf.mxu0
      %v360 = vadd.f32 0.0, %v359
      %v361 = vpop.f32.mrf.mxu0
      %v362 = vadd.f32 0.0, %v361
      %363 = vmatmul.bf16.gmra.mxu0 %v235
      %v364 = vpop.f32.mrf.mxu0
      %v365 = vadd.f32 0.0, %v364
      %v366 = vpop.f32.mrf.mxu0
      %v367 = vadd.f32 0.0, %v366
      %368 = vmatmul.bf16.gmra.mxu0 %v236
      %v369 = vpop.f32.mrf.mxu0
      %v370 = vadd.f32 0.0, %v369
      %v371 = vpop.f32.mrf.mxu0
      %v372 = vadd.f32 0.0, %v371
      %373 = vmatmul.bf16.gmra.mxu0 %v237
      %v374 = vpop.f32.mrf.mxu0
      %v375 = vadd.f32 0.0, %v374
      %v376 = vpop.f32.mrf.mxu0
      %v377 = vadd.f32 0.0, %v376
      %378 = vmatmul.bf16.gmra.mxu0 %v238
      %v379 = vpop.f32.mrf.mxu0
      %v380 = vadd.f32 0.0, %v379
      %v381 = vpop.f32.mrf.mxu0
      %v382 = vadd.f32 0.0, %v381
      %383 = vdwg.mxu0
      %384 = vmatpush.bf16.msra.mxu0 %v318
      %385 = vmatpush.bf16.msra.mxu0 %v316
      %386 = vmatpush.bf16.msra.mxu0 %v314
      %387 = vmatpush.bf16.msra.mxu0 %v312
      %388 = vmatpush.bf16.msra.mxu0 %v310
      %389 = vmatpush.bf16.msra.mxu0 %v308
      %390 = vmatpush.bf16.msra.mxu0 %v306
      %391 = vmatpush.bf16.msra.mxu0 %v304
      %392 = vmatmul.bf16.gmra.mxu0 %v231
      %v393 = vpop.f32.mrf.mxu0
      %v394 = vadd.f32 0.0, %v393
      %v395 = vpop.f32.mrf.mxu0
      %v396 = vadd.f32 0.0, %v395
      %397 = vmatmul.bf16.gmra.mxu0 %v232
      %v398 = vpop.f32.mrf.mxu0
      %v399 = vadd.f32 0.0, %v398
      %v400 = vpop.f32.mrf.mxu0
      %v401 = vadd.f32 0.0, %v400
      %402 = vmatmul.bf16.gmra.mxu0 %v233
      %v403 = vpop.f32.mrf.mxu0
      %v404 = vadd.f32 0.0, %v403
      %v405 = vpop.f32.mrf.mxu0
      %v406 = vadd.f32 0.0, %v405
      %407 = vmatmul.bf16.gmra.mxu0 %v234
      %v408 = vpop.f32.mrf.mxu0
      %v409 = vadd.f32 0.0, %v408
      %v410 = vpop.f32.mrf.mxu0
      %v411 = vadd.f32 0.0, %v410
      %412 = vmatmul.bf16.gmra.mxu0 %v235
      %v413 = vpop.f32.mrf.mxu0
      %v414 = vadd.f32 0.0, %v413
      %v415 = vpop.f32.mrf.mxu0
      %v416 = vadd.f32 0.0, %v415
      %417 = vmatmul.bf16.gmra.mxu0 %v236
      %v418 = vpop.f32.mrf.mxu0
      %v419 = vadd.f32 0.0, %v418
      %v420 = vpop.f32.mrf.mxu0
      %v421 = vadd.f32 0.0, %v420
      %422 = vmatmul.bf16.gmra.mxu0 %v237
      %v423 = vpop.f32.mrf.mxu0
      %v424 = vadd.f32 0.0, %v423
      %v425 = vpop.f32.mrf.mxu0
      %v426 = vadd.f32 0.0, %v425
      %427 = vmatmul.bf16.gmra.mxu0 %v238
      %v428 = vpop.f32.mrf.mxu0
      %v429 = vadd.f32 0.0, %v428
      %v430 = vpop.f32.mrf.mxu0
      %v431 = vadd.f32 0.0, %v430
      %432 = vdwg.mxu0
      %v433 = vpack.c.bf16 %v345, %v345
      %v434 = vpack.c.bf16 %v347, %v347
      %v435 = vpack.c.bf16 %v350, %v350
      %v436 = vpack.c.bf16 %v352, %v352
      %v437 = vpack.c.bf16 %v355, %v355
      %v438 = vpack.c.bf16 %v357, %v357
      %v439 = vpack.c.bf16 %v360, %v360
      %v440 = vpack.c.bf16 %v362, %v362
      %v441 = vpack.c.bf16 %v365, %v365
      %v442 = vpack.c.bf16 %v367, %v367
      %v443 = vpack.c.bf16 %v370, %v370
      %v444 = vpack.c.bf16 %v372, %v372
      %v445 = vpack.c.bf16 %v375, %v375
      %v446 = vpack.c.bf16 %v377, %v377
      %v447 = vpack.c.bf16 %v380, %v380
      %v448 = vpack.c.bf16 %v382, %v382
      %449 = vst [vmem:[%s207] sm:$0xf] %v433
      %450 = vst [vmem:[%s207 + $0x4] sm:$0xf] %v434
      %451 = vst [vmem:[%s207 + $0x8] sm:$0xf] %v435
      %452 = vst [vmem:[%s207 + $0xc] sm:$0xf] %v436
      %453 = vst [vmem:[%s207 + $0x10] sm:$0xf] %v437
      %454 = vst [vmem:[%s207 + $0x14] sm:$0xf] %v438
      %455 = vst [vmem:[%s207 + $0x18] sm:$0xf] %v439
      %456 = vst [vmem:[%s207 + $0x1c] sm:$0xf] %v440
      %457 = vst [vmem:[%s207 + $0x20] sm:$0xf] %v441
      %458 = vst [vmem:[%s207 + $0x24] sm:$0xf] %v442
      %459 = vst [vmem:[%s207 + $0x28] sm:$0xf] %v443
      %460 = vst [vmem:[%s207 + $0x2c] sm:$0xf] %v444
      %461 = vst [vmem:[%s207 + $0x30] sm:$0xf] %v445
      %462 = vst [vmem:[%s207 + $0x34] sm:$0xf] %v446
      %463 = vst [vmem:[%s207 + $0x38] sm:$0xf] %v447
      %464 = vst [vmem:[%s207 + $0x3c] sm:$0xf] %v448
      %v465 = vld [vmem:[%s2] sm:$0x1]
      %v467 = vperm.slane %v465, 0
      %v469 = vadd.f32 %v394, %v467
      %v470 = vadd.f32 %v396, %v467
      %v471 = vadd.f32 %v399, %v467
      %v472 = vadd.f32 %v401, %v467
      %v473 = vadd.f32 %v404, %v467
      %v474 = vadd.f32 %v406, %v467
      %v475 = vadd.f32 %v409, %v467
      %v476 = vadd.f32 %v411, %v467
      %v477 = vadd.f32 %v414, %v467
      %v478 = vadd.f32 %v416, %v467
      %v479 = vadd.f32 %v419, %v467
      %v480 = vadd.f32 %v421, %v467
      %v481 = vadd.f32 %v424, %v467
      %v482 = vadd.f32 %v426, %v467
      %v483 = vadd.f32 %v429, %v467
      %v484 = vadd.f32 %v431, %v467
      %v485 = vpack.c.bf16 %v469, %v469
      %v486 = vpack.c.bf16 %v470, %v470
      %v487 = vpack.c.bf16 %v471, %v471
      %v488 = vpack.c.bf16 %v472, %v472
      %v489 = vpack.c.bf16 %v473, %v473
      %v490 = vpack.c.bf16 %v474, %v474
      %v491 = vpack.c.bf16 %v475, %v475
      %v492 = vpack.c.bf16 %v476, %v476
      %v493 = vpack.c.bf16 %v477, %v477
      %v494 = vpack.c.bf16 %v478, %v478
      %v495 = vpack.c.bf16 %v479, %v479
      %v496 = vpack.c.bf16 %v480, %v480
      %v497 = vpack.c.bf16 %v481, %v481
      %v498 = vpack.c.bf16 %v482, %v482
      %v499 = vpack.c.bf16 %v483, %v483
      %v500 = vpack.c.bf16 %v484, %v484
      %501 = vst [vmem:[%s213] sm:$0xf] %v485
      %502 = vst [vmem:[%s213 + $0x4] sm:$0xf] %v486
      %503 = vst [vmem:[%s213 + $0x8] sm:$0xf] %v487
      %504 = vst [vmem:[%s213 + $0xc] sm:$0xf] %v488
      %505 = vst [vmem:[%s213 + $0x10] sm:$0xf] %v489
      %506 = vst [vmem:[%s213 + $0x14] sm:$0xf] %v490
      %507 = vst [vmem:[%s213 + $0x18] sm:$0xf] %v491
      %508 = vst [vmem:[%s213 + $0x1c] sm:$0xf] %v492
      %509 = vst [vmem:[%s213 + $0x20] sm:$0xf] %v493
      %510 = vst [vmem:[%s213 + $0x24] sm:$0xf] %v494
      %511 = vst [vmem:[%s213 + $0x28] sm:$0xf] %v495
      %512 = vst [vmem:[%s213 + $0x2c] sm:$0xf] %v496
      %513 = vst [vmem:[%s213 + $0x30] sm:$0xf] %v497
      %514 = vst [vmem:[%s213 + $0x34] sm:$0xf] %v498
      %515 = vst [vmem:[%s213 + $0x38] sm:$0xf] %v499
      %516 = vst [vmem:[%s213 + $0x3c] sm:$0xf] %v500
      %s517 = smul.u32 16, %s16
      %p518 = scmp.lt.s32.totalorder %s517, 31
      %s519 = scalar_select %p518, %s517, 31
      %s520 = smul.addr %s519, 4
      %s521 = scalar_lea.vmem %s3, %s520
      %s522 = smul.u32 16, %s16
      %p523 = scmp.lt.s32.totalorder %s522, 31
      %s524 = scalar_select %p523, %s522, 31
      %s525 = smul.addr %s524, 4
      %s526 = scalar_lea.vmem %s4, %s525
      // Predicated region
      $region33: #{_lambda_.3} parent=31 // pred_check
        %p527 = pneg %p102
      $region34: #{_lambda_.3} parent=31 // pred_check_branch
        %529 = sbr.rel (%p527) target = $region36
      $region35: #{_lambda_.3} parent=31 // pred_region
        %s530 = smul.u32 16, %s16
      $region36: #{_lambda_.3} parent=31 // pred_fallthru
        _
      // Predicated region
      $region37: #{_lambda_.3} parent=31 // pred_check
        %p531 = pneg %p128
      $region38: #{_lambda_.3} parent=31 // pred_check_branch
        %533 = sbr.rel (%p531) target = $region40
      $region39: #{_lambda_.3} parent=31 // pred_region
        %s534 = smul.u32 16, %s16
      $region40: #{_lambda_.3} parent=31 // pred_fallthru
        _
    $region32: #{_lambda_.3} parent=5 // pred_fallthru
      _
    %p535 = scmp.le.s32.totalorder 2, %s11
    // Predicated region
    $region41: #{_lambda_.3} parent=5 // pred_check
      %p536 = pneg %p535
    $region42: #{_lambda_.3} parent=5 // pred_check_branch
      %538 = sbr.rel (%p536) target = $region44
    $region43: #{_lambda_.3} parent=5 // pred_region
      %s539 = ssub.s32 %s11, 2
      // Predicated region
      $region45: #{_lambda_.3} parent=43 // pred_check
        %p540 = pneg %p108
      $region46: #{_lambda_.3} parent=43 // pred_check_branch
        %542 = sbr.rel (%p540) target = $region48
      $region47: #{_lambda_.3} parent=43 // pred_region
        %s543 = smul.u32 16, %s17
        %p544 = scmp.lt.s32.totalorder %s543, 31
        %s545 = scalar_select %p544, %s543, 31
        %s546 = smul.addr %s545, 4
        %s547 = scalar_lea.vmem %s3, %s546
      $region48: #{_lambda_.3} parent=43 // pred_fallthru
        _
      // Predicated region
      $region49: #{_lambda_.3} parent=43 // pred_check
        %p548 = pneg %p134
      $region50: #{_lambda_.3} parent=43 // pred_check_branch
        %550 = sbr.rel (%p548) target = $region52
      $region51: #{_lambda_.3} parent=43 // pred_region
        %s551 = smul.u32 16, %s17
        %p552 = scmp.lt.s32.totalorder %s551, 31
        %s553 = scalar_select %p552, %s551, 31
        %s554 = smul.addr %s553, 4
        %s555 = scalar_lea.vmem %s4, %s554
      $region52: #{_lambda_.3} parent=43 // pred_fallthru
        _
    $region44: #{_lambda_.3} parent=5 // pred_fallthru
      _
  $region6: #{_lambda_.3} parent=0 // loop_footer
    %s15 = sadd.s32 1, %s11
  $region7: #{_lambda_.3} parent=0 // loop_footer_branch
    %10 = sbr.rel target = $region3
  $region8: #{_lambda_.3} parent=0 // loop_exit
    _

// kernel: _lambda_.5
$region0: #{_lambda_.5}
  #allocation0 [shape = 'u32[]', space=smem, size = 0x4, offset = 0x4, fixed_abs, tag = 'smem constant byte address 0x4 - core index']
  #allocation1 [shape = 'u32[72,128]{1,0:T(1,128)}', space=vmem, size = 0x9000, scoped, tag = 'internal scratch']
  #allocation2 [shape = 'f32[128,128]{1,0:T(8,128)}', space=vmem, size = 0x10000, scoped, tag = 'scratch operand']
  %s0 = inlined_call_operand.vmem [shape: s8[256,256], index: 0, kind: input, shape index: {}]
  %s1 = inlined_call_operand.vmem [shape: f32[256,1], index: 1, kind: input, shape index: {}]
  %s2 = inlined_call_operand.vmem [shape: bf16[256,128], index: 2, kind: input, shape index: {}]
  %s3 = inlined_call_operand.vmem [shape: bf16[256,128], index: 3, kind: input, shape index: {}]
  %s4 = inlined_call_operand.vmem [shape: f32[256,128], index: 4, kind: input, shape index: {}]
  %s5 = inlined_call_operand.vmem [shape: f32[1,128], index: 5, kind: input, shape index: {}]
  %s6 = inlined_call_operand.vmem [shape: f32[256,128], index: 6, kind: output, shape index: {}]
  %s7 = sld [smem:[#allocation0]]
  $region103: #{_lambda_.5} parent=0
    _
  %s9 = ssub.s32 1, %s7
  %s10 = scalar_select 0, %s9, %s7
  $region1: #{_lambda_.5} parent=0
    #allocation3 [shape = 'u8[32768]{0}', space=vmem, size = 0x8000, scoped, tag = 'input window, operand 0']
    loop: start=0, step=1, limit=6
    $region2: #{_lambda_.5} parent=1 // loop_pre_header
      _
    $region3: #{_lambda_.5} parent=1 // loop_header
      %s12 = sphi 0, %s16
      %p13 = scmp.ge.s32.totalorder %s12, 6
      %s19 = sphi 0, %s31
      %s20 = sphi 0, %s27
      %s21 = sphi 0, %s19
      %s22 = sphi 0, %s20
      %s23 = sphi 0, %s21
      %s24 = sphi 0, %s22
      %s36 = sphi 0, %s38
      %s39 = sphi 0, %s36
      %s40 = sphi 0, %s39
      %s56 = sphi 0, %s40
      %s62 = sphi 0, %s64
      %s65 = sphi 0, %s62
      %s66 = sphi 0, %s65
      %s82 = sphi 0, %s66
      %s86 = sphi 0, %s86
      %s88 = sphi 0, %s86
      %s89 = sphi 0, %s88
      %s103 = sphi 0, %s89
      %s109 = sphi 0, %s111
      %s112 = sphi 0, %s109
      %s113 = sphi 0, %s112
      %s129 = sphi 0, %s113
      %s135 = sphi 0, %s137
      %s138 = sphi 0, %s135
      %s139 = sphi 0, %s138
      %s155 = sphi 0, %s139
      %s159 = sphi 0, %s159
      %s161 = sphi 0, %s159
      %s162 = sphi 0, %s161
      %s176 = sphi 0, %s162
      %s182 = sphi 0, %s184
      %s185 = sphi 0, %s182
      %s186 = sphi 0, %s185
      %s202 = sphi 0, %s186
    $region4: #{_lambda_.5} parent=1 // loop_header_branch
      %15 = sbr.rel (%p13) target = $region8
    $region5: #{_lambda_.5} parent=1 // loop_body
      %s17 = ssub.s32 %s12, 1
      %s18 = ssub.s32 %s12, 2
      %s25 = sadd.s32 1, %s20
      %p26 = scmp.ge.s32.totalorder %s25, 2
      %s27 = scalar_select %p26, 0, %s25
      %s28 = sadd.s32 1, %s19
      %s29 = scalar_select %p26, %s28, %s19
      %p30 = scmp.ge.s32.totalorder %s29, 2
      %s31 = scalar_select %p30, 0, %s29
      %s32 = ssub.s32 %s19, %s31
      %s33 = ssub.s32 %s20, %s27
      %s34 = sor.u32 %s32, %s33
      %p35 = scmp.eq.s32.totalorder %s34, 0
      %s37 = sadd.s32 %s36, 1
      %s38 = scalar_select %p35, %s36, %s37
      %p41 = pneg %p35
      %p42 = scmp.eq.s32.totalorder %s12, 3
      %p43 = por %p41, %p42
      %p44 = scmp.ne.s32.totalorder %s36, %s39
      %p45 = scmp.eq.s32.totalorder %s12, 0
      %p46 = por %p44, %p45
      %p47 = scmp.ne.s32.totalorder %s36, %s39
      %p48 = scmp.eq.s32.totalorder %s17, 3
      %p49 = por %p47, %p48
      %p50 = scmp.ne.s32.totalorder %s39, %s40
      %p51 = scmp.eq.s32.totalorder %s17, 0
      %p52 = por %p50, %p51
      %p53 = scmp.ne.s32.totalorder %s39, %s40
      %p54 = scmp.eq.s32.totalorder %s18, 3
      %p55 = por %p53, %p54
      %p57 = scmp.ne.s32.totalorder %s40, %s56
      %p58 = scmp.eq.s32.totalorder %s18, 0
      %p59 = por %p57, %p58
      %s60 = ssub.s32 %s19, %s31
      %p61 = scmp.eq.s32.totalorder %s60, 0
      %s63 = sadd.s32 %s62, 1
      %s64 = scalar_select %p61, %s62, %s63
      %p67 = pneg %p61
      %p68 = scmp.eq.s32.totalorder %s12, 3
      %p69 = por %p67, %p68
      %p70 = scmp.ne.s32.totalorder %s62, %s65
      %p71 = scmp.eq.s32.totalorder %s12, 0
      %p72 = por %p70, %p71
      %p73 = scmp.ne.s32.totalorder %s62, %s65
      %p74 = scmp.eq.s32.totalorder %s17, 3
      %p75 = por %p73, %p74
      %p76 = scmp.ne.s32.totalorder %s65, %s66
      %p77 = scmp.eq.s32.totalorder %s17, 0
      %p78 = por %p76, %p77
      %p79 = scmp.ne.s32.totalorder %s65, %s66
      %p80 = scmp.eq.s32.totalorder %s18, 3
      %p81 = por %p79, %p80
      %p83 = scmp.ne.s32.totalorder %s66, %s82
      %p84 = scmp.eq.s32.totalorder %s18, 0
      %p85 = por %p83, %p84
      %s87 = sadd.s32 %s86, 1
      %p90 = scmp.eq.s32.totalorder %s12, 3
      %p91 = scmp.ne.s32.totalorder %s86, %s88
      %p92 = scmp.eq.s32.totalorder %s12, 0
      %p93 = por %p91, %p92
      %p94 = scmp.ne.s32.totalorder %s86, %s88
      %p95 = scmp.eq.s32.totalorder %s17, 3
      %p96 = por %p94, %p95
      %p97 = scmp.ne.s32.totalorder %s88, %s89
      %p98 = scmp.eq.s32.totalorder %s17, 0
      %p99 = por %p97, %p98
      %p100 = scmp.ne.s32.totalorder %s88, %s89
      %p101 = scmp.eq.s32.totalorder %s18, 3
      %p102 = por %p100, %p101
      %p104 = scmp.ne.s32.totalorder %s89, %s103
      %p105 = scmp.eq.s32.totalorder %s18, 0
      %p106 = por %p104, %p105
      %s107 = ssub.s32 %s19, %s31
      %p108 = scmp.eq.s32.totalorder %s107, 0
      %s110 = sadd.s32 %s109, 1
      %s111 = scalar_select %p108, %s109, %s110
      %p114 = pneg %p108
      %p115 = scmp.eq.s32.totalorder %s12, 3
      %p116 = por %p114, %p115
      %p117 = scmp.ne.s32.totalorder %s109, %s112
      %p118 = scmp.eq.s32.totalorder %s12, 0
      %p119 = por %p117, %p118
      %p120 = scmp.ne.s32.totalorder %s109, %s112
      %p121 = scmp.eq.s32.totalorder %s17, 3
      %p122 = por %p120, %p121
      %p123 = scmp.ne.s32.totalorder %s112, %s113
      %p124 = scmp.eq.s32.totalorder %s17, 0
      %p125 = por %p123, %p124
      %p126 = scmp.ne.s32.totalorder %s112, %s113
      %p127 = scmp.eq.s32.totalorder %s18, 3
      %p128 = por %p126, %p127
      %p130 = scmp.ne.s32.totalorder %s113, %s129
      %p131 = scmp.eq.s32.totalorder %s18, 0
      %p132 = por %p130, %p131
      %s133 = ssub.s32 %s19, %s31
      %p134 = scmp.eq.s32.totalorder %s133, 0
      %s136 = sadd.s32 %s135, 1
      %s137 = scalar_select %p134, %s135, %s136
      %p140 = pneg %p134
      %p141 = scmp.eq.s32.totalorder %s12, 3
      %p142 = por %p140, %p141
      %p143 = scmp.ne.s32.totalorder %s135, %s138
      %p144 = scmp.eq.s32.totalorder %s12, 0
      %p145 = por %p143, %p144
      %p146 = scmp.ne.s32.totalorder %s135, %s138
      %p147 = scmp.eq.s32.totalorder %s17, 3
      %p148 = por %p146, %p147
      %p149 = scmp.ne.s32.totalorder %s138, %s139
      %p150 = scmp.eq.s32.totalorder %s17, 0
      %p151 = por %p149, %p150
      %p152 = scmp.ne.s32.totalorder %s138, %s139
      %p153 = scmp.eq.s32.totalorder %s18, 3
      %p154 = por %p152, %p153
      %p156 = scmp.ne.s32.totalorder %s139, %s155
      %p157 = scmp.eq.s32.totalorder %s18, 0
      %p158 = por %p156, %p157
      %s160 = sadd.s32 %s159, 1
      %p163 = scmp.eq.s32.totalorder %s12, 3
      %p164 = scmp.ne.s32.totalorder %s159, %s161
      %p165 = scmp.eq.s32.totalorder %s12, 0
      %p166 = por %p164, %p165
      %p167 = scmp.ne.s32.totalorder %s159, %s161
      %p168 = scmp.eq.s32.totalorder %s17, 3
      %p169 = por %p167, %p168
      %p170 = scmp.ne.s32.totalorder %s161, %s162
      %p171 = scmp.eq.s32.totalorder %s17, 0
      %p172 = por %p170, %p171
      %p173 = scmp.ne.s32.totalorder %s161, %s162
      %p174 = scmp.eq.s32.totalorder %s18, 3
      %p175 = por %p173, %p174
      %p177 = scmp.ne.s32.totalorder %s162, %s176
      %p178 = scmp.eq.s32.totalorder %s18, 0
      %p179 = por %p177, %p178
      %s180 = ssub.s32 %s19, %s31
      %p181 = scmp.eq.s32.totalorder %s180, 0
      %s183 = sadd.s32 %s182, 1
      %s184 = scalar_select %p181, %s182, %s183
      %p187 = pneg %p181
      %p188 = scmp.eq.s32.totalorder %s12, 3
      %p189 = por %p187, %p188
      %p190 = scmp.ne.s32.totalorder %s182, %s185
      %p191 = scmp.eq.s32.totalorder %s12, 0
      %p192 = por %p190, %p191
      %p193 = scmp.ne.s32.totalorder %s182, %s185
      %p194 = scmp.eq.s32.totalorder %s17, 3
      %p195 = por %p193, %p194
      %p196 = scmp.ne.s32.totalorder %s185, %s186
      %p197 = scmp.eq.s32.totalorder %s17, 0
      %p198 = por %p196, %p197
      %p199 = scmp.ne.s32.totalorder %s185, %s186
      %p200 = scmp.eq.s32.totalorder %s18, 3
      %p201 = por %p199, %p200
      %p203 = scmp.ne.s32.totalorder %s186, %s202
      %p204 = scmp.eq.s32.totalorder %s18, 0
      %p205 = por %p203, %p204
      %p206 = scmp.le.s32.totalorder 1, %s12
      %p207 = scmp.lt.s32.totalorder %s12, 5
      %p208 = pnand %p206, %p207
      %p209 = pneg %p208
      // Predicated region
      $region9: #{_lambda_.5} parent=5 // pred_check
        _
      $region10: #{_lambda_.5} parent=5 // pred_check_branch
        %211 = sbr.rel (%p208) target = $region12
      $region11: #{_lambda_.5} parent=5 // pred_region
        %s212 = ssub.s32 %s12, 1
        // Predicated region
        $region13: #{_lambda_.5} parent=11 // pred_check
          %p213 = pneg %p99
        $region14: #{_lambda_.5} parent=11 // pred_check_branch
          %215 = sbr.rel (%p213) target = $region16
        $region15: #{_lambda_.5} parent=11 // pred_region
          _
        $region16: #{_lambda_.5} parent=11 // pred_fallthru
          _
        // Predicated region
        $region17: #{_lambda_.5} parent=11 // pred_check
          %p216 = pneg %p172
        $region18: #{_lambda_.5} parent=11 // pred_check_branch
          %218 = sbr.rel (%p216) target = $region20
        $region19: #{_lambda_.5} parent=11 // pred_region
          _
        $region20: #{_lambda_.5} parent=11 // pred_fallthru
          _
      $region12: #{_lambda_.5} parent=5 // pred_fallthru
        _
      %p219 = scmp.lt.s32.totalorder %s12, 4
      // Predicated region
      $region21: #{_lambda_.5} parent=5 // pred_check
        %p220 = pneg %p219
      $region22: #{_lambda_.5} parent=5 // pred_check_branch
        %222 = sbr.rel (%p220) target = $region24
      $region23: #{_lambda_.5} parent=5 // pred_region
        // Predicated region
        $region25: #{_lambda_.5} parent=23 // pred_check
          %p223 = pneg %p46
        $region26: #{_lambda_.5} parent=23 // pred_check_branch
          %225 = sbr.rel (%p223) target = $region28
        $region27: #{_lambda_.5} parent=23 // pred_region
          %s226 = sand.u32 %s36, 1
          %s227 = sand.u32 %s36, 1
          %s228 = smul.addr %s227, 32
          %s229 = scalar_lea.vmem [#allocation3], %s228
          %s230 = smul.u32 4, %s19
          %s231 = smul.addr %s230, 2
          %s232 = sadd.s32 %s20, %s231
          %s233 = smul.addr %s232, 8
          %s234 = scalar_lea.vmem %s0, %s233
          // Predicated region
          $region29: #{_lambda_.5} parent=27 // pred_check
            _
          $region30: #{_lambda_.5} parent=27 // pred_check_branch
            %236 = sbr.rel (0) target = $region32
          $region31: #{_lambda_.5} parent=27 // pred_region
            // Predicated region
            $region33: #{_lambda_.5} parent=31 // pred_check
              _
            $region34: #{_lambda_.5} parent=31 // pred_check_branch
              %238 = sbr.rel (0) target = $region36
            $region35: #{_lambda_.5} parent=31 // pred_region
              // Predicated region
              $region48: #{_lambda_.5} parent=35 // pred_check
                _
              $region49: #{_lambda_.5} parent=35 // pred_check_branch
                %260 = sbr.rel (0) target = $region51
              $region50: #{_lambda_.5} parent=35 // pred_region
                loop: start=0, step=1, limit=1
                $region52: #{_lambda_.5} parent=50 // loop_pre_header
                  _
                $region53: #{_lambda_.5} parent=50 // loop_header
                  %s262 = sphi 0, %s266
                  %p263 = scmp.ge.s32.totalorder %s262, 1
                  %s267 = sphi %s234, %s234
                  %s268 = sphi %s229, %s229
                $region54: #{_lambda_.5} parent=50 // loop_header_branch
                  %265 = sbr.rel (%p263) target = $region58
                $region55: #{_lambda_.5} parent=50 // loop_body
                  %v269 = vld [vmem:[%s267] sm:$0xff]
                  %270 = vst [vmem:[%s268] sm:$0xff] %v269
                  %v271 = vld [vmem:[%s267 + $0x10] sm:$0xff]
                  %272 = vst [vmem:[%s268 + $0x8] sm:$0xff] %v271
                  %v273 = vld [vmem:[%s267 + $0x20] sm:$0xff]
                  %274 = vst [vmem:[%s268 + $0x10] sm:$0xff] %v273
                  %v275 = vld [vmem:[%s267 + $0x30] sm:$0xff]
                  %276 = vst [vmem:[%s268 + $0x18] sm:$0xff] %v275
                $region56: #{_lambda_.5} parent=50 // loop_footer
                  %s266 = sadd.s32 1, %s262
                $region57: #{_lambda_.5} parent=50 // loop_footer_branch
                  %261 = sbr.rel target = $region53
                $region58: #{_lambda_.5} parent=50 // loop_exit
                  _
              $region51: #{_lambda_.5} parent=35 // pred_fallthru
                _
              // Predicated region
              $region59: #{_lambda_.5} parent=35 // pred_check
                _
              $region60: #{_lambda_.5} parent=35 // pred_check_branch
                %278 = sbr.rel target = $region62
              $region61: #{_lambda_.5} parent=35 // pred_region
                _
              $region62: #{_lambda_.5} parent=35 // pred_fallthru
                _
            $region36: #{_lambda_.5} parent=31 // pred_fallthru
              _
            // Predicated region
            $region37: #{_lambda_.5} parent=31 // pred_check
              _
            $region38: #{_lambda_.5} parent=31 // pred_check_branch
              %240 = sbr.rel target = $region40
            $region39: #{_lambda_.5} parent=31 // pred_region
              %s242 = ssub.s32 256, 1
              loop: start=0, step=1, limit=1
              $region41: #{_lambda_.5} parent=39 // loop_pre_header
                _
              $region42: #{_lambda_.5} parent=39 // loop_header
                %s244 = sphi 0, %s248
                %p245 = scmp.ge.s32.totalorder %s244, 1
                %s249 = sphi %s234, %s234
                %s250 = sphi %s229, %s229
              $region43: #{_lambda_.5} parent=39 // loop_header_branch
                %247 = sbr.rel (%p245) target = $region47
              $region44: #{_lambda_.5} parent=39 // loop_body
                %v251 = vld [vmem:[%s249] sm:%s242]
                %252 = vst [vmem:[%s250] sm:%s242] %v251
                %v253 = vld [vmem:[%s249 + $0x10] sm:%s242]
                %254 = vst [vmem:[%s250 + $0x8] sm:%s242] %v253
                %v255 = vld [vmem:[%s249 + $0x20] sm:%s242]
                %256 = vst [vmem:[%s250 + $0x10] sm:%s242] %v255
                %v257 = vld [vmem:[%s249 + $0x30] sm:%s242]
                %258 = vst [vmem:[%s250 + $0x18] sm:%s242] %v257
              $region45: #{_lambda_.5} parent=39 // loop_footer
                %s248 = sadd.s32 1, %s244
              $region46: #{_lambda_.5} parent=39 // loop_footer_branch
                %243 = sbr.rel target = $region42
              $region47: #{_lambda_.5} parent=39 // loop_exit
                _
            $region40: #{_lambda_.5} parent=31 // pred_fallthru
              _
          $region32: #{_lambda_.5} parent=27 // pred_fallthru
            _
          %279 = vnop
        $region28: #{_lambda_.5} parent=23 // pred_fallthru
          _
        // Predicated region
        $region63: #{_lambda_.5} parent=23 // pred_check
          %p280 = pneg %p72
        $region64: #{_lambda_.5} parent=23 // pred_check_branch
          %282 = sbr.rel (%p280) target = $region66
        $region65: #{_lambda_.5} parent=23 // pred_region
          %s283 = smul.u32 16, %s19
          %p284 = scmp.lt.s32.totalorder %s283, 31
          %s285 = scalar_select %p284, %s283, 31
          %s286 = smul.addr %s285, 8
          %s287 = scalar_lea.vmem %s1, %s286
          %s288 = smul.u32 16, %s19
        $region66: #{_lambda_.5} parent=23 // pred_fallthru
          _
        // Predicated region
        $region67: #{_lambda_.5} parent=23 // pred_check
          %p289 = pneg %p119
        $region68: #{_lambda_.5} parent=23 // pred_check_branch
          %291 = sbr.rel (%p289) target = $region70
        $region69: #{_lambda_.5} parent=23 // pred_region
          %s292 = smul.u32 16, %s19
          %p293 = scmp.lt.s32.totalorder %s292, 31
          %s294 = scalar_select %p293, %s292, 31
          %s295 = smul.addr %s294, 4
          %s296 = scalar_lea.vmem %s3, %s295
          %s297 = smul.u32 16, %s19
        $region70: #{_lambda_.5} parent=23 // pred_fallthru
          _
        // Predicated region
        $region71: #{_lambda_.5} parent=23 // pred_check
          %p298 = pneg %p145
        $region72: #{_lambda_.5} parent=23 // pred_check_branch
          %300 = sbr.rel (%p298) target = $region74
        $region73: #{_lambda_.5} parent=23 // pred_region
          %s301 = smul.u32 16, %s19
          %p302 = scmp.lt.s32.totalorder %s301, 31
          %s303 = scalar_select %p302, %s301, 31
          %s304 = smul.addr %s303, 8
          %s305 = scalar_lea.vmem %s4, %s304
          %s306 = smul.u32 16, %s19
        $region74: #{_lambda_.5} parent=23 // pred_fallthru
          _
      $region24: #{_lambda_.5} parent=5 // pred_fallthru
        _
      %p307 = scmp.le.s32.totalorder 1, %s12
      %p308 = scmp.lt.s32.totalorder %s12, 5
      %p309 = pnand %p307, %p308
      %p310 = pneg %p309
      // Predicated region
      $region75: #{_lambda_.5} parent=5 // pred_check
        _
      $region76: #{_lambda_.5} parent=5 // pred_check_branch
        %312 = sbr.rel (%p309) target = $region78
      $region77: #{_lambda_.5} parent=5 // pred_region
        %s313 = ssub.s32 %s12, 1
        %s314 = sand.u32 %s39, 1
        %s315 = sand.u32 %s39, 1
        %s316 = smul.addr %s315, 32
        %s317 = scalar_lea.vmem [#allocation3], %s316
        // Predicated region
        $region79: #{_lambda_.5} parent=77 // pred_check
          %p318 = pneg %p52
        $region80: #{_lambda_.5} parent=77 // pred_check_branch
          %320 = sbr.rel (%p318) target = $region82
        $region81: #{_lambda_.5} parent=77 // pred_region
          _
        $region82: #{_lambda_.5} parent=77 // pred_fallthru
          _
        %s321 = sand.u32 %s39, 1
        %s322 = sand.u32 %s39, 1
        %s323 = smul.addr %s322, 32
        %s324 = scalar_lea.vmem [#allocation3], %s323
        %p325 = pneg %p52
        %p326 = pneg %p49
        %s327 = smul.u32 16, %s21
        %p328 = scmp.lt.s32.totalorder %s327, 31
        %s329 = scalar_select %p328, %s327, 31
        %s330 = smul.addr %s329, 8
        %s331 = scalar_lea.vmem %s1, %s330
        %p332 = pneg %p78
        %p333 = pneg %p75
        %p334 = pneg %p99
        %p335 = pneg %p96
        %s336 = smul.u32 16, %s21
        %p337 = scmp.lt.s32.totalorder %s336, 31
        %s338 = scalar_select %p337, %s336, 31
        %s339 = smul.addr %s338, 4
        %s340 = scalar_lea.vmem %s3, %s339
        %p341 = pneg %p125
        %p342 = pneg %p122
        %s343 = smul.u32 16, %s21
        %p344 = scmp.lt.s32.totalorder %s343, 31
        %s345 = scalar_select %p344, %s343, 31
        %s346 = smul.addr %s345, 8
        %s347 = scalar_lea.vmem %s4, %s346
        %p348 = pneg %p151
        %p349 = pneg %p148
        %p350 = pneg %p172
        %p351 = pneg %p169
        %p352 = pneg %p198
        %p353 = pneg %p195
        %s354 = smul.u32 16, %s21
        %p355 = scmp.lt.s32.totalorder %s354, 31
        %s356 = scalar_select %p355, %s354, 31
        %s357 = smul.addr %s356, 8
        %s358 = scalar_lea.vmem %s6, %s357
        %s359 = smul.u32 4, %s21
        %s360 = smul.u32 16, %s21
        %p361 = scmp.lt.s32.totalorder %s360, 31
        %s362 = scalar_select %p361, %s360, 31
        %s363 = smul.addr %s362, 8
        %s364 = scalar_lea.vmem %s1, %s363
        %s365 = smul.u32 16, %s21
        %s366 = smul.u32 16, %s21
        %p367 = scmp.lt.s32.totalorder %s366, 31
        %s368 = scalar_select %p367, %s366, 31
        %s369 = smul.addr %s368, 4
        %s370 = scalar_lea.vmem %s3, %s369
        %s371 = smul.u32 16, %s21
        %s372 = smul.u32 16, %s21
        %p373 = scmp.lt.s32.totalorder %s372, 31
        %s374 = scalar_select %p373, %s372, 31
        %s375 = smul.addr %s374, 8
        %s376 = scalar_lea.vmem %s4, %s375
        %s377 = smul.u32 16, %s21
        %s378 = smul.u32 16, %s21
        %p379 = scmp.lt.s32.totalorder %s378, 31
        %s380 = scalar_select %p379, %s378, 31
        %s381 = smul.addr %s380, 8
        %s382 = scalar_lea.vmem %s6, %s381
        %s383 = smul.u32 16, %s21
        %p384 = scmp.eq.s32.totalorder %s22, 0
        // Predicated region
        $region83: #{_lambda_.5} parent=77 // pred_check
          %p385 = pneg %p384
        $region84: #{_lambda_.5} parent=77 // pred_check_branch
          %387 = sbr.rel (%p385) target = $region86
        $region85: #{_lambda_.5} parent=77 // pred_region
          %388 = vst [vmem:[#allocation2] sm:$0xff] 0.0
          %389 = vst [vmem:[#allocation2 + $0x8] sm:$0xff] 0.0
          %390 = vst [vmem:[#allocation2 + $0x10] sm:$0xff] 0.0
          %391 = vst [vmem:[#allocation2 + $0x18] sm:$0xff] 0.0
          %392 = vst [vmem:[#allocation2 + $0x20] sm:$0xff] 0.0
          %393 = vst [vmem:[#allocation2 + $0x28] sm:$0xff] 0.0
          %394 = vst [vmem:[#allocation2 + $0x30] sm:$0xff] 0.0
          %395 = vst [vmem:[#allocation2 + $0x38] sm:$0xff] 0.0
          %396 = vst [vmem:[#allocation2 + $0x40] sm:$0xff] 0.0
          %397 = vst [vmem:[#allocation2 + $0x48] sm:$0xff] 0.0
          %398 = vst [vmem:[#allocation2 + $0x50] sm:$0xff] 0.0
          %399 = vst [vmem:[#allocation2 + $0x58] sm:$0xff] 0.0
          %400 = vst [vmem:[#allocation2 + $0x60] sm:$0xff] 0.0
          %401 = vst [vmem:[#allocation2 + $0x68] sm:$0xff] 0.0
          %402 = vst [vmem:[#allocation2 + $0x70] sm:$0xff] 0.0
          %403 = vst [vmem:[#allocation2 + $0x78] sm:$0xff] 0.0
        $region86: #{_lambda_.5} parent=77 // pred_fallthru
          _
        %v404 = vld [vmem:[#allocation2] sm:$0xff]
        %v405 = vld [vmem:[#allocation2 + $0x8] sm:$0xff]
        %v406 = vld [vmem:[#allocation2 + $0x10] sm:$0xff]
        %v407 = vld [vmem:[#allocation2 + $0x18] sm:$0xff]
        %v408 = vld [vmem:[#allocation2 + $0x20] sm:$0xff]
        %v409 = vld [vmem:[#allocation2 + $0x28] sm:$0xff]
        %v410 = vld [vmem:[#allocation2 + $0x30] sm:$0xff]
        %v411 = vld [vmem:[#allocation2 + $0x38] sm:$0xff]
        %v412 = vld [vmem:[#allocation2 + $0x40] sm:$0xff]
        %v413 = vld [vmem:[#allocation2 + $0x48] sm:$0xff]
        %v414 = vld [vmem:[#allocation2 + $0x50] sm:$0xff]
        %v415 = vld [vmem:[#allocation2 + $0x58] sm:$0xff]
        %v416 = vld [vmem:[#allocation2 + $0x60] sm:$0xff]
        %v417 = vld [vmem:[#allocation2 + $0x68] sm:$0xff]
        %v418 = vld [vmem:[#allocation2 + $0x70] sm:$0xff]
        %v419 = vld [vmem:[#allocation2 + $0x78] sm:$0xff]
        %v420 = vld [vmem:[%s317] sm:$0xff]
        %v421 = vld [vmem:[%s317 + $0x8] sm:$0xff]
        %v422 = vld [vmem:[%s317 + $0x10] sm:$0xff]
        %v423 = vld [vmem:[%s317 + $0x18] sm:$0xff]
        %v424 = vunpack.c.0.s8 %v420
        %v425 = vunpack.c.1.s8 %v420
        %v426 = vunpack.c.2.s8 %v420
        %v427 = vunpack.c.3.s8 %v420
        %v428 = vunpack.c.0.s8 %v421
        %v429 = vunpack.c.1.s8 %v421
        %v430 = vunpack.c.2.s8 %v421
        %v431 = vunpack.c.3.s8 %v421
        %v432 = vunpack.c.0.s8 %v422
        %v433 = vunpack.c.1.s8 %v422
        %v434 = vunpack.c.2.s8 %v422
        %v435 = vunpack.c.3.s8 %v422
        %v436 = vunpack.c.0.s8 %v423
        %v437 = vunpack.c.1.s8 %v423
        %v438 = vunpack.c.2.s8 %v423
        %v439 = vunpack.c.3.s8 %v423
        %v440 = vcvt.s32.f32 %v424
        %v441 = vcvt.s32.f32 %v425
        %v442 = vcvt.s32.f32 %v426
        %v443 = vcvt.s32.f32 %v427
        %v444 = vcvt.s32.f32 %v428
        %v445 = vcvt.s32.f32 %v429
        %v446 = vcvt.s32.f32 %v430
        %v447 = vcvt.s32.f32 %v431
        %v448 = vcvt.s32.f32 %v432
        %v449 = vcvt.s32.f32 %v433
        %v450 = vcvt.s32.f32 %v434
        %v451 = vcvt.s32.f32 %v435
        %v452 = vcvt.s32.f32 %v436
        %v453 = vcvt.s32.f32 %v437
        %v454 = vcvt.s32.f32 %v438
        %v455 = vcvt.s32.f32 %v439
        %v456 = vpack.c.bf16 %v441, %v440
        %v457 = vpack.c.bf16 %v443, %v442
        %v458 = vpack.c.bf16 %v445, %v444
        %v459 = vpack.c.bf16 %v447, %v446
        %v460 = vpack.c.bf16 %v449, %v448
        %v461 = vpack.c.bf16 %v451, %v450
        %v462 = vpack.c.bf16 %v453, %v452
        %v463 = vpack.c.bf16 %v455, %v454
        %s464 = smul.u32 %s22, 128
        %s465 = sshra.s32 %s464, 3
        %s466 = sand.u32 %s464, 7
        %s467 = smul.addr %s465, 4
        %s468 = scalar_lea.vmem %s2, %s467
        %v469 = vld [vmem:[%s468] sm:$0xf]
        %v470 = vld [vmem:[%s468 + $0x4] sm:$0xf]
        %v471 = vld [vmem:[%s468 + $0x8] sm:$0xf]
        %v472 = vld [vmem:[%s468 + $0xc] sm:$0xf]
        %v473 = vld [vmem:[%s468 + $0x10] sm:$0xf]
        %v474 = vld [vmem:[%s468 + $0x14] sm:$0xf]
        %v475 = vld [vmem:[%s468 + $0x18] sm:$0xf]
        %v476 = vld [vmem:[%s468 + $0x1c] sm:$0xf]
        %v477 = vld [vmem:[%s468 + $0x20] sm:$0xf]
        %v478 = vld [vmem:[%s468 + $0x24] sm:$0xf]
        %v479 = vld [vmem:[%s468 + $0x28] sm:$0xf]
        %v480 = vld [vmem:[%s468 + $0x2c] sm:$0xf]
        %v481 = vld [vmem:[%s468 + $0x30] sm:$0xf]
        %v482 = vld [vmem:[%s468 + $0x34] sm:$0xf]
        %v483 = vld [vmem:[%s468 + $0x38] sm:$0xf]
        %v484 = vld [vmem:[%s468 + $0x3c] sm:$0xf]
        %v501 = vunpack.c.l.b16 %v469
        %v502 = vunpack.c.l.b16 %v470
        %v503 = vunpack.c.l.b16 %v471
        %v504 = vunpack.c.l.b16 %v472
        %v505 = vunpack.c.l.b16 %v473
        %v506 = vunpack.c.l.b16 %v474
        %v507 = vunpack.c.l.b16 %v475
        %v508 = vunpack.c.l.b16 %v476
        %v509 = vunpack.c.l.b16 %v477
        %v510 = vunpack.c.l.b16 %v478
        %v511 = vunpack.c.l.b16 %v479
        %v512 = vunpack.c.l.b16 %v480
        %v513 = vunpack.c.l.b16 %v481
        %v514 = vunpack.c.l.b16 %v482
        %v515 = vunpack.c.l.b16 %v483
        %v516 = vunpack.c.l.b16 %v484
        %v517 = vpack.c.b16 %v502, %v501
        %v518 = vpack.c.b16 %v504, %v503
        %v519 = vpack.c.b16 %v506, %v505
        %v520 = vpack.c.b16 %v508, %v507
        %v521 = vpack.c.b16 %v510, %v509
        %v522 = vpack.c.b16 %v512, %v511
        %v523 = vpack.c.b16 %v514, %v513
        %v524 = vpack.c.b16 %v516, %v515
        %533 = vmatpush.bf16.msra.mxu0 %v524
        %534 = vmatpush.bf16.msra.mxu0 %v523
        %535 = vmatpush.bf16.msra.mxu0 %v522
        %536 = vmatpush.bf16.msra.mxu0 %v521
        %537 = vmatpush.bf16.msra.mxu0 %v520
        %538 = vmatpush.bf16.msra.mxu0 %v519
        %539 = vmatpush.bf16.msra.mxu0 %v518
        %540 = vmatpush.bf16.msra.mxu0 %v517
        %541 = vmatmul.bf16.gmra.mxu0 %v456
        %v542 = vpop.f32.mrf.mxu0
        %v543 = vadd.f32 0.0, %v542
        %v544 = vpop.f32.mrf.mxu0
        %v545 = vadd.f32 0.0, %v544
        %546 = vmatmul.bf16.gmra.mxu0 %v457
        %v547 = vpop.f32.mrf.mxu0
        %v548 = vadd.f32 0.0, %v547
        %v549 = vpop.f32.mrf.mxu0
        %v550 = vadd.f32 0.0, %v549
        %551 = vmatmul.bf16.gmra.mxu0 %v458
        %v552 = vpop.f32.mrf.mxu0
        %v553 = vadd.f32 0.0, %v552
        %v554 = vpop.f32.mrf.mxu0
        %v555 = vadd.f32 0.0, %v554
        %556 = vmatmul.bf16.gmra.mxu0 %v459
        %v557 = vpop.f32.mrf.mxu0
        %v558 = vadd.f32 0.0, %v557
        %v559 = vpop.f32.mrf.mxu0
        %v560 = vadd.f32 0.0, %v559
        %561 = vmatmul.bf16.gmra.mxu0 %v460
        %v562 = vpop.f32.mrf.mxu0
        %v563 = vadd.f32 0.0, %v562
        %v564 = vpop.f32.mrf.mxu0
        %v565 = vadd.f32 0.0, %v564
        %566 = vmatmul.bf16.gmra.mxu0 %v461
        %v567 = vpop.f32.mrf.mxu0
        %v568 = vadd.f32 0.0, %v567
        %v569 = vpop.f32.mrf.mxu0
        %v570 = vadd.f32 0.0, %v569
        %571 = vmatmul.bf16.gmra.mxu0 %v462
        %v572 = vpop.f32.mrf.mxu0
        %v573 = vadd.f32 0.0, %v572
        %v574 = vpop.f32.mrf.mxu0
        %v575 = vadd.f32 0.0, %v574
        %576 = vmatmul.bf16.gmra.mxu0 %v463
        %v577 = vpop.f32.mrf.mxu0
        %v578 = vadd.f32 0.0, %v577
        %v579 = vpop.f32.mrf.mxu0
        %v580 = vadd.f32 0.0, %v579
        %581 = vdwg.mxu0
        %v582 = vadd.f32 %v404, %v543
        %v583 = vadd.f32 %v405, %v545
        %v584 = vadd.f32 %v406, %v548
        %v585 = vadd.f32 %v407, %v550
        %v586 = vadd.f32 %v408, %v553
        %v587 = vadd.f32 %v409, %v555
        %v588 = vadd.f32 %v410, %v558
        %v589 = vadd.f32 %v411, %v560
        %v590 = vadd.f32 %v412, %v563
        %v591 = vadd.f32 %v413, %v565
        %v592 = vadd.f32 %v414, %v568
        %v593 = vadd.f32 %v415, %v570
        %v594 = vadd.f32 %v416, %v573
        %v595 = vadd.f32 %v417, %v575
        %v596 = vadd.f32 %v418, %v578
        %v597 = vadd.f32 %v419, %v580
        %598 = vst [vmem:[#allocation2] sm:$0xff] %v582
        %599 = vst [vmem:[#allocation2 + $0x8] sm:$0xff] %v583
        %600 = vst [vmem:[#allocation2 + $0x10] sm:$0xff] %v584
        %601 = vst [vmem:[#allocation2 + $0x18] sm:$0xff] %v585
        %602 = vst [vmem:[#allocation2 + $0x20] sm:$0xff] %v586
        %603 = vst [vmem:[#allocation2 + $0x28] sm:$0xff] %v587
        %604 = vst [vmem:[#allocation2 + $0x30] sm:$0xff] %v588
        %605 = vst [vmem:[#allocation2 + $0x38] sm:$0xff] %v589
        %606 = vst [vmem:[#allocation2 + $0x40] sm:$0xff] %v590
        %607 = vst [vmem:[#allocation2 + $0x48] sm:$0xff] %v591
        %608 = vst [vmem:[#allocation2 + $0x50] sm:$0xff] %v592
        %609 = vst [vmem:[#allocation2 + $0x58] sm:$0xff] %v593
        %610 = vst [vmem:[#allocation2 + $0x60] sm:$0xff] %v594
        %611 = vst [vmem:[#allocation2 + $0x68] sm:$0xff] %v595
        %612 = vst [vmem:[#allocation2 + $0x70] sm:$0xff] %v596
        %613 = vst [vmem:[#allocation2 + $0x78] sm:$0xff] %v597
        %p614 = scmp.eq.s32.totalorder %s22, 1
        // Predicated region
        $region87: #{_lambda_.5} parent=77 // pred_check
          %p615 = pneg %p614
        $region88: #{_lambda_.5} parent=77 // pred_check_branch
          %617 = sbr.rel (%p615) target = $region90
        $region89: #{_lambda_.5} parent=77 // pred_region
          %v618 = vld [vmem:[#allocation2] sm:$0xff]
          %v619 = vld [vmem:[#allocation2 + $0x8] sm:$0xff]
          %v620 = vld [vmem:[#allocation2 + $0x10] sm:$0xff]
          %v621 = vld [vmem:[#allocation2 + $0x18] sm:$0xff]
          %v622 = vld [vmem:[#allocation2 + $0x20] sm:$0xff]
          %v623 = vld [vmem:[#allocation2 + $0x28] sm:$0xff]
          %v624 = vld [vmem:[#allocation2 + $0x30] sm:$0xff]
          %v625 = vld [vmem:[#allocation2 + $0x38] sm:$0xff]
          %v626 = vld [vmem:[#allocation2 + $0x40] sm:$0xff]
          %v627 = vld [vmem:[#allocation2 + $0x48] sm:$0xff]
          %v628 = vld [vmem:[#allocation2 + $0x50] sm:$0xff]
          %v629 = vld [vmem:[#allocation2 + $0x58] sm:$0xff]
          %v630 = vld [vmem:[#allocation2 + $0x60] sm:$0xff]
          %v631 = vld [vmem:[#allocation2 + $0x68] sm:$0xff]
          %v632 = vld [vmem:[#allocation2 + $0x70] sm:$0xff]
          %v633 = vld [vmem:[#allocation2 + $0x78] sm:$0xff]
          %v634 = vld [vmem:[%s364] sm:$0xff]
          %v635 = vld [vmem:[%s364 + $0x8] sm:$0xff]
          %v636 = vld [vmem:[%s364 + $0x10] sm:$0xff]
          %v637 = vld [vmem:[%s364 + $0x18] sm:$0xff]
          %v638 = vld [vmem:[%s364 + $0x20] sm:$0xff]
          %v639 = vld [vmem:[%s364 + $0x28] sm:$0xff]
          %v640 = vld [vmem:[%s364 + $0x30] sm:$0xff]
          %v641 = vld [vmem:[%s364 + $0x38] sm:$0xff]
          %v642 = vld [vmem:[%s364 + $0x40] sm:$0xff]
          %v643 = vld [vmem:[%s364 + $0x48] sm:$0xff]
          %v644 = vld [vmem:[%s364 + $0x50] sm:$0xff]
          %v645 = vld [vmem:[%s364 + $0x58] sm:$0xff]
          %v646 = vld [vmem:[%s364 + $0x60] sm:$0xff]
          %v647 = vld [vmem:[%s364 + $0x68] sm:$0xff]
          %v648 = vld [vmem:[%s364 + $0x70] sm:$0xff]
          %v649 = vld [vmem:[%s364 + $0x78] sm:$0xff]
          %651 = vset.pattern.permute.xlu0 0
          %652 = vperm.xlu0 %651, %v634
          %v653 = vpop.permute.xlu0 %652
          %656 = vset.pattern.permute.xlu0 0
          %657 = vperm.xlu0 %656, %v635
          %v658 = vpop.permute.xlu0 %657
          %661 = vset.pattern.permute.xlu0 0
          %662 = vperm.xlu0 %661, %v636
          %v663 = vpop.permute.xlu0 %662
          %666 = vset.pattern.permute.xlu0 0
          %667 = vperm.xlu0 %666, %v637
          %v668 = vpop.permute.xlu0 %667
          %671 = vset.pattern.permute.xlu0 0
          %672 = vperm.xlu0 %671, %v638
          %v673 = vpop.permute.xlu0 %672
          %676 = vset.pattern.permute.xlu0 0
          %677 = vperm.xlu0 %676, %v639
          %v678 = vpop.permute.xlu0 %677
          %681 = vset.pattern.permute.xlu0 0
          %682 = vperm.xlu0 %681, %v640
          %v683 = vpop.permute.xlu0 %682
          %686 = vset.pattern.permute.xlu0 0
          %687 = vperm.xlu0 %686, %v641
          %v688 = vpop.permute.xlu0 %687
          %691 = vset.pattern.permute.xlu0 0
          %692 = vperm.xlu0 %691, %v642
          %v693 = vpop.permute.xlu0 %692
          %696 = vset.pattern.permute.xlu0 0
          %697 = vperm.xlu0 %696, %v643
          %v698 = vpop.permute.xlu0 %697
          %701 = vset.pattern.permute.xlu0 0
          %702 = vperm.xlu0 %701, %v644
          %v703 = vpop.permute.xlu0 %702
          %706 = vset.pattern.permute.xlu0 0
          %707 = vperm.xlu0 %706, %v645
          %v708 = vpop.permute.xlu0 %707
          %711 = vset.pattern.permute.xlu0 0
          %712 = vperm.xlu0 %711, %v646
          %v713 = vpop.permute.xlu0 %712
          %716 = vset.pattern.permute.xlu0 0
          %717 = vperm.xlu0 %716, %v647
          %v718 = vpop.permute.xlu0 %717
          %721 = vset.pattern.permute.xlu0 0
          %722 = vperm.xlu0 %721, %v648
          %v723 = vpop.permute.xlu0 %722
          %726 = vset.pattern.permute.xlu0 0
          %727 = vperm.xlu0 %726, %v649
          %v728 = vpop.permute.xlu0 %727
          %v730 = vmul.f32 %v618, %v653
          %v731 = vmul.f32 %v619, %v658
          %v732 = vmul.f32 %v620, %v663
          %v733 = vmul.f32 %v621, %v668
          %v734 = vmul.f32 %v622, %v673
          %v735 = vmul.f32 %v623, %v678
          %v736 = vmul.f32 %v624, %v683
          %v737 = vmul.f32 %v625, %v688
          %v738 = vmul.f32 %v626, %v693
          %v739 = vmul.f32 %v627, %v698
          %v740 = vmul.f32 %v628, %v703
          %v741 = vmul.f32 %v629, %v708
          %v742 = vmul.f32 %v630, %v713
          %v743 = vmul.f32 %v631, %v718
          %v744 = vmul.f32 %v632, %v723
          %v745 = vmul.f32 %v633, %v728
          %v746 = vld [vmem:[%s5] sm:$0x1]
          %v748 = vperm.slane %v746, 0
          %v750 = vadd.f32 %v730, %v748
          %v751 = vadd.f32 %v731, %v748
          %v752 = vadd.f32 %v732, %v748
          %v753 = vadd.f32 %v733, %v748
          %v754 = vadd.f32 %v734, %v748
          %v755 = vadd.f32 %v735, %v748
          %v756 = vadd.f32 %v736, %v748
          %v757 = vadd.f32 %v737, %v748
          %v758 = vadd.f32 %v738, %v748
          %v759 = vadd.f32 %v739, %v748
          %v760 = vadd.f32 %v740, %v748
          %v761 = vadd.f32 %v741, %v748
          %v762 = vadd.f32 %v742, %v748
          %v763 = vadd.f32 %v743, %v748
          %v764 = vadd.f32 %v744, %v748
          %v765 = vadd.f32 %v745, %v748
          %v766 = vmax.f32 %v750, 0.0
          %v767 = vmax.f32 %v751, 0.0
          %v768 = vmax.f32 %v752, 0.0
          %v769 = vmax.f32 %v753, 0.0
          %v770 = vmax.f32 %v754, 0.0
          %v771 = vmax.f32 %v755, 0.0
          %v772 = vmax.f32 %v756, 0.0
          %v773 = vmax.f32 %v757, 0.0
          %v774 = vmax.f32 %v758, 0.0
          %v775 = vmax.f32 %v759, 0.0
          %v776 = vmax.f32 %v760, 0.0
          %v777 = vmax.f32 %v761, 0.0
          %v778 = vmax.f32 %v762, 0.0
          %v779 = vmax.f32 %v763, 0.0
          %v780 = vmax.f32 %v764, 0.0
          %v781 = vmax.f32 %v765, 0.0
          %v782 = vld [vmem:[%s370] sm:$0xf]
          %v783 = vld [vmem:[%s370 + $0x4] sm:$0xf]
          %v784 = vld [vmem:[%s370 + $0x8] sm:$0xf]
          %v785 = vld [vmem:[%s370 + $0xc] sm:$0xf]
          %v786 = vld [vmem:[%s370 + $0x10] sm:$0xf]
          %v787 = vld [vmem:[%s370 + $0x14] sm:$0xf]
          %v788 = vld [vmem:[%s370 + $0x18] sm:$0xf]
          %v789 = vld [vmem:[%s370 + $0x1c] sm:$0xf]
          %v790 = vld [vmem:[%s370 + $0x20] sm:$0xf]
          %v791 = vld [vmem:[%s370 + $0x24] sm:$0xf]
          %v792 = vld [vmem:[%s370 + $0x28] sm:$0xf]
          %v793 = vld [vmem:[%s370 + $0x2c] sm:$0xf]
          %v794 = vld [vmem:[%s370 + $0x30] sm:$0xf]
          %v795 = vld [vmem:[%s370 + $0x34] sm:$0xf]
          %v796 = vld [vmem:[%s370 + $0x38] sm:$0xf]
          %v797 = vld [vmem:[%s370 + $0x3c] sm:$0xf]
          %v798 = vunpack.c.l.bf16 %v782
          %v799 = vunpack.c.l.bf16 %v783
          %v800 = vunpack.c.l.bf16 %v784
          %v801 = vunpack.c.l.bf16 %v785
          %v802 = vunpack.c.l.bf16 %v786
          %v803 = vunpack.c.l.bf16 %v787
          %v804 = vunpack.c.l.bf16 %v788
          %v805 = vunpack.c.l.bf16 %v789
          %v806 = vunpack.c.l.bf16 %v790
          %v807 = vunpack.c.l.bf16 %v791
          %v808 = vunpack.c.l.bf16 %v792
          %v809 = vunpack.c.l.bf16 %v793
          %v810 = vunpack.c.l.bf16 %v794
          %v811 = vunpack.c.l.bf16 %v795
          %v812 = vunpack.c.l.bf16 %v796
          %v813 = vunpack.c.l.bf16 %v797
          %v814 = vxor.u32 %v798, 2147483648
          %v815 = vxor.u32 %v799, 2147483648
          %v816 = vxor.u32 %v800, 2147483648
          %v817 = vxor.u32 %v801, 2147483648
          %v818 = vxor.u32 %v802, 2147483648
          %v819 = vxor.u32 %v803, 2147483648
          %v820 = vxor.u32 %v804, 2147483648
          %v821 = vxor.u32 %v805, 2147483648
          %v822 = vxor.u32 %v806, 2147483648
          %v823 = vxor.u32 %v807, 2147483648
          %v824 = vxor.u32 %v808, 2147483648
          %v825 = vxor.u32 %v809, 2147483648
          %v826 = vxor.u32 %v810, 2147483648
          %v827 = vxor.u32 %v811, 2147483648
          %v828 = vxor.u32 %v812, 2147483648
          %v829 = vxor.u32 %v813, 2147483648
          %v830 = vmul.f32 %v814, 1.442695
          %v831 = vpow.pop %v830
          %v832 = vmul.f32 %v815, 1.442695
          %v833 = vpow.pop %v832
          %v834 = vmul.f32 %v816, 1.442695
          %v835 = vpow.pop %v834
          %v836 = vmul.f32 %v817, 1.442695
          %v837 = vpow.pop %v836
          %v838 = vmul.f32 %v818, 1.442695
          %v839 = vpow.pop %v838
          %v840 = vmul.f32 %v819, 1.442695
          %v841 = vpow.pop %v840
          %v842 = vmul.f32 %v820, 1.442695
          %v843 = vpow.pop %v842
          %v844 = vmul.f32 %v821, 1.442695
          %v845 = vpow.pop %v844
          %v846 = vmul.f32 %v822, 1.442695
          %v847 = vpow.pop %v846
          %v848 = vmul.f32 %v823, 1.442695
          %v849 = vpow.pop %v848
          %v850 = vmul.f32 %v824, 1.442695
          %v851 = vpow.pop %v850
          %v852 = vmul.f32 %v825, 1.442695
          %v853 = vpow.pop %v852
          %v854 = vmul.f32 %v826, 1.442695
          %v855 = vpow.pop %v854
          %v856 = vmul.f32 %v827, 1.442695
          %v857 = vpow.pop %v856
          %v858 = vmul.f32 %v828, 1.442695
          %v859 = vpow.pop %v858
          %v860 = vmul.f32 %v829, 1.442695
          %v861 = vpow.pop %v860
          %v862 = vadd.f32 %v831, 1.0
          %v863 = vadd.f32 %v833, 1.0
          %v864 = vadd.f32 %v835, 1.0
          %v865 = vadd.f32 %v837, 1.0
          %v866 = vadd.f32 %v839, 1.0
          %v867 = vadd.f32 %v841, 1.0
          %v868 = vadd.f32 %v843, 1.0
          %v869 = vadd.f32 %v845, 1.0
          %v870 = vadd.f32 %v847, 1.0
          %v871 = vadd.f32 %v849, 1.0
          %v872 = vadd.f32 %v851, 1.0
          %v873 = vadd.f32 %v853, 1.0
          %v874 = vadd.f32 %v855, 1.0
          %v875 = vadd.f32 %v857, 1.0
          %v876 = vadd.f32 %v859, 1.0
          %v877 = vadd.f32 %v861, 1.0
          %v878 = vrcp.pop %v862
          %v879 = vmul.f32 %v862, %v878
          %v880 = vsub.f32 1.0, %v879
          %v881 = vmul.f32 %v878, %v880
          %v882 = vadd.f32 %v878, %v881
          %vm883 = vweird.f32 %v862
          %vm884 = vweird.f32 %v878
          %vm885 = vmor %vm883, %vm884
          %v886 = vsel %vm885, %v878, %v882
          %v887 = vand.u32 2147483647, %v862
          %vm888 = vcmp.eq.f32.partialorder %v887, 8.507059e+37
          %v889 = vand.u32 %v862, 2147483648
          %v890 = vor.u32 1.1754944e-38, %v889
          %v891 = vsel %vm888, %v890, %v886
          %v892 = vmul.f32 1.0, %v891
          %v893 = vrcp.pop %v863
          %v894 = vmul.f32 %v863, %v893
          %v895 = vsub.f32 1.0, %v894
          %v896 = vmul.f32 %v893, %v895
          %v897 = vadd.f32 %v893, %v896
          %vm898 = vweird.f32 %v863
          %vm899 = vweird.f32 %v893
          %vm900 = vmor %vm898, %vm899
          %v901 = vsel %vm900, %v893, %v897
          %v902 = vand.u32 2147483647, %v863
          %vm903 = vcmp.eq.f32.partialorder %v902, 8.507059e+37
          %v904 = vand.u32 %v863, 2147483648
          %v905 = vor.u32 1.1754944e-38, %v904
          %v906 = vsel %vm903, %v905, %v901
          %v907 = vmul.f32 1.0, %v906
          %v908 = vrcp.pop %v864
          %v909 = vmul.f32 %v864, %v908
          %v910 = vsub.f32 1.0, %v909
          %v911 = vmul.f32 %v908, %v910
          %v912 = vadd.f32 %v908, %v911
          %vm913 = vweird.f32 %v864
          %vm914 = vweird.f32 %v908
          %vm915 = vmor %vm913, %vm914
          %v916 = vsel %vm915, %v908, %v912
          %v917 = vand.u32 2147483647, %v864
          %vm918 = vcmp.eq.f32.partialorder %v917, 8.507059e+37
          %v919 = vand.u32 %v864, 2147483648
          %v920 = vor.u32 1.1754944e-38, %v919
          %v921 = vsel %vm918, %v920, %v916
          %v922 = vmul.f32 1.0, %v921
          %v923 = vrcp.pop %v865
          %v924 = vmul.f32 %v865, %v923
          %v925 = vsub.f32 1.0, %v924
          %v926 = vmul.f32 %v923, %v925
          %v927 = vadd.f32 %v923, %v926
          %vm928 = vweird.f32 %v865
          %vm929 = vweird.f32 %v923
          %vm930 = vmor %vm928, %vm929
          %v931 = vsel %vm930, %v923, %v927
          %v932 = vand.u32 2147483647, %v865
          %vm933 = vcmp.eq.f32.partialorder %v932, 8.507059e+37
          %v934 = vand.u32 %v865, 2147483648
          %v935 = vor.u32 1.1754944e-38, %v934
          %v936 = vsel %vm933, %v935, %v931
          %v937 = vmul.f32 1.0, %v936
          %v938 = vrcp.pop %v866
          %v939 = vmul.f32 %v866, %v938
          %v940 = vsub.f32 1.0, %v939
          %v941 = vmul.f32 %v938, %v940
          %v942 = vadd.f32 %v938, %v941
          %vm943 = vweird.f32 %v866
          %vm944 = vweird.f32 %v938
          %vm945 = vmor %vm943, %vm944
          %v946 = vsel %vm945, %v938, %v942
          %v947 = vand.u32 2147483647, %v866
          %vm948 = vcmp.eq.f32.partialorder %v947, 8.507059e+37
          %v949 = vand.u32 %v866, 2147483648
          %v950 = vor.u32 1.1754944e-38, %v949
          %v951 = vsel %vm948, %v950, %v946
          %v952 = vmul.f32 1.0, %v951
          %v953 = vrcp.pop %v867
          %v954 = vmul.f32 %v867, %v953
          %v955 = vsub.f32 1.0, %v954
          %v956 = vmul.f32 %v953, %v955
          %v957 = vadd.f32 %v953, %v956
          %vm958 = vweird.f32 %v867
          %vm959 = vweird.f32 %v953
          %vm960 = vmor %vm958, %vm959
          %v961 = vsel %vm960, %v953, %v957
          %v962 = vand.u32 2147483647, %v867
          %vm963 = vcmp.eq.f32.partialorder %v962, 8.507059e+37
          %v964 = vand.u32 %v867, 2147483648
          %v965 = vor.u32 1.1754944e-38, %v964
          %v966 = vsel %vm963, %v965, %v961
          %v967 = vmul.f32 1.0, %v966
          %v968 = vrcp.pop %v868
          %v969 = vmul.f32 %v868, %v968
          %v970 = vsub.f32 1.0, %v969
          %v971 = vmul.f32 %v968, %v970
          %v972 = vadd.f32 %v968, %v971
          %vm973 = vweird.f32 %v868
          %vm974 = vweird.f32 %v968
          %vm975 = vmor %vm973, %vm974
          %v976 = vsel %vm975, %v968, %v972
          %v977 = vand.u32 2147483647, %v868
          %vm978 = vcmp.eq.f32.partialorder %v977, 8.507059e+37
          %v979 = vand.u32 %v868, 2147483648
          %v980 = vor.u32 1.1754944e-38, %v979
          %v981 = vsel %vm978, %v980, %v976
          %v982 = vmul.f32 1.0, %v981
          %v983 = vrcp.pop %v869
          %v984 = vmul.f32 %v869, %v983
          %v985 = vsub.f32 1.0, %v984
          %v986 = vmul.f32 %v983, %v985
          %v987 = vadd.f32 %v983, %v986
          %vm988 = vweird.f32 %v869
          %vm989 = vweird.f32 %v983
          %vm990 = vmor %vm988, %vm989
          %v991 = vsel %vm990, %v983, %v987
          %v992 = vand.u32 2147483647, %v869
          %vm993 = vcmp.eq.f32.partialorder %v992, 8.507059e+37
          %v994 = vand.u32 %v869, 2147483648
          %v995 = vor.u32 1.1754944e-38, %v994
          %v996 = vsel %vm993, %v995, %v991
          %v997 = vmul.f32 1.0, %v996
          %v998 = vrcp.pop %v870
          %v999 = vmul.f32 %v870, %v998
          %v1000 = vsub.f32 1.0, %v999
          %v1001 = vmul.f32 %v998, %v1000
          %v1002 = vadd.f32 %v998, %v1001
          %vm1003 = vweird.f32 %v870
          %vm1004 = vweird.f32 %v998
          %vm1005 = vmor %vm1003, %vm1004
          %v1006 = vsel %vm1005, %v998, %v1002
          %v1007 = vand.u32 2147483647, %v870
          %vm1008 = vcmp.eq.f32.partialorder %v1007, 8.507059e+37
          %v1009 = vand.u32 %v870, 2147483648
          %v1010 = vor.u32 1.1754944e-38, %v1009
          %v1011 = vsel %vm1008, %v1010, %v1006
          %v1012 = vmul.f32 1.0, %v1011
          %v1013 = vrcp.pop %v871
          %v1014 = vmul.f32 %v871, %v1013
          %v1015 = vsub.f32 1.0, %v1014
          %v1016 = vmul.f32 %v1013, %v1015
          %v1017 = vadd.f32 %v1013, %v1016
          %vm1018 = vweird.f32 %v871
          %vm1019 = vweird.f32 %v1013
          %vm1020 = vmor %vm1018, %vm1019
          %v1021 = vsel %vm1020, %v1013, %v1017
          %v1022 = vand.u32 2147483647, %v871
          %vm1023 = vcmp.eq.f32.partialorder %v1022, 8.507059e+37
          %v1024 = vand.u32 %v871, 2147483648
          %v1025 = vor.u32 1.1754944e-38, %v1024
          %v1026 = vsel %vm1023, %v1025, %v1021
          %v1027 = vmul.f32 1.0, %v1026
          %v1028 = vrcp.pop %v872
          %v1029 = vmul.f32 %v872, %v1028
          %v1030 = vsub.f32 1.0, %v1029
          %v1031 = vmul.f32 %v1028, %v1030
          %v1032 = vadd.f32 %v1028, %v1031
          %vm1033 = vweird.f32 %v872
          %vm1034 = vweird.f32 %v1028
          %vm1035 = vmor %vm1033, %vm1034
          %v1036 = vsel %vm1035, %v1028, %v1032
          %v1037 = vand.u32 2147483647, %v872
          %vm1038 = vcmp.eq.f32.partialorder %v1037, 8.507059e+37
          %v1039 = vand.u32 %v872, 2147483648
          %v1040 = vor.u32 1.1754944e-38, %v1039
          %v1041 = vsel %vm1038, %v1040, %v1036
          %v1042 = vmul.f32 1.0, %v1041
          %v1043 = vrcp.pop %v873
          %v1044 = vmul.f32 %v873, %v1043
          %v1045 = vsub.f32 1.0, %v1044
          %v1046 = vmul.f32 %v1043, %v1045
          %v1047 = vadd.f32 %v1043, %v1046
          %vm1048 = vweird.f32 %v873
          %vm1049 = vweird.f32 %v1043
          %vm1050 = vmor %vm1048, %vm1049
          %v1051 = vsel %vm1050, %v1043, %v1047
          %v1052 = vand.u32 2147483647, %v873
          %vm1053 = vcmp.eq.f32.partialorder %v1052, 8.507059e+37
          %v1054 = vand.u32 %v873, 2147483648
          %v1055 = vor.u32 1.1754944e-38, %v1054
          %v1056 = vsel %vm1053, %v1055, %v1051
          %v1057 = vmul.f32 1.0, %v1056
          %v1058 = vrcp.pop %v874
          %v1059 = vmul.f32 %v874, %v1058
          %v1060 = vsub.f32 1.0, %v1059
          %v1061 = vmul.f32 %v1058, %v1060
          %v1062 = vadd.f32 %v1058, %v1061
          %vm1063 = vweird.f32 %v874
          %vm1064 = vweird.f32 %v1058
          %vm1065 = vmor %vm1063, %vm1064
          %v1066 = vsel %vm1065, %v1058, %v1062
          %v1067 = vand.u32 2147483647, %v874
          %vm1068 = vcmp.eq.f32.partialorder %v1067, 8.507059e+37
          %v1069 = vand.u32 %v874, 2147483648
          %v1070 = vor.u32 1.1754944e-38, %v1069
          %v1071 = vsel %vm1068, %v1070, %v1066
          %v1072 = vmul.f32 1.0, %v1071
          %v1073 = vrcp.pop %v875
          %v1074 = vmul.f32 %v875, %v1073
          %v1075 = vsub.f32 1.0, %v1074
          %v1076 = vmul.f32 %v1073, %v1075
          %v1077 = vadd.f32 %v1073, %v1076
          %vm1078 = vweird.f32 %v875
          %vm1079 = vweird.f32 %v1073
          %vm1080 = vmor %vm1078, %vm1079
          %v1081 = vsel %vm1080, %v1073, %v1077
          %v1082 = vand.u32 2147483647, %v875
          %vm1083 = vcmp.eq.f32.partialorder %v1082, 8.507059e+37
          %v1084 = vand.u32 %v875, 2147483648
          %v1085 = vor.u32 1.1754944e-38, %v1084
          %v1086 = vsel %vm1083, %v1085, %v1081
          %v1087 = vmul.f32 1.0, %v1086
          %v1088 = vrcp.pop %v876
          %v1089 = vmul.f32 %v876, %v1088
          %v1090 = vsub.f32 1.0, %v1089
          %v1091 = vmul.f32 %v1088, %v1090
          %v1092 = vadd.f32 %v1088, %v1091
          %vm1093 = vweird.f32 %v876
          %vm1094 = vweird.f32 %v1088
          %vm1095 = vmor %vm1093, %vm1094
          %v1096 = vsel %vm1095, %v1088, %v1092
          %v1097 = vand.u32 2147483647, %v876
          %vm1098 = vcmp.eq.f32.partialorder %v1097, 8.507059e+37
          %v1099 = vand.u32 %v876, 2147483648
          %v1100 = vor.u32 1.1754944e-38, %v1099
          %v1101 = vsel %vm1098, %v1100, %v1096
          %v1102 = vmul.f32 1.0, %v1101
          %v1103 = vrcp.pop %v877
          %v1104 = vmul.f32 %v877, %v1103
          %v1105 = vsub.f32 1.0, %v1104
          %v1106 = vmul.f32 %v1103, %v1105
          %v1107 = vadd.f32 %v1103, %v1106
          %vm1108 = vweird.f32 %v877
          %vm1109 = vweird.f32 %v1103
          %vm1110 = vmor %vm1108, %vm1109
          %v1111 = vsel %vm1110, %v1103, %v1107
          %v1112 = vand.u32 2147483647, %v877
          %vm1113 = vcmp.eq.f32.partialorder %v1112, 8.507059e+37
          %v1114 = vand.u32 %v877, 2147483648
          %v1115 = vor.u32 1.1754944e-38, %v1114
          %v1116 = vsel %vm1113, %v1115, %v1111
          %v1117 = vmul.f32 1.0, %v1116
          %v1118 = vmul.f32 %v892, %v766
          %v1119 = vmul.f32 %v907, %v767
          %v1120 = vmul.f32 %v922, %v768
          %v1121 = vmul.f32 %v937, %v769
          %v1122 = vmul.f32 %v952, %v770
          %v1123 = vmul.f32 %v967, %v771
          %v1124 = vmul.f32 %v982, %v772
          %v1125 = vmul.f32 %v997, %v773
          %v1126 = vmul.f32 %v1012, %v774
          %v1127 = vmul.f32 %v1027, %v775
          %v1128 = vmul.f32 %v1042, %v776
          %v1129 = vmul.f32 %v1057, %v777
          %v1130 = vmul.f32 %v1072, %v778
          %v1131 = vmul.f32 %v1087, %v779
          %v1132 = vmul.f32 %v1102, %v780
          %v1133 = vmul.f32 %v1117, %v781
          %v1134 = vsub.f32 1.0, %v892
          %v1135 = vsub.f32 1.0, %v907
          %v1136 = vsub.f32 1.0, %v922
          %v1137 = vsub.f32 1.0, %v937
          %v1138 = vsub.f32 1.0, %v952
          %v1139 = vsub.f32 1.0, %v967
          %v1140 = vsub.f32 1.0, %v982
          %v1141 = vsub.f32 1.0, %v997
          %v1142 = vsub.f32 1.0, %v1012
          %v1143 = vsub.f32 1.0, %v1027
          %v1144 = vsub.f32 1.0, %v1042
          %v1145 = vsub.f32 1.0, %v1057
          %v1146 = vsub.f32 1.0, %v1072
          %v1147 = vsub.f32 1.0, %v1087
          %v1148 = vsub.f32 1.0, %v1102
          %v1149 = vsub.f32 1.0, %v1117
          %v1150 = vld [vmem:[%s376] sm:$0xff]
          %v1151 = vld [vmem:[%s376 + $0x8] sm:$0xff]
          %v1152 = vld [vmem:[%s376 + $0x10] sm:$0xff]
          %v1153 = vld [vmem:[%s376 + $0x18] sm:$0xff]
          %v1154 = vld [vmem:[%s376 + $0x20] sm:$0xff]
          %v1155 = vld [vmem:[%s376 + $0x28] sm:$0xff]
          %v1156 = vld [vmem:[%s376 + $0x30] sm:$0xff]
          %v1157 = vld [vmem:[%s376 + $0x38] sm:$0xff]
          %v1158 = vld [vmem:[%s376 + $0x40] sm:$0xff]
          %v1159 = vld [vmem:[%s376 + $0x48] sm:$0xff]
          %v1160 = vld [vmem:[%s376 + $0x50] sm:$0xff]
          %v1161 = vld [vmem:[%s376 + $0x58] sm:$0xff]
          %v1162 = vld [vmem:[%s376 + $0x60] sm:$0xff]
          %v1163 = vld [vmem:[%s376 + $0x68] sm:$0xff]
          %v1164 = vld [vmem:[%s376 + $0x70] sm:$0xff]
          %v1165 = vld [vmem:[%s376 + $0x78] sm:$0xff]
          %v1166 = vmul.f32 %v1134, %v1150
          %v1167 = vmul.f32 %v1135, %v1151
          %v1168 = vmul.f32 %v1136, %v1152
          %v1169 = vmul.f32 %v1137, %v1153
          %v1170 = vmul.f32 %v1138, %v1154
          %v1171 = vmul.f32 %v1139, %v1155
          %v1172 = vmul.f32 %v1140, %v1156
          %v1173 = vmul.f32 %v1141, %v1157
          %v1174 = vmul.f32 %v1142, %v1158
          %v1175 = vmul.f32 %v1143, %v1159
          %v1176 = vmul.f32 %v1144, %v1160
          %v1177 = vmul.f32 %v1145, %v1161
          %v1178 = vmul.f32 %v1146, %v1162
          %v1179 = vmul.f32 %v1147, %v1163
          %v1180 = vmul.f32 %v1148, %v1164
          %v1181 = vmul.f32 %v1149, %v1165
          %v1182 = vadd.f32 %v1118, %v1166
          %v1183 = vadd.f32 %v1119, %v1167
          %v1184 = vadd.f32 %v1120, %v1168
          %v1185 = vadd.f32 %v1121, %v1169
          %v1186 = vadd.f32 %v1122, %v1170
          %v1187 = vadd.f32 %v1123, %v1171
          %v1188 = vadd.f32 %v1124, %v1172
          %v1189 = vadd.f32 %v1125, %v1173
          %v1190 = vadd.f32 %v1126, %v1174
          %v1191 = vadd.f32 %v1127, %v1175
          %v1192 = vadd.f32 %v1128, %v1176
          %v1193 = vadd.f32 %v1129, %v1177
          %v1194 = vadd.f32 %v1130, %v1178
          %v1195 = vadd.f32 %v1131, %v1179
          %v1196 = vadd.f32 %v1132, %v1180
          %v1197 = vadd.f32 %v1133, %v1181
          %1198 = vst [vmem:[%s382] sm:$0xff] %v1182
          %1199 = vst [vmem:[%s382 + $0x8] sm:$0xff] %v1183
          %1200 = vst [vmem:[%s382 + $0x10] sm:$0xff] %v1184
          %1201 = vst [vmem:[%s382 + $0x18] sm:$0xff] %v1185
          %1202 = vst [vmem:[%s382 + $0x20] sm:$0xff] %v1186
          %1203 = vst [vmem:[%s382 + $0x28] sm:$0xff] %v1187
          %1204 = vst [vmem:[%s382 + $0x30] sm:$0xff] %v1188
          %1205 = vst [vmem:[%s382 + $0x38] sm:$0xff] %v1189
          %1206 = vst [vmem:[%s382 + $0x40] sm:$0xff] %v1190
          %1207 = vst [vmem:[%s382 + $0x48] sm:$0xff] %v1191
          %1208 = vst [vmem:[%s382 + $0x50] sm:$0xff] %v1192
          %1209 = vst [vmem:[%s382 + $0x58] sm:$0xff] %v1193
          %1210 = vst [vmem:[%s382 + $0x60] sm:$0xff] %v1194
          %1211 = vst [vmem:[%s382 + $0x68] sm:$0xff] %v1195
          %1212 = vst [vmem:[%s382 + $0x70] sm:$0xff] %v1196
          %1213 = vst [vmem:[%s382 + $0x78] sm:$0xff] %v1197
        $region90: #{_lambda_.5} parent=77 // pred_fallthru
          _
        %s1214 = smul.u32 16, %s21
        %p1215 = scmp.lt.s32.totalorder %s1214, 31
        %s1216 = scalar_select %p1215, %s1214, 31
        %s1217 = smul.addr %s1216, 8
        %s1218 = scalar_lea.vmem %s6, %s1217
        // Predicated region
        $region91: #{_lambda_.5} parent=77 // pred_check
          %p1219 = pneg %p195
        $region92: #{_lambda_.5} parent=77 // pred_check_branch
          %1221 = sbr.rel (%p1219) target = $region94
        $region93: #{_lambda_.5} parent=77 // pred_region
          %s1222 = smul.u32 16, %s21
        $region94: #{_lambda_.5} parent=77 // pred_fallthru
          _
      $region78: #{_lambda_.5} parent=5 // pred_fallthru
        _
      %p1223 = scmp.le.s32.totalorder 2, %s12
      // Predicated region
      $region95: #{_lambda_.5} parent=5 // pred_check
        %p1224 = pneg %p1223
      $region96: #{_lambda_.5} parent=5 // pred_check_branch
        %1226 = sbr.rel (%p1224) target = $region98
      $region97: #{_lambda_.5} parent=5 // pred_region
        %s1227 = ssub.s32 %s12, 2
        // Predicated region
        $region99: #{_lambda_.5} parent=97 // pred_check
          %p1228 = pneg %p201
        $region100: #{_lambda_.5} parent=97 // pred_check_branch
          %1230 = sbr.rel (%p1228) target = $region102
        $region101: #{_lambda_.5} parent=97 // pred_region
          %s1231 = smul.u32 16, %s23
          %p1232 = scmp.lt.s32.totalorder %s1231, 31
          %s1233 = scalar_select %p1232, %s1231, 31
          %s1234 = smul.addr %s1233, 8
          %s1235 = scalar_lea.vmem %s6, %s1234
        $region102: #{_lambda_.5} parent=97 // pred_fallthru
          _
      $region98: #{_lambda_.5} parent=5 // pred_fallthru
        _
    $region6: #{_lambda_.5} parent=1 // loop_footer
      %s16 = sadd.s32 1, %s12
    $region7: #{_lambda_.5} parent=1 // loop_footer_branch
      %11 = sbr.rel target = $region3
    $region8: #{_lambda_.5} parent=1 // loop_exit
      _

// kernel: _lambda_.4
$region0: #{_lambda_.4}
  #allocation0 [shape = 'u32[]', space=smem, size = 0x4, offset = 0x4, fixed_abs, tag = 'smem constant byte address 0x4 - core index']
  #allocation1 [shape = 'u32[72,128]{1,0:T(1,128)}', space=vmem, size = 0x9000, scoped, tag = 'internal scratch']
  #allocation2 [shape = 'f32[128,128]{1,0:T(8,128)}', space=vmem, size = 0x10000, scoped, tag = 'scratch operand']
  %s0 = inlined_call_operand.vmem [shape: s8[256,256], index: 0, kind: input, shape index: {}]
  %s1 = inlined_call_operand.vmem [shape: f32[256,1], index: 1, kind: input, shape index: {}]
  %s2 = inlined_call_operand.vmem [shape: bf16[256,128], index: 2, kind: input, shape index: {}]
  %s3 = inlined_call_operand.vmem [shape: bf16[256,128], index: 3, kind: input, shape index: {}]
  %s4 = inlined_call_operand.vmem [shape: f32[256,128], index: 4, kind: input, shape index: {}]
  %s5 = inlined_call_operand.vmem [shape: f32[1,128], index: 5, kind: input, shape index: {}]
  %s6 = inlined_call_operand.vmem [shape: bf16[128,256], index: 6, kind: input, shape index: {}]
  %s7 = inlined_call_operand.vmem [shape: f32[1,128], index: 7, kind: input, shape index: {}]
  %s8 = inlined_call_operand.vmem [shape: f32[256,128], index: 8, kind: output, shape index: {0}]
  %s9 = inlined_call_operand.vmem [shape: bf16[256,128], index: 9, kind: output, shape index: {1}]
  %s10 = inlined_call_operand.vmem [shape: bf16[256,128], index: 10, kind: output, shape index: {2}]
  %11 = xla_tuple %s8, %s9, %s10
  %s12 = sld [smem:[#allocation0]]
  $region127: #{_lambda_.4} parent=0
    _
  %s14 = ssub.s32 1, %s12
  %s15 = scalar_select 0, %s14, %s12
  $region1: #{_lambda_.4} parent=0
    #allocation3 [shape = 'u8[32768]{0}', space=vmem, size = 0x8000, scoped, tag = 'input window, operand 0']
    loop: start=0, step=1, limit=6
    $region2: #{_lambda_.4} parent=1 // loop_pre_header
      _
    $region3: #{_lambda_.4} parent=1 // loop_header
      %s17 = sphi 0, %s21
      %p18 = scmp.ge.s32.totalorder %s17, 6
      %s24 = sphi 0, %s36
      %s25 = sphi 0, %s32
      %s26 = sphi 0, %s24
      %s27 = sphi 0, %s25
      %s28 = sphi 0, %s26
      %s29 = sphi 0, %s27
      %s41 = sphi 0, %s43
      %s44 = sphi 0, %s41
      %s45 = sphi 0, %s44
      %s61 = sphi 0, %s45
      %s67 = sphi 0, %s69
      %s70 = sphi 0, %s67
      %s71 = sphi 0, %s70
      %s87 = sphi 0, %s71
      %s91 = sphi 0, %s91
      %s93 = sphi 0, %s91
      %s94 = sphi 0, %s93
      %s108 = sphi 0, %s94
      %s114 = sphi 0, %s116
      %s117 = sphi 0, %s114
      %s118 = sphi 0, %s117
      %s134 = sphi 0, %s118
      %s140 = sphi 0, %s142
      %s143 = sphi 0, %s140
      %s144 = sphi 0, %s143
      %s160 = sphi 0, %s144
      %s164 = sphi 0, %s164
      %s166 = sphi 0, %s164
      %s167 = sphi 0, %s166
      %s181 = sphi 0, %s167
      %s185 = sphi 0, %s185
      %s187 = sphi 0, %s185
      %s188 = sphi 0, %s187
      %s202 = sphi 0, %s188
      %s206 = sphi 0, %s206
      %s208 = sphi 0, %s206
      %s209 = sphi 0, %s208
      %s223 = sphi 0, %s209
      %s229 = sphi 0, %s231
      %s232 = sphi 0, %s229
      %s233 = sphi 0, %s232
      %s249 = sphi 0, %s233
      %s255 = sphi 0, %s257
      %s258 = sphi 0, %s255
      %s259 = sphi 0, %s258
      %s275 = sphi 0, %s259
      %s281 = sphi 0, %s283
      %s284 = sphi 0, %s281
      %s285 = sphi 0, %s284
      %s301 = sphi 0, %s285
    $region4: #{_lambda_.4} parent=1 // loop_header_branch
      %20 = sbr.rel (%p18) target = $region8
    $region5: #{_lambda_.4} parent=1 // loop_body
      %s22 = ssub.s32 %s17, 1
      %s23 = ssub.s32 %s17, 2
      %s30 = sadd.s32 1, %s25
      %p31 = scmp.ge.s32.totalorder %s30, 2
      %s32 = scalar_select %p31, 0, %s30
      %s33 = sadd.s32 1, %s24
      %s34 = scalar_select %p31, %s33, %s24
      %p35 = scmp.ge.s32.totalorder %s34, 2
      %s36 = scalar_select %p35, 0, %s34
      %s37 = ssub.s32 %s24, %s36
      %s38 = ssub.s32 %s25, %s32
      %s39 = sor.u32 %s37, %s38
      %p40 = scmp.eq.s32.totalorder %s39, 0
      %s42 = sadd.s32 %s41, 1
      %s43 = scalar_select %p40, %s41, %s42
      %p46 = pneg %p40
      %p47 = scmp.eq.s32.totalorder %s17, 3
      %p48 = por %p46, %p47
      %p49 = scmp.ne.s32.totalorder %s41, %s44
      %p50 = scmp.eq.s32.totalorder %s17, 0
      %p51 = por %p49, %p50
      %p52 = scmp.ne.s32.totalorder %s41, %s44
      %p53 = scmp.eq.s32.totalorder %s22, 3
      %p54 = por %p52, %p53
      %p55 = scmp.ne.s32.totalorder %s44, %s45
      %p56 = scmp.eq.s32.totalorder %s22, 0
      %p57 = por %p55, %p56
      %p58 = scmp.ne.s32.totalorder %s44, %s45
      %p59 = scmp.eq.s32.totalorder %s23, 3
      %p60 = por %p58, %p59
      %p62 = scmp.ne.s32.totalorder %s45, %s61
      %p63 = scmp.eq.s32.totalorder %s23, 0
      %p64 = por %p62, %p63
      %s65 = ssub.s32 %s24, %s36
      %p66 = scmp.eq.s32.totalorder %s65, 0
      %s68 = sadd.s32 %s67, 1
      %s69 = scalar_select %p66, %s67, %s68
      %p72 = pneg %p66
      %p73 = scmp.eq.s32.totalorder %s17, 3
      %p74 = por %p72, %p73
      %p75 = scmp.ne.s32.totalorder %s67, %s70
      %p76 = scmp.eq.s32.totalorder %s17, 0
      %p77 = por %p75, %p76
      %p78 = scmp.ne.s32.totalorder %s67, %s70
      %p79 = scmp.eq.s32.totalorder %s22, 3
      %p80 = por %p78, %p79
      %p81 = scmp.ne.s32.totalorder %s70, %s71
      %p82 = scmp.eq.s32.totalorder %s22, 0
      %p83 = por %p81, %p82
      %p84 = scmp.ne.s32.totalorder %s70, %s71
      %p85 = scmp.eq.s32.totalorder %s23, 3
      %p86 = por %p84, %p85
      %p88 = scmp.ne.s32.totalorder %s71, %s87
      %p89 = scmp.eq.s32.totalorder %s23, 0
      %p90 = por %p88, %p89
      %s92 = sadd.s32 %s91, 1
      %p95 = scmp.eq.s32.totalorder %s17, 3
      %p96 = scmp.ne.s32.totalorder %s91, %s93
      %p97 = scmp.eq.s32.totalorder %s17, 0
      %p98 = por %p96, %p97
      %p99 = scmp.ne.s32.totalorder %s91, %s93
      %p100 = scmp.eq.s32.totalorder %s22, 3
      %p101 = por %p99, %p100
      %p102 = scmp.ne.s32.totalorder %s93, %s94
      %p103 = scmp.eq.s32.totalorder %s22, 0
      %p104 = por %p102, %p103
      %p105 = scmp.ne.s32.totalorder %s93, %s94
      %p106 = scmp.eq.s32.totalorder %s23, 3
      %p107 = por %p105, %p106
      %p109 = scmp.ne.s32.totalorder %s94, %s108
      %p110 = scmp.eq.s32.totalorder %s23, 0
      %p111 = por %p109, %p110
      %s112 = ssub.s32 %s24, %s36
      %p113 = scmp.eq.s32.totalorder %s112, 0
      %s115 = sadd.s32 %s114, 1
      %s116 = scalar_select %p113, %s114, %s115
      %p119 = pneg %p113
      %p120 = scmp.eq.s32.totalorder %s17, 3
      %p121 = por %p119, %p120
      %p122 = scmp.ne.s32.totalorder %s114, %s117
      %p123 = scmp.eq.s32.totalorder %s17, 0
      %p124 = por %p122, %p123
      %p125 = scmp.ne.s32.totalorder %s114, %s117
      %p126 = scmp.eq.s32.totalorder %s22, 3
      %p127 = por %p125, %p126
      %p128 = scmp.ne.s32.totalorder %s117, %s118
      %p129 = scmp.eq.s32.totalorder %s22, 0
      %p130 = por %p128, %p129
      %p131 = scmp.ne.s32.totalorder %s117, %s118
      %p132 = scmp.eq.s32.totalorder %s23, 3
      %p133 = por %p131, %p132
      %p135 = scmp.ne.s32.totalorder %s118, %s134
      %p136 = scmp.eq.s32.totalorder %s23, 0
      %p137 = por %p135, %p136
      %s138 = ssub.s32 %s24, %s36
      %p139 = scmp.eq.s32.totalorder %s138, 0
      %s141 = sadd.s32 %s140, 1
      %s142 = scalar_select %p139, %s140, %s141
      %p145 = pneg %p139
      %p146 = scmp.eq.s32.totalorder %s17, 3
      %p147 = por %p145, %p146
      %p148 = scmp.ne.s32.totalorder %s140, %s143
      %p149 = scmp.eq.s32.totalorder %s17, 0
      %p150 = por %p148, %p149
      %p151 = scmp.ne.s32.totalorder %s140, %s143
      %p152 = scmp.eq.s32.totalorder %s22, 3
      %p153 = por %p151, %p152
      %p154 = scmp.ne.s32.totalorder %s143, %s144
      %p155 = scmp.eq.s32.totalorder %s22, 0
      %p156 = por %p154, %p155
      %p157 = scmp.ne.s32.totalorder %s143, %s144
      %p158 = scmp.eq.s32.totalorder %s23, 3
      %p159 = por %p157, %p158
      %p161 = scmp.ne.s32.totalorder %s144, %s160
      %p162 = scmp.eq.s32.totalorder %s23, 0
      %p163 = por %p161, %p162
      %s165 = sadd.s32 %s164, 1
      %p168 = scmp.eq.s32.totalorder %s17, 3
      %p169 = scmp.ne.s32.totalorder %s164, %s166
      %p170 = scmp.eq.s32.totalorder %s17, 0
      %p171 = por %p169, %p170
      %p172 = scmp.ne.s32.totalorder %s164, %s166
      %p173 = scmp.eq.s32.totalorder %s22, 3
      %p174 = por %p172, %p173
      %p175 = scmp.ne.s32.totalorder %s166, %s167
      %p176 = scmp.eq.s32.totalorder %s22, 0
      %p177 = por %p175, %p176
      %p178 = scmp.ne.s32.totalorder %s166, %s167
      %p179 = scmp.eq.s32.totalorder %s23, 3
      %p180 = por %p178, %p179
      %p182 = scmp.ne.s32.totalorder %s167, %s181
      %p183 = scmp.eq.s32.totalorder %s23, 0
      %p184 = por %p182, %p183
      %s186 = sadd.s32 %s185, 1
      %p189 = scmp.eq.s32.totalorder %s17, 3
      %p190 = scmp.ne.s32.totalorder %s185, %s187
      %p191 = scmp.eq.s32.totalorder %s17, 0
      %p192 = por %p190, %p191
      %p193 = scmp.ne.s32.totalorder %s185, %s187
      %p194 = scmp.eq.s32.totalorder %s22, 3
      %p195 = por %p193, %p194
      %p196 = scmp.ne.s32.totalorder %s187, %s188
      %p197 = scmp.eq.s32.totalorder %s22, 0
      %p198 = por %p196, %p197
      %p199 = scmp.ne.s32.totalorder %s187, %s188
      %p200 = scmp.eq.s32.totalorder %s23, 3
      %p201 = por %p199, %p200
      %p203 = scmp.ne.s32.totalorder %s188, %s202
      %p204 = scmp.eq.s32.totalorder %s23, 0
      %p205 = por %p203, %p204
      %s207 = sadd.s32 %s206, 1
      %p210 = scmp.eq.s32.totalorder %s17, 3
      %p211 = scmp.ne.s32.totalorder %s206, %s208
      %p212 = scmp.eq.s32.totalorder %s17, 0
      %p213 = por %p211, %p212
      %p214 = scmp.ne.s32.totalorder %s206, %s208
      %p215 = scmp.eq.s32.totalorder %s22, 3
      %p216 = por %p214, %p215
      %p217 = scmp.ne.s32.totalorder %s208, %s209
      %p218 = scmp.eq.s32.totalorder %s22, 0
      %p219 = por %p217, %p218
      %p220 = scmp.ne.s32.totalorder %s208, %s209
      %p221 = scmp.eq.s32.totalorder %s23, 3
      %p222 = por %p220, %p221
      %p224 = scmp.ne.s32.totalorder %s209, %s223
      %p225 = scmp.eq.s32.totalorder %s23, 0
      %p226 = por %p224, %p225
      %s227 = ssub.s32 %s24, %s36
      %p228 = scmp.eq.s32.totalorder %s227, 0
      %s230 = sadd.s32 %s229, 1
      %s231 = scalar_select %p228, %s229, %s230
      %p234 = pneg %p228
      %p235 = scmp.eq.s32.totalorder %s17, 3
      %p236 = por %p234, %p235
      %p237 = scmp.ne.s32.totalorder %s229, %s232
      %p238 = scmp.eq.s32.totalorder %s17, 0
      %p239 = por %p237, %p238
      %p240 = scmp.ne.s32.totalorder %s229, %s232
      %p241 = scmp.eq.s32.totalorder %s22, 3
      %p242 = por %p240, %p241
      %p243 = scmp.ne.s32.totalorder %s232, %s233
      %p244 = scmp.eq.s32.totalorder %s22, 0
      %p245 = por %p243, %p244
      %p246 = scmp.ne.s32.totalorder %s232, %s233
      %p247 = scmp.eq.s32.totalorder %s23, 3
      %p248 = por %p246, %p247
      %p250 = scmp.ne.s32.totalorder %s233, %s249
      %p251 = scmp.eq.s32.totalorder %s23, 0
      %p252 = por %p250, %p251
      %s253 = ssub.s32 %s24, %s36
      %p254 = scmp.eq.s32.totalorder %s253, 0
      %s256 = sadd.s32 %s255, 1
      %s257 = scalar_select %p254, %s255, %s256
      %p260 = pneg %p254
      %p261 = scmp.eq.s32.totalorder %s17, 3
      %p262 = por %p260, %p261
      %p263 = scmp.ne.s32.totalorder %s255, %s258
      %p264 = scmp.eq.s32.totalorder %s17, 0
      %p265 = por %p263, %p264
      %p266 = scmp.ne.s32.totalorder %s255, %s258
      %p267 = scmp.eq.s32.totalorder %s22, 3
      %p268 = por %p266, %p267
      %p269 = scmp.ne.s32.totalorder %s258, %s259
      %p270 = scmp.eq.s32.totalorder %s22, 0
      %p271 = por %p269, %p270
      %p272 = scmp.ne.s32.totalorder %s258, %s259
      %p273 = scmp.eq.s32.totalorder %s23, 3
      %p274 = por %p272, %p273
      %p276 = scmp.ne.s32.totalorder %s259, %s275
      %p277 = scmp.eq.s32.totalorder %s23, 0
      %p278 = por %p276, %p277
      %s279 = ssub.s32 %s24, %s36
      %p280 = scmp.eq.s32.totalorder %s279, 0
      %s282 = sadd.s32 %s281, 1
      %s283 = scalar_select %p280, %s281, %s282
      %p286 = pneg %p280
      %p287 = scmp.eq.s32.totalorder %s17, 3
      %p288 = por %p286, %p287
      %p289 = scmp.ne.s32.totalorder %s281, %s284
      %p290 = scmp.eq.s32.totalorder %s17, 0
      %p291 = por %p289, %p290
      %p292 = scmp.ne.s32.totalorder %s281, %s284
      %p293 = scmp.eq.s32.totalorder %s22, 3
      %p294 = por %p292, %p293
      %p295 = scmp.ne.s32.totalorder %s284, %s285
      %p296 = scmp.eq.s32.totalorder %s22, 0
      %p297 = por %p295, %p296
      %p298 = scmp.ne.s32.totalorder %s284, %s285
      %p299 = scmp.eq.s32.totalorder %s23, 3
      %p300 = por %p298, %p299
      %p302 = scmp.ne.s32.totalorder %s285, %s301
      %p303 = scmp.eq.s32.totalorder %s23, 0
      %p304 = por %p302, %p303
      %p305 = scmp.le.s32.totalorder 1, %s17
      %p306 = scmp.lt.s32.totalorder %s17, 5
      %p307 = pnand %p305, %p306
      %p308 = pneg %p307
      // Predicated region
      $region9: #{_lambda_.4} parent=5 // pred_check
        _
      $region10: #{_lambda_.4} parent=5 // pred_check_branch
        %310 = sbr.rel (%p307) target = $region12
      $region11: #{_lambda_.4} parent=5 // pred_region
        %s311 = ssub.s32 %s17, 1
        // Predicated region
        $region13: #{_lambda_.4} parent=11 // pred_check
          %p312 = pneg %p104
        $region14: #{_lambda_.4} parent=11 // pred_check_branch
          %314 = sbr.rel (%p312) target = $region16
        $region15: #{_lambda_.4} parent=11 // pred_region
          _
        $region16: #{_lambda_.4} parent=11 // pred_fallthru
          _
        // Predicated region
        $region17: #{_lambda_.4} parent=11 // pred_check
          %p315 = pneg %p177
        $region18: #{_lambda_.4} parent=11 // pred_check_branch
          %317 = sbr.rel (%p315) target = $region20
        $region19: #{_lambda_.4} parent=11 // pred_region
          _
        $region20: #{_lambda_.4} parent=11 // pred_fallthru
          _
        // Predicated region
        $region21: #{_lambda_.4} parent=11 // pred_check
          %p318 = pneg %p198
        $region22: #{_lambda_.4} parent=11 // pred_check_branch
          %320 = sbr.rel (%p318) target = $region24
        $region23: #{_lambda_.4} parent=11 // pred_region
          _
        $region24: #{_lambda_.4} parent=11 // pred_fallthru
          _
        // Predicated region
        $region25: #{_lambda_.4} parent=11 // pred_check
          %p321 = pneg %p219
        $region26: #{_lambda_.4} parent=11 // pred_check_branch
          %323 = sbr.rel (%p321) target = $region28
        $region27: #{_lambda_.4} parent=11 // pred_region
          _
        $region28: #{_lambda_.4} parent=11 // pred_fallthru
          _
      $region12: #{_lambda_.4} parent=5 // pred_fallthru
        _
      %p324 = scmp.lt.s32.totalorder %s17, 4
      // Predicated region
      $region29: #{_lambda_.4} parent=5 // pred_check
        %p325 = pneg %p324
      $region30: #{_lambda_.4} parent=5 // pred_check_branch
        %327 = sbr.rel (%p325) target = $region32
      $region31: #{_lambda_.4} parent=5 // pred_region
        // Predicated region
        $region33: #{_lambda_.4} parent=31 // pred_check
          %p328 = pneg %p51
        $region34: #{_lambda_.4} parent=31 // pred_check_branch
          %330 = sbr.rel (%p328) target = $region36
        $region35: #{_lambda_.4} parent=31 // pred_region
          %s331 = sand.u32 %s41, 1
          %s332 = sand.u32 %s41, 1
          %s333 = smul.addr %s332, 32
          %s334 = scalar_lea.vmem [#allocation3], %s333
          %s335 = smul.u32 4, %s24
          %s336 = smul.addr %s335, 2
          %s337 = sadd.s32 %s25, %s336
          %s338 = smul.addr %s337, 8
          %s339 = scalar_lea.vmem %s0, %s338
          // Predicated region
          $region37: #{_lambda_.4} parent=35 // pred_check
            _
          $region38: #{_lambda_.4} parent=35 // pred_check_branch
            %341 = sbr.rel (0) target = $region40
          $region39: #{_lambda_.4} parent=35 // pred_region
            // Predicated region
            $region41: #{_lambda_.4} parent=39 // pred_check
              _
            $region42: #{_lambda_.4} parent=39 // pred_check_branch
              %343 = sbr.rel (0) target = $region44
            $region43: #{_lambda_.4} parent=39 // pred_region
              // Predicated region
              $region56: #{_lambda_.4} parent=43 // pred_check
                _
              $region57: #{_lambda_.4} parent=43 // pred_check_branch
                %365 = sbr.rel (0) target = $region59
              $region58: #{_lambda_.4} parent=43 // pred_region
                loop: start=0, step=1, limit=1
                $region60: #{_lambda_.4} parent=58 // loop_pre_header
                  _
                $region61: #{_lambda_.4} parent=58 // loop_header
                  %s367 = sphi 0, %s371
                  %p368 = scmp.ge.s32.totalorder %s367, 1
                  %s372 = sphi %s339, %s339
                  %s373 = sphi %s334, %s334
                $region62: #{_lambda_.4} parent=58 // loop_header_branch
                  %370 = sbr.rel (%p368) target = $region66
                $region63: #{_lambda_.4} parent=58 // loop_body
                  %v374 = vld [vmem:[%s372] sm:$0xff]
                  %375 = vst [vmem:[%s373] sm:$0xff] %v374
                  %v376 = vld [vmem:[%s372 + $0x10] sm:$0xff]
                  %377 = vst [vmem:[%s373 + $0x8] sm:$0xff] %v376
                  %v378 = vld [vmem:[%s372 + $0x20] sm:$0xff]
                  %379 = vst [vmem:[%s373 + $0x10] sm:$0xff] %v378
                  %v380 = vld [vmem:[%s372 + $0x30] sm:$0xff]
                  %381 = vst [vmem:[%s373 + $0x18] sm:$0xff] %v380
                $region64: #{_lambda_.4} parent=58 // loop_footer
                  %s371 = sadd.s32 1, %s367
                $region65: #{_lambda_.4} parent=58 // loop_footer_branch
                  %366 = sbr.rel target = $region61
                $region66: #{_lambda_.4} parent=58 // loop_exit
                  _
              $region59: #{_lambda_.4} parent=43 // pred_fallthru
                _
              // Predicated region
              $region67: #{_lambda_.4} parent=43 // pred_check
                _
              $region68: #{_lambda_.4} parent=43 // pred_check_branch
                %383 = sbr.rel target = $region70
              $region69: #{_lambda_.4} parent=43 // pred_region
                _
              $region70: #{_lambda_.4} parent=43 // pred_fallthru
                _
            $region44: #{_lambda_.4} parent=39 // pred_fallthru
              _
            // Predicated region
            $region45: #{_lambda_.4} parent=39 // pred_check
              _
            $region46: #{_lambda_.4} parent=39 // pred_check_branch
              %345 = sbr.rel target = $region48
            $region47: #{_lambda_.4} parent=39 // pred_region
              %s347 = ssub.s32 256, 1
              loop: start=0, step=1, limit=1
              $region49: #{_lambda_.4} parent=47 // loop_pre_header
                _
              $region50: #{_lambda_.4} parent=47 // loop_header
                %s349 = sphi 0, %s353
                %p350 = scmp.ge.s32.totalorder %s349, 1
                %s354 = sphi %s339, %s339
                %s355 = sphi %s334, %s334
              $region51: #{_lambda_.4} parent=47 // loop_header_branch
                %352 = sbr.rel (%p350) target = $region55
              $region52: #{_lambda_.4} parent=47 // loop_body
                %v356 = vld [vmem:[%s354] sm:%s347]
                %357 = vst [vmem:[%s355] sm:%s347] %v356
                %v358 = vld [vmem:[%s354 + $0x10] sm:%s347]
                %359 = vst [vmem:[%s355 + $0x8] sm:%s347] %v358
                %v360 = vld [vmem:[%s354 + $0x20] sm:%s347]
                %361 = vst [vmem:[%s355 + $0x10] sm:%s347] %v360
                %v362 = vld [vmem:[%s354 + $0x30] sm:%s347]
                %363 = vst [vmem:[%s355 + $0x18] sm:%s347] %v362
              $region53: #{_lambda_.4} parent=47 // loop_footer
                %s353 = sadd.s32 1, %s349
              $region54: #{_lambda_.4} parent=47 // loop_footer_branch
                %348 = sbr.rel target = $region50
              $region55: #{_lambda_.4} parent=47 // loop_exit
                _
            $region48: #{_lambda_.4} parent=39 // pred_fallthru
              _
          $region40: #{_lambda_.4} parent=35 // pred_fallthru
            _
          %384 = vnop
        $region36: #{_lambda_.4} parent=31 // pred_fallthru
          _
        // Predicated region
        $region71: #{_lambda_.4} parent=31 // pred_check
          %p385 = pneg %p77
        $region72: #{_lambda_.4} parent=31 // pred_check_branch
          %387 = sbr.rel (%p385) target = $region74
        $region73: #{_lambda_.4} parent=31 // pred_region
          %s388 = smul.u32 16, %s24
          %p389 = scmp.lt.s32.totalorder %s388, 31
          %s390 = scalar_select %p389, %s388, 31
          %s391 = smul.addr %s390, 8
          %s392 = scalar_lea.vmem %s1, %s391
          %s393 = smul.u32 16, %s24
        $region74: #{_lambda_.4} parent=31 // pred_fallthru
          _
        // Predicated region
        $region75: #{_lambda_.4} parent=31 // pred_check
          %p394 = pneg %p124
        $region76: #{_lambda_.4} parent=31 // pred_check_branch
          %396 = sbr.rel (%p394) target = $region78
        $region77: #{_lambda_.4} parent=31 // pred_region
          %s397 = smul.u32 16, %s24
          %p398 = scmp.lt.s32.totalorder %s397, 31
          %s399 = scalar_select %p398, %s397, 31
          %s400 = smul.addr %s399, 4
          %s401 = scalar_lea.vmem %s3, %s400
          %s402 = smul.u32 16, %s24
        $region78: #{_lambda_.4} parent=31 // pred_fallthru
          _
        // Predicated region
        $region79: #{_lambda_.4} parent=31 // pred_check
          %p403 = pneg %p150
        $region80: #{_lambda_.4} parent=31 // pred_check_branch
          %405 = sbr.rel (%p403) target = $region82
        $region81: #{_lambda_.4} parent=31 // pred_region
          %s406 = smul.u32 16, %s24
          %p407 = scmp.lt.s32.totalorder %s406, 31
          %s408 = scalar_select %p407, %s406, 31
          %s409 = smul.addr %s408, 8
          %s410 = scalar_lea.vmem %s4, %s409
          %s411 = smul.u32 16, %s24
        $region82: #{_lambda_.4} parent=31 // pred_fallthru
          _
      $region32: #{_lambda_.4} parent=5 // pred_fallthru
        _
      %p412 = scmp.le.s32.totalorder 1, %s17
      %p413 = scmp.lt.s32.totalorder %s17, 5
      %p414 = pnand %p412, %p413
      %p415 = pneg %p414
      // Predicated region
      $region83: #{_lambda_.4} parent=5 // pred_check
        _
      $region84: #{_lambda_.4} parent=5 // pred_check_branch
        %417 = sbr.rel (%p414) target = $region86
      $region85: #{_lambda_.4} parent=5 // pred_region
        %s418 = ssub.s32 %s17, 1
        %s419 = sand.u32 %s44, 1
        %s420 = sand.u32 %s44, 1
        %s421 = smul.addr %s420, 32
        %s422 = scalar_lea.vmem [#allocation3], %s421
        // Predicated region
        $region87: #{_lambda_.4} parent=85 // pred_check
          %p423 = pneg %p57
        $region88: #{_lambda_.4} parent=85 // pred_check_branch
          %425 = sbr.rel (%p423) target = $region90
        $region89: #{_lambda_.4} parent=85 // pred_region
          _
        $region90: #{_lambda_.4} parent=85 // pred_fallthru
          _
        %s426 = sand.u32 %s44, 1
        %s427 = sand.u32 %s44, 1
        %s428 = smul.addr %s427, 32
        %s429 = scalar_lea.vmem [#allocation3], %s428
        %p430 = pneg %p57
        %p431 = pneg %p54
        %s432 = smul.u32 16, %s26
        %p433 = scmp.lt.s32.totalorder %s432, 31
        %s434 = scalar_select %p433, %s432, 31
        %s435 = smul.addr %s434, 8
        %s436 = scalar_lea.vmem %s1, %s435
        %p437 = pneg %p83
        %p438 = pneg %p80
        %p439 = pneg %p104
        %p440 = pneg %p101
        %s441 = smul.u32 16, %s26
        %p442 = scmp.lt.s32.totalorder %s441, 31
        %s443 = scalar_select %p442, %s441, 31
        %s444 = smul.addr %s443, 4
        %s445 = scalar_lea.vmem %s3, %s444
        %p446 = pneg %p130
        %p447 = pneg %p127
        %s448 = smul.u32 16, %s26
        %p449 = scmp.lt.s32.totalorder %s448, 31
        %s450 = scalar_select %p449, %s448, 31
        %s451 = smul.addr %s450, 8
        %s452 = scalar_lea.vmem %s4, %s451
        %p453 = pneg %p156
        %p454 = pneg %p153
        %p455 = pneg %p177
        %p456 = pneg %p174
        %p457 = pneg %p198
        %p458 = pneg %p195
        %p459 = pneg %p219
        %p460 = pneg %p216
        %p461 = pneg %p245
        %p462 = pneg %p242
        %s463 = smul.u32 16, %s26
        %p464 = scmp.lt.s32.totalorder %s463, 31
        %s465 = scalar_select %p464, %s463, 31
        %s466 = smul.addr %s465, 8
        %s467 = scalar_lea.vmem %s8, %s466
        %p468 = pneg %p271
        %p469 = pneg %p268
        %s470 = smul.u32 16, %s26
        %p471 = scmp.lt.s32.totalorder %s470, 31
        %s472 = scalar_select %p471, %s470, 31
        %s473 = smul.addr %s472, 4
        %s474 = scalar_lea.vmem %s9, %s473
        %p475 = pneg %p297
        %p476 = pneg %p294
        %s477 = smul.u32 16, %s26
        %p478 = scmp.lt.s32.totalorder %s477, 31
        %s479 = scalar_select %p478, %s477, 31
        %s480 = smul.addr %s479, 4
        %s481 = scalar_lea.vmem %s10, %s480
        %s482 = smul.u32 4, %s26
        %s483 = smul.u32 16, %s26
        %p484 = scmp.lt.s32.totalorder %s483, 31
        %s485 = scalar_select %p484, %s483, 31
        %s486 = smul.addr %s485, 8
        %s487 = scalar_lea.vmem %s1, %s486
        %s488 = smul.u32 16, %s26
        %s489 = smul.u32 16, %s26
        %p490 = scmp.lt.s32.totalorder %s489, 31
        %s491 = scalar_select %p490, %s489, 31
        %s492 = smul.addr %s491, 4
        %s493 = scalar_lea.vmem %s3, %s492
        %s494 = smul.u32 16, %s26
        %s495 = smul.u32 16, %s26
        %p496 = scmp.lt.s32.totalorder %s495, 31
        %s497 = scalar_select %p496, %s495, 31
        %s498 = smul.addr %s497, 8
        %s499 = scalar_lea.vmem %s4, %s498
        %s500 = smul.u32 16, %s26
        %s501 = smul.u32 16, %s26
        %p502 = scmp.lt.s32.totalorder %s501, 31
        %s503 = scalar_select %p502, %s501, 31
        %s504 = smul.addr %s503, 8
        %s505 = scalar_lea.vmem %s8, %s504
        %s506 = smul.u32 16, %s26
        %s507 = smul.u32 16, %s26
        %p508 = scmp.lt.s32.totalorder %s507, 31
        %s509 = scalar_select %p508, %s507, 31
        %s510 = smul.addr %s509, 4
        %s511 = scalar_lea.vmem %s9, %s510
        %s512 = smul.u32 16, %s26
        %s513 = smul.u32 16, %s26
        %p514 = scmp.lt.s32.totalorder %s513, 31
        %s515 = scalar_select %p514, %s513, 31
        %s516 = smul.addr %s515, 4
        %s517 = scalar_lea.vmem %s10, %s516
        %s518 = smul.u32 16, %s26
        %p519 = scmp.eq.s32.totalorder %s27, 0
        // Predicated region
        $region91: #{_lambda_.4} parent=85 // pred_check
          %p520 = pneg %p519
        $region92: #{_lambda_.4} parent=85 // pred_check_branch
          %522 = sbr.rel (%p520) target = $region94
        $region93: #{_lambda_.4} parent=85 // pred_region
          %523 = vst [vmem:[#allocation2] sm:$0xff] 0.0
          %524 = vst [vmem:[#allocation2 + $0x8] sm:$0xff] 0.0
          %525 = vst [vmem:[#allocation2 + $0x10] sm:$0xff] 0.0
          %526 = vst [vmem:[#allocation2 + $0x18] sm:$0xff] 0.0
          %527 = vst [vmem:[#allocation2 + $0x20] sm:$0xff] 0.0
          %528 = vst [vmem:[#allocation2 + $0x28] sm:$0xff] 0.0
          %529 = vst [vmem:[#allocation2 + $0x30] sm:$0xff] 0.0
          %530 = vst [vmem:[#allocation2 + $0x38] sm:$0xff] 0.0
          %531 = vst [vmem:[#allocation2 + $0x40] sm:$0xff] 0.0
          %532 = vst [vmem:[#allocation2 + $0x48] sm:$0xff] 0.0
          %533 = vst [vmem:[#allocation2 + $0x50] sm:$0xff] 0.0
          %534 = vst [vmem:[#allocation2 + $0x58] sm:$0xff] 0.0
          %535 = vst [vmem:[#allocation2 + $0x60] sm:$0xff] 0.0
          %536 = vst [vmem:[#allocation2 + $0x68] sm:$0xff] 0.0
          %537 = vst [vmem:[#allocation2 + $0x70] sm:$0xff] 0.0
          %538 = vst [vmem:[#allocation2 + $0x78] sm:$0xff] 0.0
        $region94: #{_lambda_.4} parent=85 // pred_fallthru
          _
        %v539 = vld [vmem:[#allocation2] sm:$0xff]
        %v540 = vld [vmem:[#allocation2 + $0x8] sm:$0xff]
        %v541 = vld [vmem:[#allocation2 + $0x10] sm:$0xff]
        %v542 = vld [vmem:[#allocation2 + $0x18] sm:$0xff]
        %v543 = vld [vmem:[#allocation2 + $0x20] sm:$0xff]
        %v544 = vld [vmem:[#allocation2 + $0x28] sm:$0xff]
        %v545 = vld [vmem:[#allocation2 + $0x30] sm:$0xff]
        %v546 = vld [vmem:[#allocation2 + $0x38] sm:$0xff]
        %v547 = vld [vmem:[#allocation2 + $0x40] sm:$0xff]
        %v548 = vld [vmem:[#allocation2 + $0x48] sm:$0xff]
        %v549 = vld [vmem:[#allocation2 + $0x50] sm:$0xff]
        %v550 = vld [vmem:[#allocation2 + $0x58] sm:$0xff]
        %v551 = vld [vmem:[#allocation2 + $0x60] sm:$0xff]
        %v552 = vld [vmem:[#allocation2 + $0x68] sm:$0xff]
        %v553 = vld [vmem:[#allocation2 + $0x70] sm:$0xff]
        %v554 = vld [vmem:[#allocation2 + $0x78] sm:$0xff]
        %v555 = vld [vmem:[%s422] sm:$0xff]
        %v556 = vld [vmem:[%s422 + $0x8] sm:$0xff]
        %v557 = vld [vmem:[%s422 + $0x10] sm:$0xff]
        %v558 = vld [vmem:[%s422 + $0x18] sm:$0xff]
        %v559 = vunpack.c.0.s8 %v555
        %v560 = vunpack.c.1.s8 %v555
        %v561 = vunpack.c.2.s8 %v555
        %v562 = vunpack.c.3.s8 %v555
        %v563 = vunpack.c.0.s8 %v556
        %v564 = vunpack.c.1.s8 %v556
        %v565 = vunpack.c.2.s8 %v556
        %v566 = vunpack.c.3.s8 %v556
        %v567 = vunpack.c.0.s8 %v557
        %v568 = vunpack.c.1.s8 %v557
        %v569 = vunpack.c.2.s8 %v557
        %v570 = vunpack.c.3.s8 %v557
        %v571 = vunpack.c.0.s8 %v558
        %v572 = vunpack.c.1.s8 %v558
        %v573 = vunpack.c.2.s8 %v558
        %v574 = vunpack.c.3.s8 %v558
        %v575 = vcvt.s32.f32 %v559
        %v576 = vcvt.s32.f32 %v560
        %v577 = vcvt.s32.f32 %v561
        %v578 = vcvt.s32.f32 %v562
        %v579 = vcvt.s32.f32 %v563
        %v580 = vcvt.s32.f32 %v564
        %v581 = vcvt.s32.f32 %v565
        %v582 = vcvt.s32.f32 %v566
        %v583 = vcvt.s32.f32 %v567
        %v584 = vcvt.s32.f32 %v568
        %v585 = vcvt.s32.f32 %v569
        %v586 = vcvt.s32.f32 %v570
        %v587 = vcvt.s32.f32 %v571
        %v588 = vcvt.s32.f32 %v572
        %v589 = vcvt.s32.f32 %v573
        %v590 = vcvt.s32.f32 %v574
        %v591 = vpack.c.bf16 %v576, %v575
        %v592 = vpack.c.bf16 %v578, %v577
        %v593 = vpack.c.bf16 %v580, %v579
        %v594 = vpack.c.bf16 %v582, %v581
        %v595 = vpack.c.bf16 %v584, %v583
        %v596 = vpack.c.bf16 %v586, %v585
        %v597 = vpack.c.bf16 %v588, %v587
        %v598 = vpack.c.bf16 %v590, %v589
        %s599 = smul.u32 %s27, 128
        %s600 = sshra.s32 %s599, 3
        %s601 = sand.u32 %s599, 7
        %s602 = smul.addr %s600, 4
        %s603 = scalar_lea.vmem %s2, %s602
        %v604 = vld [vmem:[%s603] sm:$0xf]
        %v605 = vld [vmem:[%s603 + $0x4] sm:$0xf]
        %v606 = vld [vmem:[%s603 + $0x8] sm:$0xf]
        %v607 = vld [vmem:[%s603 + $0xc] sm:$0xf]
        %v608 = vld [vmem:[%s603 + $0x10] sm:$0xf]
        %v609 = vld [vmem:[%s603 + $0x14] sm:$0xf]
        %v610 = vld [vmem:[%s603 + $0x18] sm:$0xf]
        %v611 = vld [vmem:[%s603 + $0x1c] sm:$0xf]
        %v612 = vld [vmem:[%s603 + $0x20] sm:$0xf]
        %v613 = vld [vmem:[%s603 + $0x24] sm:$0xf]
        %v614 = vld [vmem:[%s603 + $0x28] sm:$0xf]
        %v615 = vld [vmem:[%s603 + $0x2c] sm:$0xf]
        %v616 = vld [vmem:[%s603 + $0x30] sm:$0xf]
        %v617 = vld [vmem:[%s603 + $0x34] sm:$0xf]
        %v618 = vld [vmem:[%s603 + $0x38] sm:$0xf]
        %v619 = vld [vmem:[%s603 + $0x3c] sm:$0xf]
        %v636 = vunpack.c.l.b16 %v604
        %v637 = vunpack.c.l.b16 %v605
        %v638 = vunpack.c.l.b16 %v606
        %v639 = vunpack.c.l.b16 %v607
        %v640 = vunpack.c.l.b16 %v608
        %v641 = vunpack.c.l.b16 %v609
        %v642 = vunpack.c.l.b16 %v610
        %v643 = vunpack.c.l.b16 %v611
        %v644 = vunpack.c.l.b16 %v612
        %v645 = vunpack.c.l.b16 %v613
        %v646 = vunpack.c.l.b16 %v614
        %v647 = vunpack.c.l.b16 %v615
        %v648 = vunpack.c.l.b16 %v616
        %v649 = vunpack.c.l.b16 %v617
        %v650 = vunpack.c.l.b16 %v618
        %v651 = vunpack.c.l.b16 %v619
        %v652 = vpack.c.b16 %v637, %v636
        %v653 = vpack.c.b16 %v639, %v638
        %v654 = vpack.c.b16 %v641, %v640
        %v655 = vpack.c.b16 %v643, %v642
        %v656 = vpack.c.b16 %v645, %v644
        %v657 = vpack.c.b16 %v647, %v646
        %v658 = vpack.c.b16 %v649, %v648
        %v659 = vpack.c.b16 %v651, %v650
        %668 = vmatpush.bf16.msra.mxu0 %v659
        %669 = vmatpush.bf16.msra.mxu0 %v658
        %670 = vmatpush.bf16.msra.mxu0 %v657
        %671 = vmatpush.bf16.msra.mxu0 %v656
        %672 = vmatpush.bf16.msra.mxu0 %v655
        %673 = vmatpush.bf16.msra.mxu0 %v654
        %674 = vmatpush.bf16.msra.mxu0 %v653
        %675 = vmatpush.bf16.msra.mxu0 %v652
        %676 = vmatmul.bf16.gmra.mxu0 %v591
        %v677 = vpop.f32.mrf.mxu0
        %v678 = vadd.f32 0.0, %v677
        %v679 = vpop.f32.mrf.mxu0
        %v680 = vadd.f32 0.0, %v679
        %681 = vmatmul.bf16.gmra.mxu0 %v592
        %v682 = vpop.f32.mrf.mxu0
        %v683 = vadd.f32 0.0, %v682
        %v684 = vpop.f32.mrf.mxu0
        %v685 = vadd.f32 0.0, %v684
        %686 = vmatmul.bf16.gmra.mxu0 %v593
        %v687 = vpop.f32.mrf.mxu0
        %v688 = vadd.f32 0.0, %v687
        %v689 = vpop.f32.mrf.mxu0
        %v690 = vadd.f32 0.0, %v689
        %691 = vmatmul.bf16.gmra.mxu0 %v594
        %v692 = vpop.f32.mrf.mxu0
        %v693 = vadd.f32 0.0, %v692
        %v694 = vpop.f32.mrf.mxu0
        %v695 = vadd.f32 0.0, %v694
        %696 = vmatmul.bf16.gmra.mxu0 %v595
        %v697 = vpop.f32.mrf.mxu0
        %v698 = vadd.f32 0.0, %v697
        %v699 = vpop.f32.mrf.mxu0
        %v700 = vadd.f32 0.0, %v699
        %701 = vmatmul.bf16.gmra.mxu0 %v596
        %v702 = vpop.f32.mrf.mxu0
        %v703 = vadd.f32 0.0, %v702
        %v704 = vpop.f32.mrf.mxu0
        %v705 = vadd.f32 0.0, %v704
        %706 = vmatmul.bf16.gmra.mxu0 %v597
        %v707 = vpop.f32.mrf.mxu0
        %v708 = vadd.f32 0.0, %v707
        %v709 = vpop.f32.mrf.mxu0
        %v710 = vadd.f32 0.0, %v709
        %711 = vmatmul.bf16.gmra.mxu0 %v598
        %v712 = vpop.f32.mrf.mxu0
        %v713 = vadd.f32 0.0, %v712
        %v714 = vpop.f32.mrf.mxu0
        %v715 = vadd.f32 0.0, %v714
        %716 = vdwg.mxu0
        %v717 = vadd.f32 %v539, %v678
        %v718 = vadd.f32 %v540, %v680
        %v719 = vadd.f32 %v541, %v683
        %v720 = vadd.f32 %v542, %v685
        %v721 = vadd.f32 %v543, %v688
        %v722 = vadd.f32 %v544, %v690
        %v723 = vadd.f32 %v545, %v693
        %v724 = vadd.f32 %v546, %v695
        %v725 = vadd.f32 %v547, %v698
        %v726 = vadd.f32 %v548, %v700
        %v727 = vadd.f32 %v549, %v703
        %v728 = vadd.f32 %v550, %v705
        %v729 = vadd.f32 %v551, %v708
        %v730 = vadd.f32 %v552, %v710
        %v731 = vadd.f32 %v553, %v713
        %v732 = vadd.f32 %v554, %v715
        %733 = vst [vmem:[#allocation2] sm:$0xff] %v717
        %734 = vst [vmem:[#allocation2 + $0x8] sm:$0xff] %v718
        %735 = vst [vmem:[#allocation2 + $0x10] sm:$0xff] %v719
        %736 = vst [vmem:[#allocation2 + $0x18] sm:$0xff] %v720
        %737 = vst [vmem:[#allocation2 + $0x20] sm:$0xff] %v721
        %738 = vst [vmem:[#allocation2 + $0x28] sm:$0xff] %v722
        %739 = vst [vmem:[#allocation2 + $0x30] sm:$0xff] %v723
        %740 = vst [vmem:[#allocation2 + $0x38] sm:$0xff] %v724
        %741 = vst [vmem:[#allocation2 + $0x40] sm:$0xff] %v725
        %742 = vst [vmem:[#allocation2 + $0x48] sm:$0xff] %v726
        %743 = vst [vmem:[#allocation2 + $0x50] sm:$0xff] %v727
        %744 = vst [vmem:[#allocation2 + $0x58] sm:$0xff] %v728
        %745 = vst [vmem:[#allocation2 + $0x60] sm:$0xff] %v729
        %746 = vst [vmem:[#allocation2 + $0x68] sm:$0xff] %v730
        %747 = vst [vmem:[#allocation2 + $0x70] sm:$0xff] %v731
        %748 = vst [vmem:[#allocation2 + $0x78] sm:$0xff] %v732
        %p749 = scmp.eq.s32.totalorder %s27, 1
        // Predicated region
        $region95: #{_lambda_.4} parent=85 // pred_check
          %p750 = pneg %p749
        $region96: #{_lambda_.4} parent=85 // pred_check_branch
          %752 = sbr.rel (%p750) target = $region98
        $region97: #{_lambda_.4} parent=85 // pred_region
          %v753 = vld [vmem:[#allocation2] sm:$0xff]
          %v754 = vld [vmem:[#allocation2 + $0x8] sm:$0xff]
          %v755 = vld [vmem:[#allocation2 + $0x10] sm:$0xff]
          %v756 = vld [vmem:[#allocation2 + $0x18] sm:$0xff]
          %v757 = vld [vmem:[#allocation2 + $0x20] sm:$0xff]
          %v758 = vld [vmem:[#allocation2 + $0x28] sm:$0xff]
          %v759 = vld [vmem:[#allocation2 + $0x30] sm:$0xff]
          %v760 = vld [vmem:[#allocation2 + $0x38] sm:$0xff]
          %v761 = vld [vmem:[#allocation2 + $0x40] sm:$0xff]
          %v762 = vld [vmem:[#allocation2 + $0x48] sm:$0xff]
          %v763 = vld [vmem:[#allocation2 + $0x50] sm:$0xff]
          %v764 = vld [vmem:[#allocation2 + $0x58] sm:$0xff]
          %v765 = vld [vmem:[#allocation2 + $0x60] sm:$0xff]
          %v766 = vld [vmem:[#allocation2 + $0x68] sm:$0xff]
          %v767 = vld [vmem:[#allocation2 + $0x70] sm:$0xff]
          %v768 = vld [vmem:[#allocation2 + $0x78] sm:$0xff]
          %v769 = vld [vmem:[%s487] sm:$0xff]
          %v770 = vld [vmem:[%s487 + $0x8] sm:$0xff]
          %v771 = vld [vmem:[%s487 + $0x10] sm:$0xff]
          %v772 = vld [vmem:[%s487 + $0x18] sm:$0xff]
          %v773 = vld [vmem:[%s487 + $0x20] sm:$0xff]
          %v774 = vld [vmem:[%s487 + $0x28] sm:$0xff]
          %v775 = vld [vmem:[%s487 + $0x30] sm:$0xff]
          %v776 = vld [vmem:[%s487 + $0x38] sm:$0xff]
          %v777 = vld [vmem:[%s487 + $0x40] sm:$0xff]
          %v778 = vld [vmem:[%s487 + $0x48] sm:$0xff]
          %v779 = vld [vmem:[%s487 + $0x50] sm:$0xff]
          %v780 = vld [vmem:[%s487 + $0x58] sm:$0xff]
          %v781 = vld [vmem:[%s487 + $0x60] sm:$0xff]
          %v782 = vld [vmem:[%s487 + $0x68] sm:$0xff]
          %v783 = vld [vmem:[%s487 + $0x70] sm:$0xff]
          %v784 = vld [vmem:[%s487 + $0x78] sm:$0xff]
          %786 = vset.pattern.permute.xlu0 0
          %787 = vperm.xlu0 %786, %v769
          %v788 = vpop.permute.xlu0 %787
          %791 = vset.pattern.permute.xlu0 0
          %792 = vperm.xlu0 %791, %v770
          %v793 = vpop.permute.xlu0 %792
          %796 = vset.pattern.permute.xlu0 0
          %797 = vperm.xlu0 %796, %v771
          %v798 = vpop.permute.xlu0 %797
          %801 = vset.pattern.permute.xlu0 0
          %802 = vperm.xlu0 %801, %v772
          %v803 = vpop.permute.xlu0 %802
          %806 = vset.pattern.permute.xlu0 0
          %807 = vperm.xlu0 %806, %v773
          %v808 = vpop.permute.xlu0 %807
          %811 = vset.pattern.permute.xlu0 0
          %812 = vperm.xlu0 %811, %v774
          %v813 = vpop.permute.xlu0 %812
          %816 = vset.pattern.permute.xlu0 0
          %817 = vperm.xlu0 %816, %v775
          %v818 = vpop.permute.xlu0 %817
          %821 = vset.pattern.permute.xlu0 0
          %822 = vperm.xlu0 %821, %v776
          %v823 = vpop.permute.xlu0 %822
          %826 = vset.pattern.permute.xlu0 0
          %827 = vperm.xlu0 %826, %v777
          %v828 = vpop.permute.xlu0 %827
          %831 = vset.pattern.permute.xlu0 0
          %832 = vperm.xlu0 %831, %v778
          %v833 = vpop.permute.xlu0 %832
          %836 = vset.pattern.permute.xlu0 0
          %837 = vperm.xlu0 %836, %v779
          %v838 = vpop.permute.xlu0 %837
          %841 = vset.pattern.permute.xlu0 0
          %842 = vperm.xlu0 %841, %v780
          %v843 = vpop.permute.xlu0 %842
          %846 = vset.pattern.permute.xlu0 0
          %847 = vperm.xlu0 %846, %v781
          %v848 = vpop.permute.xlu0 %847
          %851 = vset.pattern.permute.xlu0 0
          %852 = vperm.xlu0 %851, %v782
          %v853 = vpop.permute.xlu0 %852
          %856 = vset.pattern.permute.xlu0 0
          %857 = vperm.xlu0 %856, %v783
          %v858 = vpop.permute.xlu0 %857
          %861 = vset.pattern.permute.xlu0 0
          %862 = vperm.xlu0 %861, %v784
          %v863 = vpop.permute.xlu0 %862
          %v865 = vmul.f32 %v753, %v788
          %v866 = vmul.f32 %v754, %v793
          %v867 = vmul.f32 %v755, %v798
          %v868 = vmul.f32 %v756, %v803
          %v869 = vmul.f32 %v757, %v808
          %v870 = vmul.f32 %v758, %v813
          %v871 = vmul.f32 %v759, %v818
          %v872 = vmul.f32 %v760, %v823
          %v873 = vmul.f32 %v761, %v828
          %v874 = vmul.f32 %v762, %v833
          %v875 = vmul.f32 %v763, %v838
          %v876 = vmul.f32 %v764, %v843
          %v877 = vmul.f32 %v765, %v848
          %v878 = vmul.f32 %v766, %v853
          %v879 = vmul.f32 %v767, %v858
          %v880 = vmul.f32 %v768, %v863
          %v881 = vld [vmem:[%s5] sm:$0x1]
          %v883 = vperm.slane %v881, 0
          %v885 = vadd.f32 %v865, %v883
          %v886 = vadd.f32 %v866, %v883
          %v887 = vadd.f32 %v867, %v883
          %v888 = vadd.f32 %v868, %v883
          %v889 = vadd.f32 %v869, %v883
          %v890 = vadd.f32 %v870, %v883
          %v891 = vadd.f32 %v871, %v883
          %v892 = vadd.f32 %v872, %v883
          %v893 = vadd.f32 %v873, %v883
          %v894 = vadd.f32 %v874, %v883
          %v895 = vadd.f32 %v875, %v883
          %v896 = vadd.f32 %v876, %v883
          %v897 = vadd.f32 %v877, %v883
          %v898 = vadd.f32 %v878, %v883
          %v899 = vadd.f32 %v879, %v883
          %v900 = vadd.f32 %v880, %v883
          %v901 = vmax.f32 %v885, 0.0
          %v902 = vmax.f32 %v886, 0.0
          %v903 = vmax.f32 %v887, 0.0
          %v904 = vmax.f32 %v888, 0.0
          %v905 = vmax.f32 %v889, 0.0
          %v906 = vmax.f32 %v890, 0.0
          %v907 = vmax.f32 %v891, 0.0
          %v908 = vmax.f32 %v892, 0.0
          %v909 = vmax.f32 %v893, 0.0
          %v910 = vmax.f32 %v894, 0.0
          %v911 = vmax.f32 %v895, 0.0
          %v912 = vmax.f32 %v896, 0.0
          %v913 = vmax.f32 %v897, 0.0
          %v914 = vmax.f32 %v898, 0.0
          %v915 = vmax.f32 %v899, 0.0
          %v916 = vmax.f32 %v900, 0.0
          %v917 = vld [vmem:[%s493] sm:$0xf]
          %v918 = vld [vmem:[%s493 + $0x4] sm:$0xf]
          %v919 = vld [vmem:[%s493 + $0x8] sm:$0xf]
          %v920 = vld [vmem:[%s493 + $0xc] sm:$0xf]
          %v921 = vld [vmem:[%s493 + $0x10] sm:$0xf]
          %v922 = vld [vmem:[%s493 + $0x14] sm:$0xf]
          %v923 = vld [vmem:[%s493 + $0x18] sm:$0xf]
          %v924 = vld [vmem:[%s493 + $0x1c] sm:$0xf]
          %v925 = vld [vmem:[%s493 + $0x20] sm:$0xf]
          %v926 = vld [vmem:[%s493 + $0x24] sm:$0xf]
          %v927 = vld [vmem:[%s493 + $0x28] sm:$0xf]
          %v928 = vld [vmem:[%s493 + $0x2c] sm:$0xf]
          %v929 = vld [vmem:[%s493 + $0x30] sm:$0xf]
          %v930 = vld [vmem:[%s493 + $0x34] sm:$0xf]
          %v931 = vld [vmem:[%s493 + $0x38] sm:$0xf]
          %v932 = vld [vmem:[%s493 + $0x3c] sm:$0xf]
          %v933 = vunpack.c.l.bf16 %v917
          %v934 = vunpack.c.l.bf16 %v918
          %v935 = vunpack.c.l.bf16 %v919
          %v936 = vunpack.c.l.bf16 %v920
          %v937 = vunpack.c.l.bf16 %v921
          %v938 = vunpack.c.l.bf16 %v922
          %v939 = vunpack.c.l.bf16 %v923
          %v940 = vunpack.c.l.bf16 %v924
          %v941 = vunpack.c.l.bf16 %v925
          %v942 = vunpack.c.l.bf16 %v926
          %v943 = vunpack.c.l.bf16 %v927
          %v944 = vunpack.c.l.bf16 %v928
          %v945 = vunpack.c.l.bf16 %v929
          %v946 = vunpack.c.l.bf16 %v930
          %v947 = vunpack.c.l.bf16 %v931
          %v948 = vunpack.c.l.bf16 %v932
          %v949 = vxor.u32 %v933, 2147483648
          %v950 = vxor.u32 %v934, 2147483648
          %v951 = vxor.u32 %v935, 2147483648
          %v952 = vxor.u32 %v936, 2147483648
          %v953 = vxor.u32 %v937, 2147483648
          %v954 = vxor.u32 %v938, 2147483648
          %v955 = vxor.u32 %v939, 2147483648
          %v956 = vxor.u32 %v940, 2147483648
          %v957 = vxor.u32 %v941, 2147483648
          %v958 = vxor.u32 %v942, 2147483648
          %v959 = vxor.u32 %v943, 2147483648
          %v960 = vxor.u32 %v944, 2147483648
          %v961 = vxor.u32 %v945, 2147483648
          %v962 = vxor.u32 %v946, 2147483648
          %v963 = vxor.u32 %v947, 2147483648
          %v964 = vxor.u32 %v948, 2147483648
          %v965 = vmul.f32 %v949, 1.442695
          %v966 = vpow.pop %v965
          %v967 = vmul.f32 %v950, 1.442695
          %v968 = vpow.pop %v967
          %v969 = vmul.f32 %v951, 1.442695
          %v970 = vpow.pop %v969
          %v971 = vmul.f32 %v952, 1.442695
          %v972 = vpow.pop %v971
          %v973 = vmul.f32 %v953, 1.442695
          %v974 = vpow.pop %v973
          %v975 = vmul.f32 %v954, 1.442695
          %v976 = vpow.pop %v975
          %v977 = vmul.f32 %v955, 1.442695
          %v978 = vpow.pop %v977
          %v979 = vmul.f32 %v956, 1.442695
          %v980 = vpow.pop %v979
          %v981 = vmul.f32 %v957, 1.442695
          %v982 = vpow.pop %v981
          %v983 = vmul.f32 %v958, 1.442695
          %v984 = vpow.pop %v983
          %v985 = vmul.f32 %v959, 1.442695
          %v986 = vpow.pop %v985
          %v987 = vmul.f32 %v960, 1.442695
          %v988 = vpow.pop %v987
          %v989 = vmul.f32 %v961, 1.442695
          %v990 = vpow.pop %v989
          %v991 = vmul.f32 %v962, 1.442695
          %v992 = vpow.pop %v991
          %v993 = vmul.f32 %v963, 1.442695
          %v994 = vpow.pop %v993
          %v995 = vmul.f32 %v964, 1.442695
          %v996 = vpow.pop %v995
          %v997 = vadd.f32 %v966, 1.0
          %v998 = vadd.f32 %v968, 1.0
          %v999 = vadd.f32 %v970, 1.0
          %v1000 = vadd.f32 %v972, 1.0
          %v1001 = vadd.f32 %v974, 1.0
          %v1002 = vadd.f32 %v976, 1.0
          %v1003 = vadd.f32 %v978, 1.0
          %v1004 = vadd.f32 %v980, 1.0
          %v1005 = vadd.f32 %v982, 1.0
          %v1006 = vadd.f32 %v984, 1.0
          %v1007 = vadd.f32 %v986, 1.0
          %v1008 = vadd.f32 %v988, 1.0
          %v1009 = vadd.f32 %v990, 1.0
          %v1010 = vadd.f32 %v992, 1.0
          %v1011 = vadd.f32 %v994, 1.0
          %v1012 = vadd.f32 %v996, 1.0
          %v1013 = vrcp.pop %v997
          %v1014 = vmul.f32 %v997, %v1013
          %v1015 = vsub.f32 1.0, %v1014
          %v1016 = vmul.f32 %v1013, %v1015
          %v1017 = vadd.f32 %v1013, %v1016
          %vm1018 = vweird.f32 %v997
          %vm1019 = vweird.f32 %v1013
          %vm1020 = vmor %vm1018, %vm1019
          %v1021 = vsel %vm1020, %v1013, %v1017
          %v1022 = vand.u32 2147483647, %v997
          %vm1023 = vcmp.eq.f32.partialorder %v1022, 8.507059e+37
          %v1024 = vand.u32 %v997, 2147483648
          %v1025 = vor.u32 1.1754944e-38, %v1024
          %v1026 = vsel %vm1023, %v1025, %v1021
          %v1027 = vmul.f32 1.0, %v1026
          %v1028 = vrcp.pop %v998
          %v1029 = vmul.f32 %v998, %v1028
          %v1030 = vsub.f32 1.0, %v1029
          %v1031 = vmul.f32 %v1028, %v1030
          %v1032 = vadd.f32 %v1028, %v1031
          %vm1033 = vweird.f32 %v998
          %vm1034 = vweird.f32 %v1028
          %vm1035 = vmor %vm1033, %vm1034
          %v1036 = vsel %vm1035, %v1028, %v1032
          %v1037 = vand.u32 2147483647, %v998
          %vm1038 = vcmp.eq.f32.partialorder %v1037, 8.507059e+37
          %v1039 = vand.u32 %v998, 2147483648
          %v1040 = vor.u32 1.1754944e-38, %v1039
          %v1041 = vsel %vm1038, %v1040, %v1036
          %v1042 = vmul.f32 1.0, %v1041
          %v1043 = vrcp.pop %v999
          %v1044 = vmul.f32 %v999, %v1043
          %v1045 = vsub.f32 1.0, %v1044
          %v1046 = vmul.f32 %v1043, %v1045
          %v1047 = vadd.f32 %v1043, %v1046
          %vm1048 = vweird.f32 %v999
          %vm1049 = vweird.f32 %v1043
          %vm1050 = vmor %vm1048, %vm1049
          %v1051 = vsel %vm1050, %v1043, %v1047
          %v1052 = vand.u32 2147483647, %v999
          %vm1053 = vcmp.eq.f32.partialorder %v1052, 8.507059e+37
          %v1054 = vand.u32 %v999, 2147483648
          %v1055 = vor.u32 1.1754944e-38, %v1054
          %v1056 = vsel %vm1053, %v1055, %v1051
          %v1057 = vmul.f32 1.0, %v1056
          %v1058 = vrcp.pop %v1000
          %v1059 = vmul.f32 %v1000, %v1058
          %v1060 = vsub.f32 1.0, %v1059
          %v1061 = vmul.f32 %v1058, %v1060
          %v1062 = vadd.f32 %v1058, %v1061
          %vm1063 = vweird.f32 %v1000
          %vm1064 = vweird.f32 %v1058
          %vm1065 = vmor %vm1063, %vm1064
          %v1066 = vsel %vm1065, %v1058, %v1062
          %v1067 = vand.u32 2147483647, %v1000
          %vm1068 = vcmp.eq.f32.partialorder %v1067, 8.507059e+37
          %v1069 = vand.u32 %v1000, 2147483648
          %v1070 = vor.u32 1.1754944e-38, %v1069
          %v1071 = vsel %vm1068, %v1070, %v1066
          %v1072 = vmul.f32 1.0, %v1071
          %v1073 = vrcp.pop %v1001
          %v1074 = vmul.f32 %v1001, %v1073
          %v1075 = vsub.f32 1.0, %v1074
          %v1076 = vmul.f32 %v1073, %v1075
          %v1077 = vadd.f32 %v1073, %v1076
          %vm1078 = vweird.f32 %v1001
          %vm1079 = vweird.f32 %v1073
          %vm1080 = vmor %vm1078, %vm1079
          %v1081 = vsel %vm1080, %v1073, %v1077
          %v1082 = vand.u32 2147483647, %v1001
          %vm1083 = vcmp.eq.f32.partialorder %v1082, 8.507059e+37
          %v1084 = vand.u32 %v1001, 2147483648
          %v1085 = vor.u32 1.1754944e-38, %v1084
          %v1086 = vsel %vm1083, %v1085, %v1081
          %v1087 = vmul.f32 1.0, %v1086
          %v1088 = vrcp.pop %v1002
          %v1089 = vmul.f32 %v1002, %v1088
          %v1090 = vsub.f32 1.0, %v1089
          %v1091 = vmul.f32 %v1088, %v1090
          %v1092 = vadd.f32 %v1088, %v1091
          %vm1093 = vweird.f32 %v1002
          %vm1094 = vweird.f32 %v1088
          %vm1095 = vmor %vm1093, %vm1094
          %v1096 = vsel %vm1095, %v1088, %v1092
          %v1097 = vand.u32 2147483647, %v1002
          %vm1098 = vcmp.eq.f32.partialorder %v1097, 8.507059e+37
          %v1099 = vand.u32 %v1002, 2147483648
          %v1100 = vor.u32 1.1754944e-38, %v1099
          %v1101 = vsel %vm1098, %v1100, %v1096
          %v1102 = vmul.f32 1.0, %v1101
          %v1103 = vrcp.pop %v1003
          %v1104 = vmul.f32 %v1003, %v1103
          %v1105 = vsub.f32 1.0, %v1104
          %v1106 = vmul.f32 %v1103, %v1105
          %v1107 = vadd.f32 %v1103, %v1106
          %vm1108 = vweird.f32 %v1003
          %vm1109 = vweird.f32 %v1103
          %vm1110 = vmor %vm1108, %vm1109
          %v1111 = vsel %vm1110, %v1103, %v1107
          %v1112 = vand.u32 2147483647, %v1003
          %vm1113 = vcmp.eq.f32.partialorder %v1112, 8.507059e+37
          %v1114 = vand.u32 %v1003, 2147483648
          %v1115 = vor.u32 1.1754944e-38, %v1114
          %v1116 = vsel %vm1113, %v1115, %v1111
          %v1117 = vmul.f32 1.0, %v1116
          %v1118 = vrcp.pop %v1004
          %v1119 = vmul.f32 %v1004, %v1118
          %v1120 = vsub.f32 1.0, %v1119
          %v1121 = vmul.f32 %v1118, %v1120
          %v1122 = vadd.f32 %v1118, %v1121
          %vm1123 = vweird.f32 %v1004
          %vm1124 = vweird.f32 %v1118
          %vm1125 = vmor %vm1123, %vm1124
          %v1126 = vsel %vm1125, %v1118, %v1122
          %v1127 = vand.u32 2147483647, %v1004
          %vm1128 = vcmp.eq.f32.partialorder %v1127, 8.507059e+37
          %v1129 = vand.u32 %v1004, 2147483648
          %v1130 = vor.u32 1.1754944e-38, %v1129
          %v1131 = vsel %vm1128, %v1130, %v1126
          %v1132 = vmul.f32 1.0, %v1131
          %v1133 = vrcp.pop %v1005
          %v1134 = vmul.f32 %v1005, %v1133
          %v1135 = vsub.f32 1.0, %v1134
          %v1136 = vmul.f32 %v1133, %v1135
          %v1137 = vadd.f32 %v1133, %v1136
          %vm1138 = vweird.f32 %v1005
          %vm1139 = vweird.f32 %v1133
          %vm1140 = vmor %vm1138, %vm1139
          %v1141 = vsel %vm1140, %v1133, %v1137
          %v1142 = vand.u32 2147483647, %v1005
          %vm1143 = vcmp.eq.f32.partialorder %v1142, 8.507059e+37
          %v1144 = vand.u32 %v1005, 2147483648
          %v1145 = vor.u32 1.1754944e-38, %v1144
          %v1146 = vsel %vm1143, %v1145, %v1141
          %v1147 = vmul.f32 1.0, %v1146
          %v1148 = vrcp.pop %v1006
          %v1149 = vmul.f32 %v1006, %v1148
          %v1150 = vsub.f32 1.0, %v1149
          %v1151 = vmul.f32 %v1148, %v1150
          %v1152 = vadd.f32 %v1148, %v1151
          %vm1153 = vweird.f32 %v1006
          %vm1154 = vweird.f32 %v1148
          %vm1155 = vmor %vm1153, %vm1154
          %v1156 = vsel %vm1155, %v1148, %v1152
          %v1157 = vand.u32 2147483647, %v1006
          %vm1158 = vcmp.eq.f32.partialorder %v1157, 8.507059e+37
          %v1159 = vand.u32 %v1006, 2147483648
          %v1160 = vor.u32 1.1754944e-38, %v1159
          %v1161 = vsel %vm1158, %v1160, %v1156
          %v1162 = vmul.f32 1.0, %v1161
          %v1163 = vrcp.pop %v1007
          %v1164 = vmul.f32 %v1007, %v1163
          %v1165 = vsub.f32 1.0, %v1164
          %v1166 = vmul.f32 %v1163, %v1165
          %v1167 = vadd.f32 %v1163, %v1166
          %vm1168 = vweird.f32 %v1007
          %vm1169 = vweird.f32 %v1163
          %vm1170 = vmor %vm1168, %vm1169
          %v1171 = vsel %vm1170, %v1163, %v1167
          %v1172 = vand.u32 2147483647, %v1007
          %vm1173 = vcmp.eq.f32.partialorder %v1172, 8.507059e+37
          %v1174 = vand.u32 %v1007, 2147483648
          %v1175 = vor.u32 1.1754944e-38, %v1174
          %v1176 = vsel %vm1173, %v1175, %v1171
          %v1177 = vmul.f32 1.0, %v1176
          %v1178 = vrcp.pop %v1008
          %v1179 = vmul.f32 %v1008, %v1178
          %v1180 = vsub.f32 1.0, %v1179
          %v1181 = vmul.f32 %v1178, %v1180
          %v1182 = vadd.f32 %v1178, %v1181
          %vm1183 = vweird.f32 %v1008
          %vm1184 = vweird.f32 %v1178
          %vm1185 = vmor %vm1183, %vm1184
          %v1186 = vsel %vm1185, %v1178, %v1182
          %v1187 = vand.u32 2147483647, %v1008
          %vm1188 = vcmp.eq.f32.partialorder %v1187, 8.507059e+37
          %v1189 = vand.u32 %v1008, 2147483648
          %v1190 = vor.u32 1.1754944e-38, %v1189
          %v1191 = vsel %vm1188, %v1190, %v1186
          %v1192 = vmul.f32 1.0, %v1191
          %v1193 = vrcp.pop %v1009
          %v1194 = vmul.f32 %v1009, %v1193
          %v1195 = vsub.f32 1.0, %v1194
          %v1196 = vmul.f32 %v1193, %v1195
          %v1197 = vadd.f32 %v1193, %v1196
          %vm1198 = vweird.f32 %v1009
          %vm1199 = vweird.f32 %v1193
          %vm1200 = vmor %vm1198, %vm1199
          %v1201 = vsel %vm1200, %v1193, %v1197
          %v1202 = vand.u32 2147483647, %v1009
          %vm1203 = vcmp.eq.f32.partialorder %v1202, 8.507059e+37
          %v1204 = vand.u32 %v1009, 2147483648
          %v1205 = vor.u32 1.1754944e-38, %v1204
          %v1206 = vsel %vm1203, %v1205, %v1201
          %v1207 = vmul.f32 1.0, %v1206
          %v1208 = vrcp.pop %v1010
          %v1209 = vmul.f32 %v1010, %v1208
          %v1210 = vsub.f32 1.0, %v1209
          %v1211 = vmul.f32 %v1208, %v1210
          %v1212 = vadd.f32 %v1208, %v1211
          %vm1213 = vweird.f32 %v1010
          %vm1214 = vweird.f32 %v1208
          %vm1215 = vmor %vm1213, %vm1214
          %v1216 = vsel %vm1215, %v1208, %v1212
          %v1217 = vand.u32 2147483647, %v1010
          %vm1218 = vcmp.eq.f32.partialorder %v1217, 8.507059e+37
          %v1219 = vand.u32 %v1010, 2147483648
          %v1220 = vor.u32 1.1754944e-38, %v1219
          %v1221 = vsel %vm1218, %v1220, %v1216
          %v1222 = vmul.f32 1.0, %v1221
          %v1223 = vrcp.pop %v1011
          %v1224 = vmul.f32 %v1011, %v1223
          %v1225 = vsub.f32 1.0, %v1224
          %v1226 = vmul.f32 %v1223, %v1225
          %v1227 = vadd.f32 %v1223, %v1226
          %vm1228 = vweird.f32 %v1011
          %vm1229 = vweird.f32 %v1223
          %vm1230 = vmor %vm1228, %vm1229
          %v1231 = vsel %vm1230, %v1223, %v1227
          %v1232 = vand.u32 2147483647, %v1011
          %vm1233 = vcmp.eq.f32.partialorder %v1232, 8.507059e+37
          %v1234 = vand.u32 %v1011, 2147483648
          %v1235 = vor.u32 1.1754944e-38, %v1234
          %v1236 = vsel %vm1233, %v1235, %v1231
          %v1237 = vmul.f32 1.0, %v1236
          %v1238 = vrcp.pop %v1012
          %v1239 = vmul.f32 %v1012, %v1238
          %v1240 = vsub.f32 1.0, %v1239
          %v1241 = vmul.f32 %v1238, %v1240
          %v1242 = vadd.f32 %v1238, %v1241
          %vm1243 = vweird.f32 %v1012
          %vm1244 = vweird.f32 %v1238
          %vm1245 = vmor %vm1243, %vm1244
          %v1246 = vsel %vm1245, %v1238, %v1242
          %v1247 = vand.u32 2147483647, %v1012
          %vm1248 = vcmp.eq.f32.partialorder %v1247, 8.507059e+37
          %v1249 = vand.u32 %v1012, 2147483648
          %v1250 = vor.u32 1.1754944e-38, %v1249
          %v1251 = vsel %vm1248, %v1250, %v1246
          %v1252 = vmul.f32 1.0, %v1251
          %v1253 = vmul.f32 %v1027, %v901
          %v1254 = vmul.f32 %v1042, %v902
          %v1255 = vmul.f32 %v1057, %v903
          %v1256 = vmul.f32 %v1072, %v904
          %v1257 = vmul.f32 %v1087, %v905
          %v1258 = vmul.f32 %v1102, %v906
          %v1259 = vmul.f32 %v1117, %v907
          %v1260 = vmul.f32 %v1132, %v908
          %v1261 = vmul.f32 %v1147, %v909
          %v1262 = vmul.f32 %v1162, %v910
          %v1263 = vmul.f32 %v1177, %v911
          %v1264 = vmul.f32 %v1192, %v912
          %v1265 = vmul.f32 %v1207, %v913
          %v1266 = vmul.f32 %v1222, %v914
          %v1267 = vmul.f32 %v1237, %v915
          %v1268 = vmul.f32 %v1252, %v916
          %v1269 = vsub.f32 1.0, %v1027
          %v1270 = vsub.f32 1.0, %v1042
          %v1271 = vsub.f32 1.0, %v1057
          %v1272 = vsub.f32 1.0, %v1072
          %v1273 = vsub.f32 1.0, %v1087
          %v1274 = vsub.f32 1.0, %v1102
          %v1275 = vsub.f32 1.0, %v1117
          %v1276 = vsub.f32 1.0, %v1132
          %v1277 = vsub.f32 1.0, %v1147
          %v1278 = vsub.f32 1.0, %v1162
          %v1279 = vsub.f32 1.0, %v1177
          %v1280 = vsub.f32 1.0, %v1192
          %v1281 = vsub.f32 1.0, %v1207
          %v1282 = vsub.f32 1.0, %v1222
          %v1283 = vsub.f32 1.0, %v1237
          %v1284 = vsub.f32 1.0, %v1252
          %v1285 = vld [vmem:[%s499] sm:$0xff]
          %v1286 = vld [vmem:[%s499 + $0x8] sm:$0xff]
          %v1287 = vld [vmem:[%s499 + $0x10] sm:$0xff]
          %v1288 = vld [vmem:[%s499 + $0x18] sm:$0xff]
          %v1289 = vld [vmem:[%s499 + $0x20] sm:$0xff]
          %v1290 = vld [vmem:[%s499 + $0x28] sm:$0xff]
          %v1291 = vld [vmem:[%s499 + $0x30] sm:$0xff]
          %v1292 = vld [vmem:[%s499 + $0x38] sm:$0xff]
          %v1293 = vld [vmem:[%s499 + $0x40] sm:$0xff]
          %v1294 = vld [vmem:[%s499 + $0x48] sm:$0xff]
          %v1295 = vld [vmem:[%s499 + $0x50] sm:$0xff]
          %v1296 = vld [vmem:[%s499 + $0x58] sm:$0xff]
          %v1297 = vld [vmem:[%s499 + $0x60] sm:$0xff]
          %v1298 = vld [vmem:[%s499 + $0x68] sm:$0xff]
          %v1299 = vld [vmem:[%s499 + $0x70] sm:$0xff]
          %v1300 = vld [vmem:[%s499 + $0x78] sm:$0xff]
          %v1301 = vmul.f32 %v1269, %v1285
          %v1302 = vmul.f32 %v1270, %v1286
          %v1303 = vmul.f32 %v1271, %v1287
          %v1304 = vmul.f32 %v1272, %v1288
          %v1305 = vmul.f32 %v1273, %v1289
          %v1306 = vmul.f32 %v1274, %v1290
          %v1307 = vmul.f32 %v1275, %v1291
          %v1308 = vmul.f32 %v1276, %v1292
          %v1309 = vmul.f32 %v1277, %v1293
          %v1310 = vmul.f32 %v1278, %v1294
          %v1311 = vmul.f32 %v1279, %v1295
          %v1312 = vmul.f32 %v1280, %v1296
          %v1313 = vmul.f32 %v1281, %v1297
          %v1314 = vmul.f32 %v1282, %v1298
          %v1315 = vmul.f32 %v1283, %v1299
          %v1316 = vmul.f32 %v1284, %v1300
          %v1317 = vadd.f32 %v1253, %v1301
          %v1318 = vadd.f32 %v1254, %v1302
          %v1319 = vadd.f32 %v1255, %v1303
          %v1320 = vadd.f32 %v1256, %v1304
          %v1321 = vadd.f32 %v1257, %v1305
          %v1322 = vadd.f32 %v1258, %v1306
          %v1323 = vadd.f32 %v1259, %v1307
          %v1324 = vadd.f32 %v1260, %v1308
          %v1325 = vadd.f32 %v1261, %v1309
          %v1326 = vadd.f32 %v1262, %v1310
          %v1327 = vadd.f32 %v1263, %v1311
          %v1328 = vadd.f32 %v1264, %v1312
          %v1329 = vadd.f32 %v1265, %v1313
          %v1330 = vadd.f32 %v1266, %v1314
          %v1331 = vadd.f32 %v1267, %v1315
          %v1332 = vadd.f32 %v1268, %v1316
          %1333 = vst [vmem:[%s505] sm:$0xff] %v1317
          %1334 = vst [vmem:[%s505 + $0x8] sm:$0xff] %v1318
          %1335 = vst [vmem:[%s505 + $0x10] sm:$0xff] %v1319
          %1336 = vst [vmem:[%s505 + $0x18] sm:$0xff] %v1320
          %1337 = vst [vmem:[%s505 + $0x20] sm:$0xff] %v1321
          %1338 = vst [vmem:[%s505 + $0x28] sm:$0xff] %v1322
          %1339 = vst [vmem:[%s505 + $0x30] sm:$0xff] %v1323
          %1340 = vst [vmem:[%s505 + $0x38] sm:$0xff] %v1324
          %1341 = vst [vmem:[%s505 + $0x40] sm:$0xff] %v1325
          %1342 = vst [vmem:[%s505 + $0x48] sm:$0xff] %v1326
          %1343 = vst [vmem:[%s505 + $0x50] sm:$0xff] %v1327
          %1344 = vst [vmem:[%s505 + $0x58] sm:$0xff] %v1328
          %1345 = vst [vmem:[%s505 + $0x60] sm:$0xff] %v1329
          %1346 = vst [vmem:[%s505 + $0x68] sm:$0xff] %v1330
          %1347 = vst [vmem:[%s505 + $0x70] sm:$0xff] %v1331
          %1348 = vst [vmem:[%s505 + $0x78] sm:$0xff] %v1332
          %v1349 = vpack.c.bf16 %v1318, %v1317
          %v1350 = vpack.c.bf16 %v1320, %v1319
          %v1351 = vpack.c.bf16 %v1322, %v1321
          %v1352 = vpack.c.bf16 %v1324, %v1323
          %v1353 = vpack.c.bf16 %v1326, %v1325
          %v1354 = vpack.c.bf16 %v1328, %v1327
          %v1355 = vpack.c.bf16 %v1330, %v1329
          %v1356 = vpack.c.bf16 %v1332, %v1331
          %v1357 = vld [vmem:[%s6] sm:$0xff]
          %v1358 = vld [vmem:[%s6 + $0x8] sm:$0xff]
          %v1359 = vld [vmem:[%s6 + $0x10] sm:$0xff]
          %v1360 = vld [vmem:[%s6 + $0x18] sm:$0xff]
          %v1361 = vld [vmem:[%s6 + $0x20] sm:$0xff]
          %v1362 = vld [vmem:[%s6 + $0x28] sm:$0xff]
          %v1363 = vld [vmem:[%s6 + $0x30] sm:$0xff]
          %v1364 = vld [vmem:[%s6 + $0x38] sm:$0xff]
          %v1365 = vld [vmem:[%s6 + $0x40] sm:$0xff]
          %v1366 = vld [vmem:[%s6 + $0x48] sm:$0xff]
          %v1367 = vld [vmem:[%s6 + $0x50] sm:$0xff]
          %v1368 = vld [vmem:[%s6 + $0x58] sm:$0xff]
          %v1369 = vld [vmem:[%s6 + $0x60] sm:$0xff]
          %v1370 = vld [vmem:[%s6 + $0x68] sm:$0xff]
          %v1371 = vld [vmem:[%s6 + $0x70] sm:$0xff]
          %v1372 = vld [vmem:[%s6 + $0x78] sm:$0xff]
          %v1389 = vunpack.c.l.b16 %v1357
          %v1390 = vunpack.c.h.b16 %v1357
          %v1391 = vunpack.c.l.b16 %v1358
          %v1392 = vunpack.c.h.b16 %v1358
          %v1393 = vunpack.c.l.b16 %v1359
          %v1394 = vunpack.c.h.b16 %v1359
          %v1395 = vunpack.c.l.b16 %v1360
          %v1396 = vunpack.c.h.b16 %v1360
          %v1397 = vunpack.c.l.b16 %v1361
          %v1398 = vunpack.c.h.b16 %v1361
          %v1399 = vunpack.c.l.b16 %v1362
          %v1400 = vunpack.c.h.b16 %v1362
          %v1401 = vunpack.c.l.b16 %v1363
          %v1402 = vunpack.c.h.b16 %v1363
          %v1403 = vunpack.c.l.b16 %v1364
          %v1404 = vunpack.c.h.b16 %v1364
          %v1405 = vunpack.c.l.b16 %v1365
          %v1406 = vunpack.c.h.b16 %v1365
          %v1407 = vunpack.c.l.b16 %v1366
          %v1408 = vunpack.c.h.b16 %v1366
          %v1409 = vunpack.c.l.b16 %v1367
          %v1410 = vunpack.c.h.b16 %v1367
          %v1411 = vunpack.c.l.b16 %v1368
          %v1412 = vunpack.c.h.b16 %v1368
          %v1413 = vunpack.c.l.b16 %v1369
          %v1414 = vunpack.c.h.b16 %v1369
          %v1415 = vunpack.c.l.b16 %v1370
          %v1416 = vunpack.c.h.b16 %v1370
          %v1417 = vunpack.c.l.b16 %v1371
          %v1418 = vunpack.c.h.b16 %v1371
          %v1419 = vunpack.c.l.b16 %v1372
          %v1420 = vunpack.c.h.b16 %v1372
          %v1421 = vpack.c.b16 %v1391, %v1389
          %v1422 = vpack.c.b16 %v1392, %v1390
          %v1423 = vpack.c.b16 %v1395, %v1393
          %v1424 = vpack.c.b16 %v1396, %v1394
          %v1425 = vpack.c.b16 %v1399, %v1397
          %v1426 = vpack.c.b16 %v1400, %v1398
          %v1427 = vpack.c.b16 %v1403, %v1401
          %v1428 = vpack.c.b16 %v1404, %v1402
          %v1429 = vpack.c.b16 %v1407, %v1405
          %v1430 = vpack.c.b16 %v1408, %v1406
          %v1431 = vpack.c.b16 %v1411, %v1409
          %v1432 = vpack.c.b16 %v1412, %v1410
          %v1433 = vpack.c.b16 %v1415, %v1413
          %v1434 = vpack.c.b16 %v1416, %v1414
          %v1435 = vpack.c.b16 %v1419, %v1417
          %v1436 = vpack.c.b16 %v1420, %v1418
          %1453 = vmatpush.bf16.msra.mxu0 %v1435
          %1454 = vmatpush.bf16.msra.mxu0 %v1433
          %1455 = vmatpush.bf16.msra.mxu0 %v1431
          %1456 = vmatpush.bf16.msra.mxu0 %v1429
          %1457 = vmatpush.bf16.msra.mxu0 %v1427
          %1458 = vmatpush.bf16.msra.mxu0 %v1425
          %1459 = vmatpush.bf16.msra.mxu0 %v1423
          %1460 = vmatpush.bf16.msra.mxu0 %v1421
          %1461 = vmatmul.bf16.gmra.mxu0 %v1349
          %v1462 = vpop.f32.mrf.mxu0
          %v1463 = vadd.f32 0.0, %v1462
          %v1464 = vpop.f32.mrf.mxu0
          %v1465 = vadd.f32 0.0, %v1464
          %1466 = vmatmul.bf16.gmra.mxu0 %v1350
          %v1467 = vpop.f32.mrf.mxu0
          %v1468 = vadd.f32 0.0, %v1467
          %v1469 = vpop.f32.mrf.mxu0
          %v1470 = vadd.f32 0.0, %v1469
          %1471 = vmatmul.bf16.gmra.mxu0 %v1351
          %v1472 = vpop.f32.mrf.mxu0
          %v1473 = vadd.f32 0.0, %v1472
          %v1474 = vpop.f32.mrf.mxu0
          %v1475 = vadd.f32 0.0, %v1474
          %1476 = vmatmul.bf16.gmra.mxu0 %v1352
          %v1477 = vpop.f32.mrf.mxu0
          %v1478 = vadd.f32 0.0, %v1477
          %v1479 = vpop.f32.mrf.mxu0
          %v1480 = vadd.f32 0.0, %v1479
          %1481 = vmatmul.bf16.gmra.mxu0 %v1353
          %v1482 = vpop.f32.mrf.mxu0
          %v1483 = vadd.f32 0.0, %v1482
          %v1484 = vpop.f32.mrf.mxu0
          %v1485 = vadd.f32 0.0, %v1484
          %1486 = vmatmul.bf16.gmra.mxu0 %v1354
          %v1487 = vpop.f32.mrf.mxu0
          %v1488 = vadd.f32 0.0, %v1487
          %v1489 = vpop.f32.mrf.mxu0
          %v1490 = vadd.f32 0.0, %v1489
          %1491 = vmatmul.bf16.gmra.mxu0 %v1355
          %v1492 = vpop.f32.mrf.mxu0
          %v1493 = vadd.f32 0.0, %v1492
          %v1494 = vpop.f32.mrf.mxu0
          %v1495 = vadd.f32 0.0, %v1494
          %1496 = vmatmul.bf16.gmra.mxu0 %v1356
          %v1497 = vpop.f32.mrf.mxu0
          %v1498 = vadd.f32 0.0, %v1497
          %v1499 = vpop.f32.mrf.mxu0
          %v1500 = vadd.f32 0.0, %v1499
          %1501 = vdwg.mxu0
          %1502 = vmatpush.bf16.msra.mxu0 %v1436
          %1503 = vmatpush.bf16.msra.mxu0 %v1434
          %1504 = vmatpush.bf16.msra.mxu0 %v1432
          %1505 = vmatpush.bf16.msra.mxu0 %v1430
          %1506 = vmatpush.bf16.msra.mxu0 %v1428
          %1507 = vmatpush.bf16.msra.mxu0 %v1426
          %1508 = vmatpush.bf16.msra.mxu0 %v1424
          %1509 = vmatpush.bf16.msra.mxu0 %v1422
          %1510 = vmatmul.bf16.gmra.mxu0 %v1349
          %v1511 = vpop.f32.mrf.mxu0
          %v1512 = vadd.f32 0.0, %v1511
          %v1513 = vpop.f32.mrf.mxu0
          %v1514 = vadd.f32 0.0, %v1513
          %1515 = vmatmul.bf16.gmra.mxu0 %v1350
          %v1516 = vpop.f32.mrf.mxu0
          %v1517 = vadd.f32 0.0, %v1516
          %v1518 = vpop.f32.mrf.mxu0
          %v1519 = vadd.f32 0.0, %v1518
          %1520 = vmatmul.bf16.gmra.mxu0 %v1351
          %v1521 = vpop.f32.mrf.mxu0
          %v1522 = vadd.f32 0.0, %v1521
          %v1523 = vpop.f32.mrf.mxu0
          %v1524 = vadd.f32 0.0, %v1523
          %1525 = vmatmul.bf16.gmra.mxu0 %v1352
          %v1526 = vpop.f32.mrf.mxu0
          %v1527 = vadd.f32 0.0, %v1526
          %v1528 = vpop.f32.mrf.mxu0
          %v1529 = vadd.f32 0.0, %v1528
          %1530 = vmatmul.bf16.gmra.mxu0 %v1353
          %v1531 = vpop.f32.mrf.mxu0
          %v1532 = vadd.f32 0.0, %v1531
          %v1533 = vpop.f32.mrf.mxu0
          %v1534 = vadd.f32 0.0, %v1533
          %1535 = vmatmul.bf16.gmra.mxu0 %v1354
          %v1536 = vpop.f32.mrf.mxu0
          %v1537 = vadd.f32 0.0, %v1536
          %v1538 = vpop.f32.mrf.mxu0
          %v1539 = vadd.f32 0.0, %v1538
          %1540 = vmatmul.bf16.gmra.mxu0 %v1355
          %v1541 = vpop.f32.mrf.mxu0
          %v1542 = vadd.f32 0.0, %v1541
          %v1543 = vpop.f32.mrf.mxu0
          %v1544 = vadd.f32 0.0, %v1543
          %1545 = vmatmul.bf16.gmra.mxu0 %v1356
          %v1546 = vpop.f32.mrf.mxu0
          %v1547 = vadd.f32 0.0, %v1546
          %v1548 = vpop.f32.mrf.mxu0
          %v1549 = vadd.f32 0.0, %v1548
          %1550 = vdwg.mxu0
          %v1551 = vpack.c.bf16 %v1463, %v1463
          %v1552 = vpack.c.bf16 %v1465, %v1465
          %v1553 = vpack.c.bf16 %v1468, %v1468
          %v1554 = vpack.c.bf16 %v1470, %v1470
          %v1555 = vpack.c.bf16 %v1473, %v1473
          %v1556 = vpack.c.bf16 %v1475, %v1475
          %v1557 = vpack.c.bf16 %v1478, %v1478
          %v1558 = vpack.c.bf16 %v1480, %v1480
          %v1559 = vpack.c.bf16 %v1483, %v1483
          %v1560 = vpack.c.bf16 %v1485, %v1485
          %v1561 = vpack.c.bf16 %v1488, %v1488
          %v1562 = vpack.c.bf16 %v1490, %v1490
          %v1563 = vpack.c.bf16 %v1493, %v1493
          %v1564 = vpack.c.bf16 %v1495, %v1495
          %v1565 = vpack.c.bf16 %v1498, %v1498
          %v1566 = vpack.c.bf16 %v1500, %v1500
          %1567 = vst [vmem:[%s511] sm:$0xf] %v1551
          %1568 = vst [vmem:[%s511 + $0x4] sm:$0xf] %v1552
          %1569 = vst [vmem:[%s511 + $0x8] sm:$0xf] %v1553
          %1570 = vst [vmem:[%s511 + $0xc] sm:$0xf] %v1554
          %1571 = vst [vmem:[%s511 + $0x10] sm:$0xf] %v1555
          %1572 = vst [vmem:[%s511 + $0x14] sm:$0xf] %v1556
          %1573 = vst [vmem:[%s511 + $0x18] sm:$0xf] %v1557
          %1574 = vst [vmem:[%s511 + $0x1c] sm:$0xf] %v1558
          %1575 = vst [vmem:[%s511 + $0x20] sm:$0xf] %v1559
          %1576 = vst [vmem:[%s511 + $0x24] sm:$0xf] %v1560
          %1577 = vst [vmem:[%s511 + $0x28] sm:$0xf] %v1561
          %1578 = vst [vmem:[%s511 + $0x2c] sm:$0xf] %v1562
          %1579 = vst [vmem:[%s511 + $0x30] sm:$0xf] %v1563
          %1580 = vst [vmem:[%s511 + $0x34] sm:$0xf] %v1564
          %1581 = vst [vmem:[%s511 + $0x38] sm:$0xf] %v1565
          %1582 = vst [vmem:[%s511 + $0x3c] sm:$0xf] %v1566
          %v1583 = vld [vmem:[%s7] sm:$0x1]
          %v1585 = vperm.slane %v1583, 0
          %v1587 = vadd.f32 %v1512, %v1585
          %v1588 = vadd.f32 %v1514, %v1585
          %v1589 = vadd.f32 %v1517, %v1585
          %v1590 = vadd.f32 %v1519, %v1585
          %v1591 = vadd.f32 %v1522, %v1585
          %v1592 = vadd.f32 %v1524, %v1585
          %v1593 = vadd.f32 %v1527, %v1585
          %v1594 = vadd.f32 %v1529, %v1585
          %v1595 = vadd.f32 %v1532, %v1585
          %v1596 = vadd.f32 %v1534, %v1585
          %v1597 = vadd.f32 %v1537, %v1585
          %v1598 = vadd.f32 %v1539, %v1585
          %v1599 = vadd.f32 %v1542, %v1585
          %v1600 = vadd.f32 %v1544, %v1585
          %v1601 = vadd.f32 %v1547, %v1585
          %v1602 = vadd.f32 %v1549, %v1585
          %v1603 = vpack.c.bf16 %v1587, %v1587
          %v1604 = vpack.c.bf16 %v1588, %v1588
          %v1605 = vpack.c.bf16 %v1589, %v1589
          %v1606 = vpack.c.bf16 %v1590, %v1590
          %v1607 = vpack.c.bf16 %v1591, %v1591
          %v1608 = vpack.c.bf16 %v1592, %v1592
          %v1609 = vpack.c.bf16 %v1593, %v1593
          %v1610 = vpack.c.bf16 %v1594, %v1594
          %v1611 = vpack.c.bf16 %v1595, %v1595
          %v1612 = vpack.c.bf16 %v1596, %v1596
          %v1613 = vpack.c.bf16 %v1597, %v1597
          %v1614 = vpack.c.bf16 %v1598, %v1598
          %v1615 = vpack.c.bf16 %v1599, %v1599
          %v1616 = vpack.c.bf16 %v1600, %v1600
          %v1617 = vpack.c.bf16 %v1601, %v1601
          %v1618 = vpack.c.bf16 %v1602, %v1602
          %1619 = vst [vmem:[%s517] sm:$0xf] %v1603
          %1620 = vst [vmem:[%s517 + $0x4] sm:$0xf] %v1604
          %1621 = vst [vmem:[%s517 + $0x8] sm:$0xf] %v1605
          %1622 = vst [vmem:[%s517 + $0xc] sm:$0xf] %v1606
          %1623 = vst [vmem:[%s517 + $0x10] sm:$0xf] %v1607
          %1624 = vst [vmem:[%s517 + $0x14] sm:$0xf] %v1608
          %1625 = vst [vmem:[%s517 + $0x18] sm:$0xf] %v1609
          %1626 = vst [vmem:[%s517 + $0x1c] sm:$0xf] %v1610
          %1627 = vst [vmem:[%s517 + $0x20] sm:$0xf] %v1611
          %1628 = vst [vmem:[%s517 + $0x24] sm:$0xf] %v1612
          %1629 = vst [vmem:[%s517 + $0x28] sm:$0xf] %v1613
          %1630 = vst [vmem:[%s517 + $0x2c] sm:$0xf] %v1614
          %1631 = vst [vmem:[%s517 + $0x30] sm:$0xf] %v1615
          %1632 = vst [vmem:[%s517 + $0x34] sm:$0xf] %v1616
          %1633 = vst [vmem:[%s517 + $0x38] sm:$0xf] %v1617
          %1634 = vst [vmem:[%s517 + $0x3c] sm:$0xf] %v1618
        $region98: #{_lambda_.4} parent=85 // pred_fallthru
          _
        %s1635 = smul.u32 16, %s26
        %p1636 = scmp.lt.s32.totalorder %s1635, 31
        %s1637 = scalar_select %p1636, %s1635, 31
        %s1638 = smul.addr %s1637, 8
        %s1639 = scalar_lea.vmem %s8, %s1638
        %s1640 = smul.u32 16, %s26
        %p1641 = scmp.lt.s32.totalorder %s1640, 31
        %s1642 = scalar_select %p1641, %s1640, 31
        %s1643 = smul.addr %s1642, 4
        %s1644 = scalar_lea.vmem %s9, %s1643
        %s1645 = smul.u32 16, %s26
        %p1646 = scmp.lt.s32.totalorder %s1645, 31
        %s1647 = scalar_select %p1646, %s1645, 31
        %s1648 = smul.addr %s1647, 4
        %s1649 = scalar_lea.vmem %s10, %s1648
        // Predicated region
        $region99: #{_lambda_.4} parent=85 // pred_check
          %p1650 = pneg %p242
        $region100: #{_lambda_.4} parent=85 // pred_check_branch
          %1652 = sbr.rel (%p1650) target = $region102
        $region101: #{_lambda_.4} parent=85 // pred_region
          %s1653 = smul.u32 16, %s26
        $region102: #{_lambda_.4} parent=85 // pred_fallthru
          _
        // Predicated region
        $region103: #{_lambda_.4} parent=85 // pred_check
          %p1654 = pneg %p268
        $region104: #{_lambda_.4} parent=85 // pred_check_branch
          %1656 = sbr.rel (%p1654) target = $region106
        $region105: #{_lambda_.4} parent=85 // pred_region
          %s1657 = smul.u32 16, %s26
        $region106: #{_lambda_.4} parent=85 // pred_fallthru
          _
        // Predicated region
        $region107: #{_lambda_.4} parent=85 // pred_check
          %p1658 = pneg %p294
        $region108: #{_lambda_.4} parent=85 // pred_check_branch
          %1660 = sbr.rel (%p1658) target = $region110
        $region109: #{_lambda_.4} parent=85 // pred_region
          %s1661 = smul.u32 16, %s26
        $region110: #{_lambda_.4} parent=85 // pred_fallthru
          _
      $region86: #{_lambda_.4} parent=5 // pred_fallthru
        _
      %p1662 = scmp.le.s32.totalorder 2, %s17
      // Predicated region
      $region111: #{_lambda_.4} parent=5 // pred_check
        %p1663 = pneg %p1662
      $region112: #{_lambda_.4} parent=5 // pred_check_branch
        %1665 = sbr.rel (%p1663) target = $region114
      $region113: #{_lambda_.4} parent=5 // pred_region
        %s1666 = ssub.s32 %s17, 2
        // Predicated region
        $region115: #{_lambda_.4} parent=113 // pred_check
          %p1667 = pneg %p248
        $region116: #{_lambda_.4} parent=113 // pred_check_branch
          %1669 = sbr.rel (%p1667) target = $region118
        $region117: #{_lambda_.4} parent=113 // pred_region
          %s1670 = smul.u32 16, %s28
          %p1671 = scmp.lt.s32.totalorder %s1670, 31
          %s1672 = scalar_select %p1671, %s1670, 31
          %s1673 = smul.addr %s1672, 8
          %s1674 = scalar_lea.vmem %s8, %s1673
        $region118: #{_lambda_.4} parent=113 // pred_fallthru
          _
        // Predicated region
        $region119: #{_lambda_.4} parent=113 // pred_check
          %p1675 = pneg %p274
        $region120: #{_lambda_.4} parent=113 // pred_check_branch
          %1677 = sbr.rel (%p1675) target = $region122
        $region121: #{_lambda_.4} parent=113 // pred_region
          %s1678 = smul.u32 16, %s28
          %p1679 = scmp.lt.s32.totalorder %s1678, 31
          %s1680 = scalar_select %p1679, %s1678, 31
          %s1681 = smul.addr %s1680, 4
          %s1682 = scalar_lea.vmem %s9, %s1681
        $region122: #{_lambda_.4} parent=113 // pred_fallthru
          _
        // Predicated region
        $region123: #{_lambda_.4} parent=113 // pred_check
          %p1683 = pneg %p300
        $region124: #{_lambda_.4} parent=113 // pred_check_branch
          %1685 = sbr.rel (%p1683) target = $region126
        $region125: #{_lambda_.4} parent=113 // pred_region
          %s1686 = smul.u32 16, %s28
          %p1687 = scmp.lt.s32.totalorder %s1686, 31
          %s1688 = scalar_select %p1687, %s1686, 31
          %s1689 = smul.addr %s1688, 4
          %s1690 = scalar_lea.vmem %s10, %s1689
        $region126: #{_lambda_.4} parent=113 // pred_fallthru
          _
      $region114: #{_lambda_.4} parent=5 // pred_fallthru
        _
    $region6: #{_lambda_.4} parent=1 // loop_footer
      %s21 = sadd.s32 1, %s17
    $region7: #{_lambda_.4} parent=1 // loop_footer_branch
      %16 = sbr.rel target = $region3
    $region8: #{_lambda_.4} parent=1 // loop_exit
      _

</llo_original>
